<compile_context>
chip_gen: v6e
topology: v6e:2x2x1
jax: 0.10.0
libtpu: 0.0.40
codegen_flags: <defaults>
</compile_context>

<pallas_src>
import functools

import jax
import jax.numpy as jnp
from jax.experimental import pallas as pl
from jax.experimental.pallas import tpu as pltpu

LANE = 128
SUBLANE = 8


def _round_up(v, m):
    return (v + m - 1) // m * m


def _resblock_kernel(H, W, Wp, x_ref, w1sc_ref, b1sc_ref, w2_ref, b2_ref, o_ref):
    # x_ref   : ((H+2)*Wp, C) f32   flattened, zero-padded NHWC input panel (C = 128-padded)
    # w1sc_ref: (9*C, 2*C)   bf16   conv1 taps stacked along K (BN1 scale folded) in cols [:C];
    #                               1x1 shortcut weights in the center-tap rows of cols [C:]
    # b1sc_ref: (1, 2*C)     f32    [BN1 shift | BN_sc shift]
    # w2_ref  : (9*C, C)     bf16   conv2 taps stacked along K (BN2 scale folded)
    # b2_ref  : (1, C)       f32    BN2 shift
    # o_ref   : (H*Wp, C)    f32    output panel (valid pixels at columns 1..W of each row)
    C = o_ref.shape[-1]
    Mo = H * Wp
    Mp = (H + 2) * Wp
    taps = [(dy, dx) for dy in range(3) for dx in range(3)]

    def conv_lhs(a):
        # a: (Mp, C) f32 panel with its spatial zero padding already in place.
        # dx = 0/2 taps via +/-1 sublane roll (XLU slot, wraps only zero halo rows);
        # dy taps via Wp-aligned (multiple-of-8) row slices; each (Mo, C) tap panel is
        # cast to bf16 once and lane-concatenated into the (Mo, 9*C) matmul LHS.
        sh = [pltpu.roll(a, 1, 0),        # sh[0][r] = a[r-1]  (dx = 0)
              a,                          # sh[1][r] = a[r]    (dx = 1)
              pltpu.roll(a, Mp - 1, 0)]   # sh[2][r] = a[r+1]  (dx = 2)
        return jnp.concatenate(
            [sh[dx][dy * Wp: dy * Wp + Mo, :].astype(jnp.bfloat16) for dy, dx in taps],
            axis=1)

    # ---- conv1 + fused 1x1 shortcut: one (Mo, 9C) x (9C, 2C) MXU matmul ----
    y1 = jnp.dot(conv_lhs(x_ref[...]), w1sc_ref[...],
                 preferred_element_type=jnp.float32) + b1sc_ref[...]
    h = jnp.maximum(y1[:, :C], 0.0)       # conv1 + BN1 shift + ReLU
    sc = y1[:, C:]                        # 1x1 shortcut + BN_sc shift

    # ---- re-pad the activation for conv2, entirely in the value domain ----
    # Zero the horizontal halo / alignment columns (bias + ReLU made them nonzero) ...
    col = jax.lax.broadcasted_iota(jnp.int32, (H, Wp, C), 1).reshape(Mo, C)
    h = jnp.where((col >= 1) & (col <= W), h, 0.0)
    # ... and add the top/bottom zero halo rows (sublane-aligned concat, no scratch ref).
    zrow = jnp.zeros((Wp, C), jnp.float32)
    z = jnp.concatenate([zrow, h, zrow], axis=0)          # (Mp, C)

    # ---- conv2: one (Mo, 9C) x (9C, C) matmul, residual add, final ReLU ----
    y2 = jnp.dot(conv_lhs(z), w2_ref[...],
                 preferred_element_type=jnp.float32) + b2_ref[...]
    o_ref[...] = jnp.maximum(y2 + sc, 0.0)                # lane-dense (C = 128) store


def residual_block_forward(x_nchw, params):
    """x_nchw: (N, Cin, H, W) float32.  Returns (N, Cout, H, W) float32."""
    (w1, s1, b1, w2, s2, b2, wsc, ssc, bsc) = params
    N, Cin, H, W = x_nchw.shape
    Cout = w1.shape[-1]
    Cp = max(_round_up(Cin, LANE), _round_up(Cout, LANE))   # common 128-padded channel width
    Wp = _round_up(W + 2, SUBLANE)                          # padded row length (halo + align)
    Mp = (H + 2) * Wp
    Mo = H * Wp

    # --- fold BN scales into the conv weights (one-time, amortized over the batch) ---
    w1f = w1 * s1.reshape(1, 1, 1, Cout)        # (3,3,Cin,Cout)
    w2f = w2 * s2.reshape(1, 1, 1, Cout)        # (3,3,Cout,Cout)
    wscf = wsc * ssc.reshape(1, Cout)           # (Cin,Cout)

    def pad_w3x3(w, cin):
        wp = jnp.zeros((3, 3, Cp, Cp), jnp.float32).at[:, :, :cin, :Cout].set(w)
        return wp.reshape(9 * Cp, Cp)           # taps flattened into K (dy-major, dx-minor)

    w1p = pad_w3x3(w1f, Cin)
    w2p = pad_w3x3(w2f, Cout).astype(jnp.bfloat16)
    wscp = jnp.zeros((Cp, Cp), jnp.float32).at[:Cin, :Cout].set(wscf)

    # fused conv1 + shortcut RHS: shortcut occupies the center-tap rows of the second block
    w1sc = jnp.zeros((9 * Cp, 2 * Cp), jnp.float32)
    w1sc = w1sc.at[:, :Cp].set(w1p).at[4 * Cp:5 * Cp, Cp:].set(wscp).astype(jnp.bfloat16)

    def pad_shift(b):
        return jnp.zeros((1, Cp), jnp.float32).at[:, :Cout].set(b.reshape(1, Cout))

    b1sc = jnp.concatenate([pad_shift(b1), pad_shift(bsc)], axis=1)   # (1, 2*Cp)
    b2p = pad_shift(b2)

    # --- NCHW -> flattened, zero-padded NHWC panel: (N, (H+2)*Wp, Cp), f32 ---
    x_nhwc = jnp.transpose(x_nchw, (0, 2, 3, 1))
    x_pad = jnp.pad(x_nhwc, ((0, 0), (1, 1), (1, Wp - W - 1), (0, Cp - Cin)))
    x_flat = x_pad.reshape(N, Mp, Cp)

    full = lambda shape: pl.BlockSpec(shape, lambda n: (0,) * len(shape))
    kernel = functools.partial(_resblock_kernel, H, W, Wp)

    flops = 2 * N * Mo * (9 * Cp) * (3 * Cp)        # conv1(+shortcut) N-dim 2Cp, conv2 N-dim Cp
    bytes_accessed = (N * Mp * Cp * 4 + N * Mo * Cp * 4
                      + (9 * Cp * 2 * Cp + 9 * Cp * Cp) * 2 + 3 * Cp * 4)

    out_flat = pl.pallas_call(
        kernel,
        out_shape=jax.ShapeDtypeStruct((N, Mo, Cp), jnp.float32),
        grid_spec=pltpu.PrefetchScalarGridSpec(
            num_scalar_prefetch=0,
            grid=(N,),
            in_specs=[
                pl.BlockSpec((None, Mp, Cp), lambda n: (n, 0, 0)),
                full((9 * Cp, 2 * Cp)),   # conv1 + shortcut weights (scales folded)
                full((1, 2 * Cp)),        # [b1 | bsc]
                full((9 * Cp, Cp)),       # conv2 weights (scale folded)
                full((1, Cp)),            # b2
            ],
            out_specs=pl.BlockSpec((None, Mo, Cp), lambda n: (n, 0, 0)),
        ),
        compiler_params=pltpu.CompilerParams(
            dimension_semantics=("parallel",)),
        cost_estimate=pl.CostEstimate(
            flops=flops, transcendentals=0, bytes_accessed=bytes_accessed),
    )(x_flat, w1sc, b1sc, w2p, b2p)

    # drop halo/alignment columns and channel padding, back to NCHW
    out = out_flat.reshape(N, H, Wp, Cp)[:, :, 1:W + 1, :Cout]
    return jnp.transpose(out, (0, 3, 1, 2))


def reference_forward(x, params):
    """Pure-JAX f32 reference of the ResidualBlock forward (eval-mode BN)."""
    (w1, s1, b1, w2, s2, b2, wsc, ssc, bsc) = params

    def conv3x3(a, w):
        return jax.lax.conv_general_dilated(
            a, w, window_strides=(1, 1), padding=((1, 1), (1, 1)),
            dimension_numbers=("NCHW", "HWIO", "NCHW"))

    bc = lambda v: v.reshape(1, -1, 1, 1)
    h = jnp.maximum(conv3x3(x, w1) * bc(s1) + bc(b1), 0.0)
    left = conv3x3(h, w2) * bc(s2) + bc(b2)
    scut = jnp.einsum("nchw,cd->ndhw", x, wsc) * bc(ssc) + bc(bsc)
    return jnp.maximum(left + scut, 0.0)


def make_params(key, cin, cout, eps=1e-5):
    """Deterministic synthetic parameters (conv weights + eval-mode BN scale/shift)."""
    ks = jax.random.split(key, 12)

    def fold_bn(kg, kb, km, kv):
        gamma = 1.0 + 0.1 * jax.random.normal(kg, (cout,), jnp.float32)
        beta = 0.1 * jax.random.normal(kb, (cout,), jnp.float32)
        mean = 0.1 * jax.random.normal(km, (cout,), jnp.float32)
        var = jnp.abs(1.0 + 0.1 * jax.random.normal(kv, (cout,), jnp.float32))
        scale = gamma / jnp.sqrt(var + eps)
        shift = beta - mean * scale
        return scale, shift   # (cout,), (cout,)

    # conv weights stored HWIO (torch is OIHW; values are synthetic so layout is free)
    w1 = 0.1 * jax.random.normal(ks[0], (3, 3, cin, cout), jnp.float32)
    w2 = 0.1 * jax.random.normal(ks[1], (3, 3, cout, cout), jnp.float32)
    wsc = 0.1 * jax.random.normal(ks[2], (cin, cout), jnp.float32)
    s1, b1 = fold_bn(ks[3], ks[4], ks[5], ks[6])
    s2, b2 = fold_bn(ks[7], ks[8], ks[9], ks[10])
    ssc, bsc = fold_bn(*jax.random.split(ks[11], 4))
    return (w1, s1, b1, w2, s2, b2, wsc, ssc, bsc)


if __name__ == "__main__":
    # Small shapes: batch=2, inchannel=4, outchannel=8, spatial=16, stride=1
    # (inchannel != outchannel so the conv1x1+BN shortcut branch is exercised).
    N, Cin, Cout, H, W = 2, 4, 8, 16, 16

    key = jax.random.PRNGKey(0)
    kx, kp = jax.random.split(key)
    x = jax.random.normal(kx, (N, Cin, H, W), jnp.float32)
    params = make_params(kp, Cin, Cout)

    out = residual_block_forward(x, params)
    out = jax.block_until_ready(out)

    assert out.shape == (N, Cout, H, W)
    assert bool(jnp.all(jnp.isfinite(out)))
    assert bool(jnp.all(out >= 0.0))  # final ReLU

    # numerical check against an f32 JAX reference (bf16 MXU path -> loose tolerance)
    ref = reference_forward(x, params)
    max_err = float(jnp.max(jnp.abs(out - ref)))
    assert max_err < 5e-2, f"kernel deviates from f32 reference: max_err={max_err}"
    print("KERNEL_OK")
</pallas_src>

<mosaic_0001>
module attributes {stable_mosaic.version = 11 : i64} {
  func.func @_resblock_kernel(%arg0: i32, %arg1: memref<1x432x128xf32, #tpu.memory_space<vmem>>, %arg2: memref<1152x256xbf16, #tpu.memory_space<vmem>>, %arg3: memref<1x256xf32, #tpu.memory_space<vmem>>, %arg4: memref<1152x128xbf16, #tpu.memory_space<vmem>>, %arg5: memref<1x128xf32, #tpu.memory_space<vmem>>, %arg6: memref<1x384x128xf32, #tpu.memory_space<vmem>>) attributes {dimension_semantics = [#tpu.dimension_semantics<parallel>], iteration_bounds = array<i64: 2>, scalar_prefetch = 0 : i64, scratch_operands = 0 : i64, tpu.core_type = #tpu.core_type<tc>, window_params = [{transform_indices = @transform_0, window_bounds = array<i64: 1, 432, 128>}, {pipeline_mode = #tpu.pipeline_mode<synchronous>, transform_indices = @transform_1, window_bounds = array<i64: 1152, 256>}, {pipeline_mode = #tpu.pipeline_mode<synchronous>, transform_indices = @transform_2, window_bounds = array<i64: 1, 256>}, {pipeline_mode = #tpu.pipeline_mode<synchronous>, transform_indices = @transform_3, window_bounds = array<i64: 1152, 128>}, {pipeline_mode = #tpu.pipeline_mode<synchronous>, transform_indices = @transform_4, window_bounds = array<i64: 1, 128>}, {transform_indices = @transform_5, window_bounds = array<i64: 1, 384, 128>}]} {
    %c0 = arith.constant 0 : index
    %c0_0 = arith.constant 0 : index
    %c0_1 = arith.constant 0 : index
    %0 = vector.load %arg1[%c0, %c0_0, %c0_1] : memref<1x432x128xf32, #tpu.memory_space<vmem>>, vector<1x432x128xf32>
    %1 = vector.shape_cast %0 : vector<1x432x128xf32> to vector<432x128xf32>
    %c1_i32 = arith.constant 1 : i32
    %2 = tpu.dynamic_rotate %1 by %c1_i32 dim 0 : vector<432x128xf32>, i32 -> vector<432x128xf32>
    %c431_i32 = arith.constant 431 : i32
    %3 = tpu.dynamic_rotate %1 by %c431_i32 dim 0 : vector<432x128xf32>, i32 -> vector<432x128xf32>
    %4 = vector.extract_strided_slice %2 {offsets = [0, 0], sizes = [384, 128], strides = [1, 1]} : vector<432x128xf32> to vector<384x128xf32>
    %5 = arith.truncf %4 : vector<384x128xf32> to vector<384x128xbf16>
    %6 = vector.extract_strided_slice %1 {offsets = [0, 0], sizes = [384, 128], strides = [1, 1]} : vector<432x128xf32> to vector<384x128xf32>
    %7 = arith.truncf %6 : vector<384x128xf32> to vector<384x128xbf16>
    %8 = vector.extract_strided_slice %3 {offsets = [0, 0], sizes = [384, 128], strides = [1, 1]} : vector<432x128xf32> to vector<384x128xf32>
    %9 = arith.truncf %8 : vector<384x128xf32> to vector<384x128xbf16>
    %10 = vector.extract_strided_slice %2 {offsets = [24, 0], sizes = [384, 128], strides = [1, 1]} : vector<432x128xf32> to vector<384x128xf32>
    %11 = arith.truncf %10 : vector<384x128xf32> to vector<384x128xbf16>
    %12 = vector.extract_strided_slice %1 {offsets = [24, 0], sizes = [384, 128], strides = [1, 1]} : vector<432x128xf32> to vector<384x128xf32>
    %13 = arith.truncf %12 : vector<384x128xf32> to vector<384x128xbf16>
    %14 = vector.extract_strided_slice %3 {offsets = [24, 0], sizes = [384, 128], strides = [1, 1]} : vector<432x128xf32> to vector<384x128xf32>
    %15 = arith.truncf %14 : vector<384x128xf32> to vector<384x128xbf16>
    %16 = vector.extract_strided_slice %2 {offsets = [48, 0], sizes = [384, 128], strides = [1, 1]} : vector<432x128xf32> to vector<384x128xf32>
    %17 = arith.truncf %16 : vector<384x128xf32> to vector<384x128xbf16>
    %18 = vector.extract_strided_slice %1 {offsets = [48, 0], sizes = [384, 128], strides = [1, 1]} : vector<432x128xf32> to vector<384x128xf32>
    %19 = arith.truncf %18 : vector<384x128xf32> to vector<384x128xbf16>
    %20 = vector.extract_strided_slice %3 {offsets = [48, 0], sizes = [384, 128], strides = [1, 1]} : vector<432x128xf32> to vector<384x128xf32>
    %21 = arith.truncf %20 : vector<384x128xf32> to vector<384x128xbf16>
    %22 = tpu.concatenate %5, %7, %9, %11, %13, %15, %17, %19, %21 in 1 : vector<384x128xbf16>, vector<384x128xbf16>, vector<384x128xbf16>, vector<384x128xbf16>, vector<384x128xbf16>, vector<384x128xbf16>, vector<384x128xbf16>, vector<384x128xbf16>, vector<384x128xbf16> -> vector<384x1152xbf16>
    %c0_2 = arith.constant 0 : index
    %c0_3 = arith.constant 0 : index
    %23 = vector.load %arg2[%c0_2, %c0_3] : memref<1152x256xbf16, #tpu.memory_space<vmem>>, vector<1152x256xbf16>
    %cst = arith.constant dense<0.000000e+00> : vector<384x256xf32>
    %24 = tpu.matmul %22, %23, %cst {dimension_numbers = #tpu.dot_dimension_numbers<[1], [0], [0], [1], [0, 0, 1, 1], [], []>} : vector<384x1152xbf16>, vector<1152x256xbf16>, vector<384x256xf32> -> vector<384x256xf32>
    %c0_4 = arith.constant 0 : index
    %c0_5 = arith.constant 0 : index
    %25 = vector.load %arg3[%c0_4, %c0_5] : memref<1x256xf32, #tpu.memory_space<vmem>>, vector<1x256xf32>
    %26 = vector.broadcast %25 : vector<1x256xf32> to vector<384x256xf32>
    %27 = arith.addf %24, %26 : vector<384x256xf32>
    %28 = vector.extract_strided_slice %27 {offsets = [0, 0], sizes = [384, 128], strides = [1, 1]} : vector<384x256xf32> to vector<384x128xf32>
    %cst_6 = arith.constant 0.000000e+00 : f32
    %29 = vector.broadcast %cst_6 : f32 to vector<384x128xf32>
    %30 = arith.maximumf %28, %29 : vector<384x128xf32>
    %31 = vector.extract_strided_slice %27 {offsets = [0, 128], sizes = [384, 128], strides = [1, 1]} : vector<384x256xf32> to vector<384x128xf32>
    %32 = tpu.iota {dimensions = array<i32: 1>} : vector<16x24x128xi32>
    %33 = vector.shape_cast %32 : vector<16x24x128xi32> to vector<384x128xi32>
    %c1_i32_7 = arith.constant 1 : i32
    %34 = vector.broadcast %c1_i32_7 : i32 to vector<384x128xi32>
    %35 = arith.cmpi sge, %33, %34 : vector<384x128xi32>
    %c16_i32 = arith.constant 16 : i32
    %36 = vector.broadcast %c16_i32 : i32 to vector<384x128xi32>
    %37 = arith.cmpi sle, %33, %36 : vector<384x128xi32>
    %38 = arith.andi %35, %37 : vector<384x128xi1>
    %cst_8 = arith.constant 0.000000e+00 : f32
    %39 = vector.broadcast %cst_8 : f32 to vector<384x128xf32>
    %40 = arith.select %38, %30, %39 : vector<384x128xi1>, vector<384x128xf32>
    %cst_9 = arith.constant 0.000000e+00 : f32
    %41 = vector.broadcast %cst_9 : f32 to vector<24x128xf32>
    %42 = tpu.concatenate %41, %40, %41 in 0 : vector<24x128xf32>, vector<384x128xf32>, vector<24x128xf32> -> vector<432x128xf32>
    %c1_i32_10 = arith.constant 1 : i32
    %43 = tpu.dynamic_rotate %42 by %c1_i32_10 dim 0 : vector<432x128xf32>, i32 -> vector<432x128xf32>
    %c431_i32_11 = arith.constant 431 : i32
    %44 = tpu.dynamic_rotate %42 by %c431_i32_11 dim 0 : vector<432x128xf32>, i32 -> vector<432x128xf32>
    %45 = vector.extract_strided_slice %43 {offsets = [0, 0], sizes = [384, 128], strides = [1, 1]} : vector<432x128xf32> to vector<384x128xf32>
    %46 = arith.truncf %45 : vector<384x128xf32> to vector<384x128xbf16>
    %47 = vector.extract_strided_slice %42 {offsets = [0, 0], sizes = [384, 128], strides = [1, 1]} : vector<432x128xf32> to vector<384x128xf32>
    %48 = arith.truncf %47 : vector<384x128xf32> to vector<384x128xbf16>
    %49 = vector.extract_strided_slice %44 {offsets = [0, 0], sizes = [384, 128], strides = [1, 1]} : vector<432x128xf32> to vector<384x128xf32>
    %50 = arith.truncf %49 : vector<384x128xf32> to vector<384x128xbf16>
    %51 = vector.extract_strided_slice %43 {offsets = [24, 0], sizes = [384, 128], strides = [1, 1]} : vector<432x128xf32> to vector<384x128xf32>
    %52 = arith.truncf %51 : vector<384x128xf32> to vector<384x128xbf16>
    %53 = vector.extract_strided_slice %42 {offsets = [24, 0], sizes = [384, 128], strides = [1, 1]} : vector<432x128xf32> to vector<384x128xf32>
    %54 = arith.truncf %53 : vector<384x128xf32> to vector<384x128xbf16>
    %55 = vector.extract_strided_slice %44 {offsets = [24, 0], sizes = [384, 128], strides = [1, 1]} : vector<432x128xf32> to vector<384x128xf32>
    %56 = arith.truncf %55 : vector<384x128xf32> to vector<384x128xbf16>
    %57 = vector.extract_strided_slice %43 {offsets = [48, 0], sizes = [384, 128], strides = [1, 1]} : vector<432x128xf32> to vector<384x128xf32>
    %58 = arith.truncf %57 : vector<384x128xf32> to vector<384x128xbf16>
    %59 = vector.extract_strided_slice %42 {offsets = [48, 0], sizes = [384, 128], strides = [1, 1]} : vector<432x128xf32> to vector<384x128xf32>
    %60 = arith.truncf %59 : vector<384x128xf32> to vector<384x128xbf16>
    %61 = vector.extract_strided_slice %44 {offsets = [48, 0], sizes = [384, 128], strides = [1, 1]} : vector<432x128xf32> to vector<384x128xf32>
    %62 = arith.truncf %61 : vector<384x128xf32> to vector<384x128xbf16>
    %63 = tpu.concatenate %46, %48, %50, %52, %54, %56, %58, %60, %62 in 1 : vector<384x128xbf16>, vector<384x128xbf16>, vector<384x128xbf16>, vector<384x128xbf16>, vector<384x128xbf16>, vector<384x128xbf16>, vector<384x128xbf16>, vector<384x128xbf16>, vector<384x128xbf16> -> vector<384x1152xbf16>
    %c0_12 = arith.constant 0 : index
    %c0_13 = arith.constant 0 : index
    %64 = vector.load %arg4[%c0_12, %c0_13] : memref<1152x128xbf16, #tpu.memory_space<vmem>>, vector<1152x128xbf16>
    %cst_14 = arith.constant dense<0.000000e+00> : vector<384x128xf32>
    %65 = tpu.matmul %63, %64, %cst_14 {dimension_numbers = #tpu.dot_dimension_numbers<[1], [0], [0], [1], [0, 0, 1, 1], [], []>} : vector<384x1152xbf16>, vector<1152x128xbf16>, vector<384x128xf32> -> vector<384x128xf32>
    %c0_15 = arith.constant 0 : index
    %c0_16 = arith.constant 0 : index
    %66 = vector.load %arg5[%c0_15, %c0_16] : memref<1x128xf32, #tpu.memory_space<vmem>>, vector<1x128xf32>
    %67 = vector.broadcast %66 : vector<1x128xf32> to vector<384x128xf32>
    %68 = arith.addf %65, %67 : vector<384x128xf32>
    %69 = arith.addf %68, %31 : vector<384x128xf32>
    %cst_17 = arith.constant 0.000000e+00 : f32
    %70 = vector.broadcast %cst_17 : f32 to vector<384x128xf32>
    %71 = arith.maximumf %69, %70 : vector<384x128xf32>
    %c0_18 = arith.constant 0 : index
    %c0_19 = arith.constant 0 : index
    %c0_20 = arith.constant 0 : index
    %72 = vector.load %arg6[%c0_18, %c0_19, %c0_20] : memref<1x384x128xf32, #tpu.memory_space<vmem>>, vector<1x384x128xf32>
    %73 = vector.shape_cast %72 : vector<1x384x128xf32> to vector<384x128xf32>
    %74 = vector.shape_cast %71 : vector<384x128xf32> to vector<1x384x128xf32>
    tpu.vector_store %arg6[%c0_18, %c0_19, %c0_20], %74 {strides = array<i32>} : memref<1x384x128xf32, #tpu.memory_space<vmem>>, vector<1x384x128xf32>,
    return
  }
  func.func @transform_0(%arg0: i32) -> (i32, i32, i32) {
    %c0_i32 = arith.constant 0 : i32
    %c0_i32_0 = arith.constant 0 : i32
    %c0_i32_1 = arith.constant 0 : i32
    return %arg0, %c0_i32, %c0_i32_0 : i32, i32, i32
  }
  func.func @transform_1(%arg0: i32) -> (i32, i32) {
    %c0_i32 = arith.constant 0 : i32
    %c0_i32_0 = arith.constant 0 : i32
    %c0_i32_1 = arith.constant 0 : i32
    return %c0_i32, %c0_i32_0 : i32, i32
  }
  func.func @transform_2(%arg0: i32) -> (i32, i32) {
    %c0_i32 = arith.constant 0 : i32
    %c0_i32_0 = arith.constant 0 : i32
    %c0_i32_1 = arith.constant 0 : i32
    return %c0_i32, %c0_i32_0 : i32, i32
  }
  func.func @transform_3(%arg0: i32) -> (i32, i32) {
    %c0_i32 = arith.constant 0 : i32
    %c0_i32_0 = arith.constant 0 : i32
    %c0_i32_1 = arith.constant 0 : i32
    return %c0_i32, %c0_i32_0 : i32, i32
  }
  func.func @transform_4(%arg0: i32) -> (i32, i32) {
    %c0_i32 = arith.constant 0 : i32
    %c0_i32_0 = arith.constant 0 : i32
    %c0_i32_1 = arith.constant 0 : i32
    return %c0_i32, %c0_i32_0 : i32, i32
  }
  func.func @transform_5(%arg0: i32) -> (i32, i32, i32) {
    %c0_i32 = arith.constant 0 : i32
    %c0_i32_0 = arith.constant 0 : i32
    %c0_i32_1 = arith.constant 0 : i32
    return %arg0, %c0_i32, %c0_i32_0 : i32, i32, i32
  }
}

</mosaic_0001>

<llo_original>
// kernel: tpu_custom_call.1
$region0: #{tpu_custom_call.1}
  #allocation0 [shape = 'u32[]', space=smem, size = 0x4, offset = 0x4, fixed_abs, tag = 'smem constant byte address 0x4 - core index']
  #allocation1 [shape = 'u32[144,128]{1,0:T(1,128)}', space=vmem, size = 0x12000, scoped, tag = 'internal scratch']
  %s0 = inlined_call_operand.hbm [shape: f32[2,432,128], index: 0, kind: input, shape index: {}]
  %s1 = inlined_call_operand.hbm [shape: bf16[1152,256], index: 1, kind: input, shape index: {}]
  %s2 = inlined_call_operand.vmem [shape: f32[1,256], index: 2, kind: input, shape index: {}]
  %s3 = inlined_call_operand.hbm [shape: bf16[1152,128], index: 3, kind: input, shape index: {}]
  %s4 = inlined_call_operand.vmem [shape: f32[1,128], index: 4, kind: input, shape index: {}]
  %s5 = inlined_call_operand.hbm [shape: f32[2,384,128], index: 5, kind: output, shape index: {}]
  %s6 = sld [smem:[#allocation0]]
  $region65: #{tpu_custom_call.1} parent=0
    _
  %s8 = ssub.s32 1, %s6
  %s9 = scalar_select 0, %s8, %s6
  $region1: #{tpu_custom_call.1} parent=0
    #allocation2 [shape = 'u8[442368]{0}', space=vmem, size = 0x6c000, scoped, tag = 'input window, operand 0']
    #allocation3 [shape = 's32[2]{0}', space=sflag, size = 0x8, scoped, tag = 'scoped memory for tpu_custom_call.1']
    #allocation4 [shape = 's32[2]{0}', space=sflag, size = 0x8, scoped, tag = 'scoped memory for tpu_custom_call.1']
    #allocation5 [shape = 'u8[589824]{0}', space=vmem, size = 0x90000, scoped, tag = 'input window, operand 1, single buffered']
    #allocation6 [shape = 's32[1]{0}', space=sflag, size = 0x4, scoped, tag = 'scoped memory for tpu_custom_call.1']
    #allocation7 [shape = 'u8[294912]{0}', space=vmem, size = 0x48000, scoped, tag = 'input window, operand 3, single buffered']
    #allocation8 [shape = 'u8[393216]{0}', space=vmem, size = 0x60000, scoped, tag = 'output window, operand 0']
    %10 = vsyncpa [#allocation3], 0
    %s11 = scalar_lea.sflag [#allocation3], 1
    %12 = vsyncpa %s11, 0
    %13 = vsyncpa [#allocation6], 0
    %14 = vsyncpa [#allocation4], 0
    %s15 = scalar_lea.sflag [#allocation4], 1
    %16 = vsyncpa %s15, 0
    loop: start=0, step=1, limit=4
    $region2: #{tpu_custom_call.1} parent=1 // loop_pre_header
      _
    $region3: #{tpu_custom_call.1} parent=1 // loop_header
      %s18 = sphi 0, %s22
      %p19 = scmp.ge.s32.totalorder %s18, 4
      %s28 = sphi 0, %s30
      %s31 = sphi 0, %s28
      %s32 = sphi 0, %s31
      %s48 = sphi 0, %s32
      %s52 = sphi 0, %s52
      %s54 = sphi 0, %s52
      %s55 = sphi 0, %s54
      %s69 = sphi 0, %s55
      %s73 = sphi 0, %s73
      %s75 = sphi 0, %s73
      %s76 = sphi 0, %s75
      %s90 = sphi 0, %s76
      %s94 = sphi 0, %s94
      %s96 = sphi 0, %s94
      %s97 = sphi 0, %s96
      %s111 = sphi 0, %s97
      %s115 = sphi 0, %s115
      %s117 = sphi 0, %s115
      %s118 = sphi 0, %s117
      %s132 = sphi 0, %s118
      %s138 = sphi 0, %s140
      %s141 = sphi 0, %s138
      %s142 = sphi 0, %s141
      %s158 = sphi 0, %s142
    $region4: #{tpu_custom_call.1} parent=1 // loop_header_branch
      %21 = sbr.rel (%p19) target = $region8
    $region5: #{tpu_custom_call.1} parent=1 // loop_body
      %s23 = ssub.s32 %s18, 1
      %s24 = ssub.s32 %s18, 2
      %s25 = sadd.s32 %s18, 1
      %s26 = ssub.s32 %s18, %s25
      %p27 = scmp.eq.s32.totalorder %s26, 0
      %s29 = sadd.s32 %s28, 1
      %s30 = scalar_select %p27, %s28, %s29
      %p33 = pneg %p27
      %p34 = scmp.eq.s32.totalorder %s18, 1
      %p35 = por %p33, %p34
      %p36 = scmp.ne.s32.totalorder %s28, %s31
      %p37 = scmp.eq.s32.totalorder %s18, 0
      %p38 = por %p36, %p37
      %p39 = scmp.ne.s32.totalorder %s28, %s31
      %p40 = scmp.eq.s32.totalorder %s23, 1
      %p41 = por %p39, %p40
      %p42 = scmp.ne.s32.totalorder %s31, %s32
      %p43 = scmp.eq.s32.totalorder %s23, 0
      %p44 = por %p42, %p43
      %p45 = scmp.ne.s32.totalorder %s31, %s32
      %p46 = scmp.eq.s32.totalorder %s24, 1
      %p47 = por %p45, %p46
      %p49 = scmp.ne.s32.totalorder %s32, %s48
      %p50 = scmp.eq.s32.totalorder %s24, 0
      %p51 = por %p49, %p50
      %s53 = sadd.s32 %s52, 1
      %p56 = scmp.eq.s32.totalorder %s18, 1
      %p57 = scmp.ne.s32.totalorder %s52, %s54
      %p58 = scmp.eq.s32.totalorder %s18, 0
      %p59 = por %p57, %p58
      %p60 = scmp.ne.s32.totalorder %s52, %s54
      %p61 = scmp.eq.s32.totalorder %s23, 1
      %p62 = por %p60, %p61
      %p63 = scmp.ne.s32.totalorder %s54, %s55
      %p64 = scmp.eq.s32.totalorder %s23, 0
      %p65 = por %p63, %p64
      %p66 = scmp.ne.s32.totalorder %s54, %s55
      %p67 = scmp.eq.s32.totalorder %s24, 1
      %p68 = por %p66, %p67
      %p70 = scmp.ne.s32.totalorder %s55, %s69
      %p71 = scmp.eq.s32.totalorder %s24, 0
      %p72 = por %p70, %p71
      %s74 = sadd.s32 %s73, 1
      %p77 = scmp.eq.s32.totalorder %s18, 1
      %p78 = scmp.ne.s32.totalorder %s73, %s75
      %p79 = scmp.eq.s32.totalorder %s18, 0
      %p80 = por %p78, %p79
      %p81 = scmp.ne.s32.totalorder %s73, %s75
      %p82 = scmp.eq.s32.totalorder %s23, 1
      %p83 = por %p81, %p82
      %p84 = scmp.ne.s32.totalorder %s75, %s76
      %p85 = scmp.eq.s32.totalorder %s23, 0
      %p86 = por %p84, %p85
      %p87 = scmp.ne.s32.totalorder %s75, %s76
      %p88 = scmp.eq.s32.totalorder %s24, 1
      %p89 = por %p87, %p88
      %p91 = scmp.ne.s32.totalorder %s76, %s90
      %p92 = scmp.eq.s32.totalorder %s24, 0
      %p93 = por %p91, %p92
      %s95 = sadd.s32 %s94, 1
      %p98 = scmp.eq.s32.totalorder %s18, 1
      %p99 = scmp.ne.s32.totalorder %s94, %s96
      %p100 = scmp.eq.s32.totalorder %s18, 0
      %p101 = por %p99, %p100
      %p102 = scmp.ne.s32.totalorder %s94, %s96
      %p103 = scmp.eq.s32.totalorder %s23, 1
      %p104 = por %p102, %p103
      %p105 = scmp.ne.s32.totalorder %s96, %s97
      %p106 = scmp.eq.s32.totalorder %s23, 0
      %p107 = por %p105, %p106
      %p108 = scmp.ne.s32.totalorder %s96, %s97
      %p109 = scmp.eq.s32.totalorder %s24, 1
      %p110 = por %p108, %p109
      %p112 = scmp.ne.s32.totalorder %s97, %s111
      %p113 = scmp.eq.s32.totalorder %s24, 0
      %p114 = por %p112, %p113
      %s116 = sadd.s32 %s115, 1
      %p119 = scmp.eq.s32.totalorder %s18, 1
      %p120 = scmp.ne.s32.totalorder %s115, %s117
      %p121 = scmp.eq.s32.totalorder %s18, 0
      %p122 = por %p120, %p121
      %p123 = scmp.ne.s32.totalorder %s115, %s117
      %p124 = scmp.eq.s32.totalorder %s23, 1
      %p125 = por %p123, %p124
      %p126 = scmp.ne.s32.totalorder %s117, %s118
      %p127 = scmp.eq.s32.totalorder %s23, 0
      %p128 = por %p126, %p127
      %p129 = scmp.ne.s32.totalorder %s117, %s118
      %p130 = scmp.eq.s32.totalorder %s24, 1
      %p131 = por %p129, %p130
      %p133 = scmp.ne.s32.totalorder %s118, %s132
      %p134 = scmp.eq.s32.totalorder %s24, 0
      %p135 = por %p133, %p134
      %s136 = ssub.s32 %s18, %s25
      %p137 = scmp.eq.s32.totalorder %s136, 0
      %s139 = sadd.s32 %s138, 1
      %s140 = scalar_select %p137, %s138, %s139
      %p143 = pneg %p137
      %p144 = scmp.eq.s32.totalorder %s18, 1
      %p145 = por %p143, %p144
      %p146 = scmp.ne.s32.totalorder %s138, %s141
      %p147 = scmp.eq.s32.totalorder %s18, 0
      %p148 = por %p146, %p147
      %p149 = scmp.ne.s32.totalorder %s138, %s141
      %p150 = scmp.eq.s32.totalorder %s23, 1
      %p151 = por %p149, %p150
      %p152 = scmp.ne.s32.totalorder %s141, %s142
      %p153 = scmp.eq.s32.totalorder %s23, 0
      %p154 = por %p152, %p153
      %p155 = scmp.ne.s32.totalorder %s141, %s142
      %p156 = scmp.eq.s32.totalorder %s24, 1
      %p157 = por %p155, %p156
      %p159 = scmp.ne.s32.totalorder %s142, %s158
      %p160 = scmp.eq.s32.totalorder %s24, 0
      %p161 = por %p159, %p160
      %p162 = scmp.le.s32.totalorder 1, %s18
      %p163 = scmp.lt.s32.totalorder %s18, 3
      %p164 = pnand %p162, %p163
      %p165 = pneg %p164
      // Predicated region
      $region9: #{tpu_custom_call.1} parent=5 // pred_check
        _
      $region10: #{tpu_custom_call.1} parent=5 // pred_check_branch
        %167 = sbr.rel (%p164) target = $region12
      $region11: #{tpu_custom_call.1} parent=5 // pred_region
        %s168 = ssub.s32 %s18, 1
        // Predicated region
        $region13: #{tpu_custom_call.1} parent=11 // pred_check
          %p169 = pneg %p65
        $region14: #{tpu_custom_call.1} parent=11 // pred_check_branch
          %171 = sbr.rel (%p169) target = $region16
        $region15: #{tpu_custom_call.1} parent=11 // pred_region
          %s173 = ssub.s32 18432, 18432
          %174 = vsyncadd [#allocation6], %s173
          %s175 = sshll.u32 [#allocation5], 4
          %s176 = int_to_ptr.vmem [resolvable:$true] %s175
          %181 = dma.hbm_to_vmem [thread:$0]  %s1, 18432, %s176, [#allocation6], 128, 128, 8
        $region16: #{tpu_custom_call.1} parent=11 // pred_fallthru
          _
        // Predicated region
        $region17: #{tpu_custom_call.1} parent=11 // pred_check
          %p182 = pneg %p86
        $region18: #{tpu_custom_call.1} parent=11 // pred_check_branch
          %184 = sbr.rel (%p182) target = $region20
        $region19: #{tpu_custom_call.1} parent=11 // pred_region
          _
        $region20: #{tpu_custom_call.1} parent=11 // pred_fallthru
          _
        // Predicated region
        $region21: #{tpu_custom_call.1} parent=11 // pred_check
          %p185 = pneg %p107
        $region22: #{tpu_custom_call.1} parent=11 // pred_check_branch
          %187 = sbr.rel (%p185) target = $region24
        $region23: #{tpu_custom_call.1} parent=11 // pred_region
          %s189 = ssub.s32 9216, 9216
          %190 = vsyncadd [#allocation6], %s189
          %s191 = sshll.u32 [#allocation7], 4
          %s192 = int_to_ptr.vmem [resolvable:$true] %s191
          %197 = dma.hbm_to_vmem [thread:$0]  %s3, 9216, %s192, [#allocation6], 64, 64, 4
        $region24: #{tpu_custom_call.1} parent=11 // pred_fallthru
          _
        // Predicated region
        $region25: #{tpu_custom_call.1} parent=11 // pred_check
          %p198 = pneg %p128
        $region26: #{tpu_custom_call.1} parent=11 // pred_check_branch
          %200 = sbr.rel (%p198) target = $region28
        $region27: #{tpu_custom_call.1} parent=11 // pred_region
          _
        $region28: #{tpu_custom_call.1} parent=11 // pred_fallthru
          _
      $region12: #{tpu_custom_call.1} parent=5 // pred_fallthru
        _
      %p201 = scmp.lt.s32.totalorder %s18, 2
      // Predicated region
      $region29: #{tpu_custom_call.1} parent=5 // pred_check
        %p202 = pneg %p201
      $region30: #{tpu_custom_call.1} parent=5 // pred_check_branch
        %204 = sbr.rel (%p202) target = $region32
      $region31: #{tpu_custom_call.1} parent=5 // pred_region
        // Predicated region
        $region33: #{tpu_custom_call.1} parent=31 // pred_check
          %p205 = pneg %p38
        $region34: #{tpu_custom_call.1} parent=31 // pred_check_branch
          %207 = sbr.rel (%p205) target = $region36
        $region35: #{tpu_custom_call.1} parent=31 // pred_region
          %s208 = sand.u32 %s28, 1
          %s209 = scalar_lea.sflag [#allocation3], %s208
          %s210 = sand.u32 %s28, 1
          %s211 = smul.addr %s210, 432
          %s212 = scalar_lea.vmem [#allocation2], %s211
          %s214 = ssub.s32 6912, 6912
          %215 = vsyncadd %s209, %s214
          %s216 = smul.addr %s18, 54
          %s217 = smul.addr %s216, 128
          %s218 = scalar_lea.hbm %s0, %s217
          %s219 = sshll.u32 %s212, 4
          %s220 = int_to_ptr.vmem [resolvable:$true] %s219
          %225 = dma.hbm_to_vmem [thread:$0]  %s218, 6912, %s220, %s209, 128, 128, 8
        $region36: #{tpu_custom_call.1} parent=31 // pred_fallthru
          _
      $region32: #{tpu_custom_call.1} parent=5 // pred_fallthru
        _
      %p226 = scmp.le.s32.totalorder 1, %s18
      %p227 = scmp.lt.s32.totalorder %s18, 3
      %p228 = pnand %p226, %p227
      %p229 = pneg %p228
      // Predicated region
      $region37: #{tpu_custom_call.1} parent=5 // pred_check
        _
      $region38: #{tpu_custom_call.1} parent=5 // pred_check_branch
        %231 = sbr.rel (%p228) target = $region40
      $region39: #{tpu_custom_call.1} parent=5 // pred_region
        %s232 = ssub.s32 %s18, 1
        %s233 = sand.u32 %s31, 1
        %s234 = scalar_lea.sflag [#allocation3], %s233
        %s235 = sand.u32 %s31, 1
        %s236 = smul.addr %s235, 432
        %s237 = scalar_lea.vmem [#allocation2], %s236
        // Predicated region
        $region41: #{tpu_custom_call.1} parent=39 // pred_check
          %p238 = pneg %p44
        $region42: #{tpu_custom_call.1} parent=39 // pred_check_branch
          %240 = sbr.rel (%p238) target = $region44
        $region43: #{tpu_custom_call.1} parent=39 // pred_region
          %241 = dma.done %s234, 6912
        $region44: #{tpu_custom_call.1} parent=39 // pred_fallthru
          _
        // Predicated region
        $region45: #{tpu_custom_call.1} parent=39 // pred_check
          %p242 = pneg %p65
        $region46: #{tpu_custom_call.1} parent=39 // pred_check_branch
          %244 = sbr.rel (%p242) target = $region48
        $region47: #{tpu_custom_call.1} parent=39 // pred_region
          %245 = dma.done [#allocation6], 18432
        $region48: #{tpu_custom_call.1} parent=39 // pred_fallthru
          _
        // Predicated region
        $region49: #{tpu_custom_call.1} parent=39 // pred_check
          %p246 = pneg %p107
        $region50: #{tpu_custom_call.1} parent=39 // pred_check_branch
          %248 = sbr.rel (%p246) target = $region52
        $region51: #{tpu_custom_call.1} parent=39 // pred_region
          %249 = dma.done [#allocation6], 9216
        $region52: #{tpu_custom_call.1} parent=39 // pred_fallthru
          _
        %s250 = sand.u32 %s31, 1
        %s251 = scalar_lea.sflag [#allocation3], %s250
        %s252 = sand.u32 %s31, 1
        %s253 = smul.addr %s252, 432
        %s254 = scalar_lea.vmem [#allocation2], %s253
        %p255 = pneg %p44
        %p256 = pneg %p41
        %p257 = pneg %p65
        %p258 = pneg %p62
        %p259 = pneg %p86
        %p260 = pneg %p83
        %p261 = pneg %p107
        %p262 = pneg %p104
        %p263 = pneg %p128
        %p264 = pneg %p125
        %p265 = pneg %p154
        %p266 = pneg %p151
        %s267 = sand.u32 %s141, 1
        %s268 = scalar_lea.sflag [#allocation4], %s267
        %s269 = sand.u32 %s141, 1
        %s270 = smul.addr %s269, 384
        %s271 = scalar_lea.vmem [#allocation8], %s270
        %v273 = vld [vmem:[%s237] sm:$0xff]
        %v274 = vld [vmem:[%s237 + $0x8] sm:$0xff]
        %v275 = vld [vmem:[%s237 + $0x10] sm:$0xff]
        %v276 = vld [vmem:[%s237 + $0x18] sm:$0xff]
        %v277 = vld [vmem:[%s237 + $0x20] sm:$0xff]
        %v278 = vld [vmem:[%s237 + $0x28] sm:$0xff]
        %v279 = vld [vmem:[%s237 + $0x30] sm:$0xff]
        %v280 = vld [vmem:[%s237 + $0x38] sm:$0xff]
        %v281 = vld [vmem:[%s237 + $0x40] sm:$0xff]
        %v282 = vld [vmem:[%s237 + $0x48] sm:$0xff]
        %v283 = vld [vmem:[%s237 + $0x50] sm:$0xff]
        %v284 = vld [vmem:[%s237 + $0x58] sm:$0xff]
        %v285 = vld [vmem:[%s237 + $0x60] sm:$0xff]
        %v286 = vld [vmem:[%s237 + $0x68] sm:$0xff]
        %v287 = vld [vmem:[%s237 + $0x70] sm:$0xff]
        %v288 = vld [vmem:[%s237 + $0x78] sm:$0xff]
        %v289 = vld [vmem:[%s237 + $0x80] sm:$0xff]
        %v290 = vld [vmem:[%s237 + $0x88] sm:$0xff]
        %v291 = vld [vmem:[%s237 + $0x90] sm:$0xff]
        %v292 = vld [vmem:[%s237 + $0x98] sm:$0xff]
        %v293 = vld [vmem:[%s237 + $0xa0] sm:$0xff]
        %v294 = vld [vmem:[%s237 + $0xa8] sm:$0xff]
        %v295 = vld [vmem:[%s237 + $0xb0] sm:$0xff]
        %v296 = vld [vmem:[%s237 + $0xb8] sm:$0xff]
        %v297 = vld [vmem:[%s237 + $0xc0] sm:$0xff]
        %v298 = vld [vmem:[%s237 + $0xc8] sm:$0xff]
        %v299 = vld [vmem:[%s237 + $0xd0] sm:$0xff]
        %v300 = vld [vmem:[%s237 + $0xd8] sm:$0xff]
        %v301 = vld [vmem:[%s237 + $0xe0] sm:$0xff]
        %v302 = vld [vmem:[%s237 + $0xe8] sm:$0xff]
        %v303 = vld [vmem:[%s237 + $0xf0] sm:$0xff]
        %v304 = vld [vmem:[%s237 + $0xf8] sm:$0xff]
        %v305 = vld [vmem:[%s237 + $0x100] sm:$0xff]
        %v306 = vld [vmem:[%s237 + $0x108] sm:$0xff]
        %v307 = vld [vmem:[%s237 + $0x110] sm:$0xff]
        %v308 = vld [vmem:[%s237 + $0x118] sm:$0xff]
        %v309 = vld [vmem:[%s237 + $0x120] sm:$0xff]
        %v310 = vld [vmem:[%s237 + $0x128] sm:$0xff]
        %v311 = vld [vmem:[%s237 + $0x130] sm:$0xff]
        %v312 = vld [vmem:[%s237 + $0x138] sm:$0xff]
        %v313 = vld [vmem:[%s237 + $0x140] sm:$0xff]
        %v314 = vld [vmem:[%s237 + $0x148] sm:$0xff]
        %v315 = vld [vmem:[%s237 + $0x150] sm:$0xff]
        %v316 = vld [vmem:[%s237 + $0x158] sm:$0xff]
        %v317 = vld [vmem:[%s237 + $0x160] sm:$0xff]
        %v318 = vld [vmem:[%s237 + $0x168] sm:$0xff]
        %v319 = vld [vmem:[%s237 + $0x170] sm:$0xff]
        %v320 = vld [vmem:[%s237 + $0x178] sm:$0xff]
        %v321 = vld [vmem:[%s237 + $0x180] sm:$0xff]
        %v322 = vld [vmem:[%s237 + $0x188] sm:$0xff]
        %v323 = vld [vmem:[%s237 + $0x190] sm:$0xff]
        %v324 = vld [vmem:[%s237 + $0x198] sm:$0xff]
        %v325 = vld [vmem:[%s237 + $0x1a0] sm:$0xff]
        %v326 = vld [vmem:[%s237 + $0x1a8] sm:$0xff]
        %v327 = vrot.slane %v273, 7
        %v328 = vrot.slane %v274, 7
        %v329 = vrot.slane %v275, 7
        %v330 = vrot.slane %v276, 7
        %v331 = vrot.slane %v277, 7
        %v332 = vrot.slane %v278, 7
        %v333 = vrot.slane %v279, 7
        %v334 = vrot.slane %v280, 7
        %v335 = vrot.slane %v281, 7
        %v336 = vrot.slane %v282, 7
        %v337 = vrot.slane %v283, 7
        %v338 = vrot.slane %v284, 7
        %v339 = vrot.slane %v285, 7
        %v340 = vrot.slane %v286, 7
        %v341 = vrot.slane %v287, 7
        %v342 = vrot.slane %v288, 7
        %v343 = vrot.slane %v289, 7
        %v344 = vrot.slane %v290, 7
        %v345 = vrot.slane %v291, 7
        %v346 = vrot.slane %v292, 7
        %v347 = vrot.slane %v293, 7
        %v348 = vrot.slane %v294, 7
        %v349 = vrot.slane %v295, 7
        %v350 = vrot.slane %v296, 7
        %v351 = vrot.slane %v297, 7
        %v352 = vrot.slane %v298, 7
        %v353 = vrot.slane %v299, 7
        %v354 = vrot.slane %v300, 7
        %v355 = vrot.slane %v301, 7
        %v356 = vrot.slane %v302, 7
        %v357 = vrot.slane %v303, 7
        %v358 = vrot.slane %v304, 7
        %v359 = vrot.slane %v305, 7
        %v360 = vrot.slane %v306, 7
        %v361 = vrot.slane %v307, 7
        %v362 = vrot.slane %v308, 7
        %v363 = vrot.slane %v309, 7
        %v364 = vrot.slane %v310, 7
        %v365 = vrot.slane %v311, 7
        %v366 = vrot.slane %v312, 7
        %v367 = vrot.slane %v313, 7
        %v368 = vrot.slane %v314, 7
        %v369 = vrot.slane %v315, 7
        %v370 = vrot.slane %v316, 7
        %v371 = vrot.slane %v317, 7
        %v372 = vrot.slane %v318, 7
        %v373 = vrot.slane %v319, 7
        %v374 = vrot.slane %v320, 7
        %v375 = vrot.slane %v321, 7
        %v376 = vrot.slane %v322, 7
        %v377 = vrot.slane %v323, 7
        %v378 = vrot.slane %v324, 7
        %v379 = vrot.slane %v325, 7
        %v380 = vrot.slane %v326, 7
        %v381 = vlaneseq
        %v382 = vshrl.u32 %v381, 7
        %vm383 = vcmp.lt.s32.totalorder %v382, 1
        %v384 = vsel %vm383, %v379, %v380
        %v385 = vsel %vm383, %v378, %v379
        %v386 = vsel %vm383, %v377, %v378
        %v387 = vsel %vm383, %v376, %v377
        %v388 = vsel %vm383, %v375, %v376
        %v389 = vsel %vm383, %v374, %v375
        %v390 = vsel %vm383, %v373, %v374
        %v391 = vsel %vm383, %v372, %v373
        %v392 = vsel %vm383, %v371, %v372
        %v393 = vsel %vm383, %v370, %v371
        %v394 = vsel %vm383, %v369, %v370
        %v395 = vsel %vm383, %v368, %v369
        %v396 = vsel %vm383, %v367, %v368
        %v397 = vsel %vm383, %v366, %v367
        %v398 = vsel %vm383, %v365, %v366
        %v399 = vsel %vm383, %v364, %v365
        %v400 = vsel %vm383, %v363, %v364
        %v401 = vsel %vm383, %v362, %v363
        %v402 = vsel %vm383, %v361, %v362
        %v403 = vsel %vm383, %v360, %v361
        %v404 = vsel %vm383, %v359, %v360
        %v405 = vsel %vm383, %v358, %v359
        %v406 = vsel %vm383, %v357, %v358
        %v407 = vsel %vm383, %v356, %v357
        %v408 = vsel %vm383, %v355, %v356
        %v409 = vsel %vm383, %v354, %v355
        %v410 = vsel %vm383, %v353, %v354
        %v411 = vsel %vm383, %v352, %v353
        %v412 = vsel %vm383, %v351, %v352
        %v413 = vsel %vm383, %v350, %v351
        %v414 = vsel %vm383, %v349, %v350
        %v415 = vsel %vm383, %v348, %v349
        %v416 = vsel %vm383, %v347, %v348
        %v417 = vsel %vm383, %v346, %v347
        %v418 = vsel %vm383, %v345, %v346
        %v419 = vsel %vm383, %v344, %v345
        %v420 = vsel %vm383, %v343, %v344
        %v421 = vsel %vm383, %v342, %v343
        %v422 = vsel %vm383, %v341, %v342
        %v423 = vsel %vm383, %v340, %v341
        %v424 = vsel %vm383, %v339, %v340
        %v425 = vsel %vm383, %v338, %v339
        %v426 = vsel %vm383, %v337, %v338
        %v427 = vsel %vm383, %v336, %v337
        %v428 = vsel %vm383, %v335, %v336
        %v429 = vsel %vm383, %v334, %v335
        %v430 = vsel %vm383, %v333, %v334
        %v431 = vsel %vm383, %v332, %v333
        %v432 = vsel %vm383, %v331, %v332
        %v433 = vsel %vm383, %v330, %v331
        %v434 = vsel %vm383, %v329, %v330
        %v435 = vsel %vm383, %v328, %v329
        %v436 = vsel %vm383, %v327, %v328
        %v437 = vsel %vm383, %v380, %v327
        %v438 = vrot.slane %v273, 1
        %v439 = vrot.slane %v274, 1
        %v440 = vrot.slane %v275, 1
        %v441 = vrot.slane %v276, 1
        %v442 = vrot.slane %v277, 1
        %v443 = vrot.slane %v278, 1
        %v444 = vrot.slane %v279, 1
        %v445 = vrot.slane %v280, 1
        %v446 = vrot.slane %v281, 1
        %v447 = vrot.slane %v282, 1
        %v448 = vrot.slane %v283, 1
        %v449 = vrot.slane %v284, 1
        %v450 = vrot.slane %v285, 1
        %v451 = vrot.slane %v286, 1
        %v452 = vrot.slane %v287, 1
        %v453 = vrot.slane %v288, 1
        %v454 = vrot.slane %v289, 1
        %v455 = vrot.slane %v290, 1
        %v456 = vrot.slane %v291, 1
        %v457 = vrot.slane %v292, 1
        %v458 = vrot.slane %v293, 1
        %v459 = vrot.slane %v294, 1
        %v460 = vrot.slane %v295, 1
        %v461 = vrot.slane %v296, 1
        %v462 = vrot.slane %v297, 1
        %v463 = vrot.slane %v298, 1
        %v464 = vrot.slane %v299, 1
        %v465 = vrot.slane %v300, 1
        %v466 = vrot.slane %v301, 1
        %v467 = vrot.slane %v302, 1
        %v468 = vrot.slane %v303, 1
        %v469 = vrot.slane %v304, 1
        %v470 = vrot.slane %v305, 1
        %v471 = vrot.slane %v306, 1
        %v472 = vrot.slane %v307, 1
        %v473 = vrot.slane %v308, 1
        %v474 = vrot.slane %v309, 1
        %v475 = vrot.slane %v310, 1
        %v476 = vrot.slane %v311, 1
        %v477 = vrot.slane %v312, 1
        %v478 = vrot.slane %v313, 1
        %v479 = vrot.slane %v314, 1
        %v480 = vrot.slane %v315, 1
        %v481 = vrot.slane %v316, 1
        %v482 = vrot.slane %v317, 1
        %v483 = vrot.slane %v318, 1
        %v484 = vrot.slane %v319, 1
        %v485 = vrot.slane %v320, 1
        %v486 = vrot.slane %v321, 1
        %v487 = vrot.slane %v322, 1
        %v488 = vrot.slane %v323, 1
        %v489 = vrot.slane %v324, 1
        %v490 = vrot.slane %v325, 1
        %v491 = vrot.slane %v326, 1
        %vm492 = vcmp.lt.s32.totalorder %v382, 7
        %v493 = vsel %vm492, %v490, %v491
        %v494 = vsel %vm492, %v489, %v490
        %v495 = vsel %vm492, %v488, %v489
        %v496 = vsel %vm492, %v487, %v488
        %v497 = vsel %vm492, %v486, %v487
        %v498 = vsel %vm492, %v485, %v486
        %v499 = vsel %vm492, %v484, %v485
        %v500 = vsel %vm492, %v483, %v484
        %v501 = vsel %vm492, %v482, %v483
        %v502 = vsel %vm492, %v481, %v482
        %v503 = vsel %vm492, %v480, %v481
        %v504 = vsel %vm492, %v479, %v480
        %v505 = vsel %vm492, %v478, %v479
        %v506 = vsel %vm492, %v477, %v478
        %v507 = vsel %vm492, %v476, %v477
        %v508 = vsel %vm492, %v475, %v476
        %v509 = vsel %vm492, %v474, %v475
        %v510 = vsel %vm492, %v473, %v474
        %v511 = vsel %vm492, %v472, %v473
        %v512 = vsel %vm492, %v471, %v472
        %v513 = vsel %vm492, %v470, %v471
        %v514 = vsel %vm492, %v469, %v470
        %v515 = vsel %vm492, %v468, %v469
        %v516 = vsel %vm492, %v467, %v468
        %v517 = vsel %vm492, %v466, %v467
        %v518 = vsel %vm492, %v465, %v466
        %v519 = vsel %vm492, %v464, %v465
        %v520 = vsel %vm492, %v463, %v464
        %v521 = vsel %vm492, %v462, %v463
        %v522 = vsel %vm492, %v461, %v462
        %v523 = vsel %vm492, %v460, %v461
        %v524 = vsel %vm492, %v459, %v460
        %v525 = vsel %vm492, %v458, %v459
        %v526 = vsel %vm492, %v457, %v458
        %v527 = vsel %vm492, %v456, %v457
        %v528 = vsel %vm492, %v455, %v456
        %v529 = vsel %vm492, %v454, %v455
        %v530 = vsel %vm492, %v453, %v454
        %v531 = vsel %vm492, %v452, %v453
        %v532 = vsel %vm492, %v451, %v452
        %v533 = vsel %vm492, %v450, %v451
        %v534 = vsel %vm492, %v449, %v450
        %v535 = vsel %vm492, %v448, %v449
        %v536 = vsel %vm492, %v447, %v448
        %v537 = vsel %vm492, %v446, %v447
        %v538 = vsel %vm492, %v445, %v446
        %v539 = vsel %vm492, %v444, %v445
        %v540 = vsel %vm492, %v443, %v444
        %v541 = vsel %vm492, %v442, %v443
        %v542 = vsel %vm492, %v441, %v442
        %v543 = vsel %vm492, %v440, %v441
        %v544 = vsel %vm492, %v439, %v440
        %v545 = vsel %vm492, %v438, %v439
        %v546 = vsel %vm492, %v491, %v438
        %v547 = vpack.c.bf16 %v436, %v437
        %v548 = vpack.c.bf16 %v434, %v435
        %v549 = vpack.c.bf16 %v432, %v433
        %v550 = vpack.c.bf16 %v430, %v431
        %v551 = vpack.c.bf16 %v428, %v429
        %v552 = vpack.c.bf16 %v426, %v427
        %v553 = vpack.c.bf16 %v424, %v425
        %v554 = vpack.c.bf16 %v422, %v423
        %v555 = vpack.c.bf16 %v420, %v421
        %v556 = vpack.c.bf16 %v418, %v419
        %v557 = vpack.c.bf16 %v416, %v417
        %v558 = vpack.c.bf16 %v414, %v415
        %v559 = vpack.c.bf16 %v412, %v413
        %v560 = vpack.c.bf16 %v410, %v411
        %v561 = vpack.c.bf16 %v408, %v409
        %v562 = vpack.c.bf16 %v406, %v407
        %v563 = vpack.c.bf16 %v404, %v405
        %v564 = vpack.c.bf16 %v402, %v403
        %v565 = vpack.c.bf16 %v400, %v401
        %v566 = vpack.c.bf16 %v398, %v399
        %v567 = vpack.c.bf16 %v396, %v397
        %v568 = vpack.c.bf16 %v394, %v395
        %v569 = vpack.c.bf16 %v392, %v393
        %v570 = vpack.c.bf16 %v390, %v391
        %v571 = vpack.c.bf16 %v274, %v273
        %v572 = vpack.c.bf16 %v276, %v275
        %v573 = vpack.c.bf16 %v278, %v277
        %v574 = vpack.c.bf16 %v280, %v279
        %v575 = vpack.c.bf16 %v282, %v281
        %v576 = vpack.c.bf16 %v284, %v283
        %v577 = vpack.c.bf16 %v286, %v285
        %v578 = vpack.c.bf16 %v288, %v287
        %v579 = vpack.c.bf16 %v290, %v289
        %v580 = vpack.c.bf16 %v292, %v291
        %v581 = vpack.c.bf16 %v294, %v293
        %v582 = vpack.c.bf16 %v296, %v295
        %v583 = vpack.c.bf16 %v298, %v297
        %v584 = vpack.c.bf16 %v300, %v299
        %v585 = vpack.c.bf16 %v302, %v301
        %v586 = vpack.c.bf16 %v304, %v303
        %v587 = vpack.c.bf16 %v306, %v305
        %v588 = vpack.c.bf16 %v308, %v307
        %v589 = vpack.c.bf16 %v310, %v309
        %v590 = vpack.c.bf16 %v312, %v311
        %v591 = vpack.c.bf16 %v314, %v313
        %v592 = vpack.c.bf16 %v316, %v315
        %v593 = vpack.c.bf16 %v318, %v317
        %v594 = vpack.c.bf16 %v320, %v319
        %v595 = vpack.c.bf16 %v544, %v545
        %v596 = vpack.c.bf16 %v542, %v543
        %v597 = vpack.c.bf16 %v540, %v541
        %v598 = vpack.c.bf16 %v538, %v539
        %v599 = vpack.c.bf16 %v536, %v537
        %v600 = vpack.c.bf16 %v534, %v535
        %v601 = vpack.c.bf16 %v532, %v533
        %v602 = vpack.c.bf16 %v530, %v531
        %v603 = vpack.c.bf16 %v528, %v529
        %v604 = vpack.c.bf16 %v526, %v527
        %v605 = vpack.c.bf16 %v524, %v525
        %v606 = vpack.c.bf16 %v522, %v523
        %v607 = vpack.c.bf16 %v520, %v521
        %v608 = vpack.c.bf16 %v518, %v519
        %v609 = vpack.c.bf16 %v516, %v517
        %v610 = vpack.c.bf16 %v514, %v515
        %v611 = vpack.c.bf16 %v512, %v513
        %v612 = vpack.c.bf16 %v510, %v511
        %v613 = vpack.c.bf16 %v508, %v509
        %v614 = vpack.c.bf16 %v506, %v507
        %v615 = vpack.c.bf16 %v504, %v505
        %v616 = vpack.c.bf16 %v502, %v503
        %v617 = vpack.c.bf16 %v500, %v501
        %v618 = vpack.c.bf16 %v498, %v499
        %v619 = vpack.c.bf16 %v433, %v434
        %v620 = vpack.c.bf16 %v431, %v432
        %v621 = vpack.c.bf16 %v429, %v430
        %v622 = vpack.c.bf16 %v427, %v428
        %v623 = vpack.c.bf16 %v425, %v426
        %v624 = vpack.c.bf16 %v423, %v424
        %v625 = vpack.c.bf16 %v421, %v422
        %v626 = vpack.c.bf16 %v419, %v420
        %v627 = vpack.c.bf16 %v417, %v418
        %v628 = vpack.c.bf16 %v415, %v416
        %v629 = vpack.c.bf16 %v413, %v414
        %v630 = vpack.c.bf16 %v411, %v412
        %v631 = vpack.c.bf16 %v409, %v410
        %v632 = vpack.c.bf16 %v407, %v408
        %v633 = vpack.c.bf16 %v405, %v406
        %v634 = vpack.c.bf16 %v403, %v404
        %v635 = vpack.c.bf16 %v401, %v402
        %v636 = vpack.c.bf16 %v399, %v400
        %v637 = vpack.c.bf16 %v397, %v398
        %v638 = vpack.c.bf16 %v395, %v396
        %v639 = vpack.c.bf16 %v393, %v394
        %v640 = vpack.c.bf16 %v391, %v392
        %v641 = vpack.c.bf16 %v389, %v390
        %v642 = vpack.c.bf16 %v387, %v388
        %v643 = vpack.c.bf16 %v277, %v276
        %v644 = vpack.c.bf16 %v279, %v278
        %v645 = vpack.c.bf16 %v281, %v280
        %v646 = vpack.c.bf16 %v283, %v282
        %v647 = vpack.c.bf16 %v285, %v284
        %v648 = vpack.c.bf16 %v287, %v286
        %v649 = vpack.c.bf16 %v289, %v288
        %v650 = vpack.c.bf16 %v291, %v290
        %v651 = vpack.c.bf16 %v293, %v292
        %v652 = vpack.c.bf16 %v295, %v294
        %v653 = vpack.c.bf16 %v297, %v296
        %v654 = vpack.c.bf16 %v299, %v298
        %v655 = vpack.c.bf16 %v301, %v300
        %v656 = vpack.c.bf16 %v303, %v302
        %v657 = vpack.c.bf16 %v305, %v304
        %v658 = vpack.c.bf16 %v307, %v306
        %v659 = vpack.c.bf16 %v309, %v308
        %v660 = vpack.c.bf16 %v311, %v310
        %v661 = vpack.c.bf16 %v313, %v312
        %v662 = vpack.c.bf16 %v315, %v314
        %v663 = vpack.c.bf16 %v317, %v316
        %v664 = vpack.c.bf16 %v319, %v318
        %v665 = vpack.c.bf16 %v321, %v320
        %v666 = vpack.c.bf16 %v323, %v322
        %v667 = vpack.c.bf16 %v541, %v542
        %v668 = vpack.c.bf16 %v539, %v540
        %v669 = vpack.c.bf16 %v537, %v538
        %v670 = vpack.c.bf16 %v535, %v536
        %v671 = vpack.c.bf16 %v533, %v534
        %v672 = vpack.c.bf16 %v531, %v532
        %v673 = vpack.c.bf16 %v529, %v530
        %v674 = vpack.c.bf16 %v527, %v528
        %v675 = vpack.c.bf16 %v525, %v526
        %v676 = vpack.c.bf16 %v523, %v524
        %v677 = vpack.c.bf16 %v521, %v522
        %v678 = vpack.c.bf16 %v519, %v520
        %v679 = vpack.c.bf16 %v517, %v518
        %v680 = vpack.c.bf16 %v515, %v516
        %v681 = vpack.c.bf16 %v513, %v514
        %v682 = vpack.c.bf16 %v511, %v512
        %v683 = vpack.c.bf16 %v509, %v510
        %v684 = vpack.c.bf16 %v507, %v508
        %v685 = vpack.c.bf16 %v505, %v506
        %v686 = vpack.c.bf16 %v503, %v504
        %v687 = vpack.c.bf16 %v501, %v502
        %v688 = vpack.c.bf16 %v499, %v500
        %v689 = vpack.c.bf16 %v497, %v498
        %v690 = vpack.c.bf16 %v495, %v496
        %v691 = vpack.c.bf16 %v388, %v389
        %v692 = vpack.c.bf16 %v386, %v387
        %v693 = vpack.c.bf16 %v384, %v385
        %v694 = vpack.c.bf16 %v322, %v321
        %v695 = vpack.c.bf16 %v324, %v323
        %v696 = vpack.c.bf16 %v326, %v325
        %v697 = vpack.c.bf16 %v496, %v497
        %v698 = vpack.c.bf16 %v494, %v495
        %v699 = vpack.c.bf16 %v546, %v493
        %v700 = vld [vmem:[#allocation5] sm:$0xff]
        %v701 = vld [vmem:[#allocation5 + $0x8] sm:$0xff]
        %v702 = vld [vmem:[#allocation5 + $0x10] sm:$0xff]
        %v703 = vld [vmem:[#allocation5 + $0x18] sm:$0xff]
        %v704 = vld [vmem:[#allocation5 + $0x20] sm:$0xff]
        %v705 = vld [vmem:[#allocation5 + $0x28] sm:$0xff]
        %v706 = vld [vmem:[#allocation5 + $0x30] sm:$0xff]
        %v707 = vld [vmem:[#allocation5 + $0x38] sm:$0xff]
        %v708 = vld [vmem:[#allocation5 + $0x40] sm:$0xff]
        %v709 = vld [vmem:[#allocation5 + $0x48] sm:$0xff]
        %v710 = vld [vmem:[#allocation5 + $0x50] sm:$0xff]
        %v711 = vld [vmem:[#allocation5 + $0x58] sm:$0xff]
        %v712 = vld [vmem:[#allocation5 + $0x60] sm:$0xff]
        %v713 = vld [vmem:[#allocation5 + $0x68] sm:$0xff]
        %v714 = vld [vmem:[#allocation5 + $0x70] sm:$0xff]
        %v715 = vld [vmem:[#allocation5 + $0x78] sm:$0xff]
        %v716 = vld [vmem:[#allocation5 + $0x80] sm:$0xff]
        %v717 = vld [vmem:[#allocation5 + $0x88] sm:$0xff]
        %v718 = vld [vmem:[#allocation5 + $0x90] sm:$0xff]
        %v719 = vld [vmem:[#allocation5 + $0x98] sm:$0xff]
        %v720 = vld [vmem:[#allocation5 + $0xa0] sm:$0xff]
        %v721 = vld [vmem:[#allocation5 + $0xa8] sm:$0xff]
        %v722 = vld [vmem:[#allocation5 + $0xb0] sm:$0xff]
        %v723 = vld [vmem:[#allocation5 + $0xb8] sm:$0xff]
        %v724 = vld [vmem:[#allocation5 + $0xc0] sm:$0xff]
        %v725 = vld [vmem:[#allocation5 + $0xc8] sm:$0xff]
        %v726 = vld [vmem:[#allocation5 + $0xd0] sm:$0xff]
        %v727 = vld [vmem:[#allocation5 + $0xd8] sm:$0xff]
        %v728 = vld [vmem:[#allocation5 + $0xe0] sm:$0xff]
        %v729 = vld [vmem:[#allocation5 + $0xe8] sm:$0xff]
        %v730 = vld [vmem:[#allocation5 + $0xf0] sm:$0xff]
        %v731 = vld [vmem:[#allocation5 + $0xf8] sm:$0xff]
        %v732 = vld [vmem:[#allocation5 + $0x100] sm:$0xff]
        %v733 = vld [vmem:[#allocation5 + $0x108] sm:$0xff]
        %v734 = vld [vmem:[#allocation5 + $0x110] sm:$0xff]
        %v735 = vld [vmem:[#allocation5 + $0x118] sm:$0xff]
        %v736 = vld [vmem:[#allocation5 + $0x120] sm:$0xff]
        %v737 = vld [vmem:[#allocation5 + $0x128] sm:$0xff]
        %v738 = vld [vmem:[#allocation5 + $0x130] sm:$0xff]
        %v739 = vld [vmem:[#allocation5 + $0x138] sm:$0xff]
        %v740 = vld [vmem:[#allocation5 + $0x140] sm:$0xff]
        %v741 = vld [vmem:[#allocation5 + $0x148] sm:$0xff]
        %v742 = vld [vmem:[#allocation5 + $0x150] sm:$0xff]
        %v743 = vld [vmem:[#allocation5 + $0x158] sm:$0xff]
        %v744 = vld [vmem:[#allocation5 + $0x160] sm:$0xff]
        %v745 = vld [vmem:[#allocation5 + $0x168] sm:$0xff]
        %v746 = vld [vmem:[#allocation5 + $0x170] sm:$0xff]
        %v747 = vld [vmem:[#allocation5 + $0x178] sm:$0xff]
        %v748 = vld [vmem:[#allocation5 + $0x180] sm:$0xff]
        %v749 = vld [vmem:[#allocation5 + $0x188] sm:$0xff]
        %v750 = vld [vmem:[#allocation5 + $0x190] sm:$0xff]
        %v751 = vld [vmem:[#allocation5 + $0x198] sm:$0xff]
        %v752 = vld [vmem:[#allocation5 + $0x1a0] sm:$0xff]
        %v753 = vld [vmem:[#allocation5 + $0x1a8] sm:$0xff]
        %v754 = vld [vmem:[#allocation5 + $0x1b0] sm:$0xff]
        %v755 = vld [vmem:[#allocation5 + $0x1b8] sm:$0xff]
        %v756 = vld [vmem:[#allocation5 + $0x1c0] sm:$0xff]
        %v757 = vld [vmem:[#allocation5 + $0x1c8] sm:$0xff]
        %v758 = vld [vmem:[#allocation5 + $0x1d0] sm:$0xff]
        %v759 = vld [vmem:[#allocation5 + $0x1d8] sm:$0xff]
        %v760 = vld [vmem:[#allocation5 + $0x1e0] sm:$0xff]
        %v761 = vld [vmem:[#allocation5 + $0x1e8] sm:$0xff]
        %v762 = vld [vmem:[#allocation5 + $0x1f0] sm:$0xff]
        %v763 = vld [vmem:[#allocation5 + $0x1f8] sm:$0xff]
        %v764 = vld [vmem:[#allocation5 + $0x200] sm:$0xff]
        %v765 = vld [vmem:[#allocation5 + $0x208] sm:$0xff]
        %v766 = vld [vmem:[#allocation5 + $0x210] sm:$0xff]
        %v767 = vld [vmem:[#allocation5 + $0x218] sm:$0xff]
        %v768 = vld [vmem:[#allocation5 + $0x220] sm:$0xff]
        %v769 = vld [vmem:[#allocation5 + $0x228] sm:$0xff]
        %v770 = vld [vmem:[#allocation5 + $0x230] sm:$0xff]
        %v771 = vld [vmem:[#allocation5 + $0x238] sm:$0xff]
        %v772 = vld [vmem:[#allocation5 + $0x240] sm:$0xff]
        %v773 = vld [vmem:[#allocation5 + $0x248] sm:$0xff]
        %v774 = vld [vmem:[#allocation5 + $0x250] sm:$0xff]
        %v775 = vld [vmem:[#allocation5 + $0x258] sm:$0xff]
        %v776 = vld [vmem:[#allocation5 + $0x260] sm:$0xff]
        %v777 = vld [vmem:[#allocation5 + $0x268] sm:$0xff]
        %v778 = vld [vmem:[#allocation5 + $0x270] sm:$0xff]
        %v779 = vld [vmem:[#allocation5 + $0x278] sm:$0xff]
        %v780 = vld [vmem:[#allocation5 + $0x280] sm:$0xff]
        %v781 = vld [vmem:[#allocation5 + $0x288] sm:$0xff]
        %v782 = vld [vmem:[#allocation5 + $0x290] sm:$0xff]
        %v783 = vld [vmem:[#allocation5 + $0x298] sm:$0xff]
        %v784 = vld [vmem:[#allocation5 + $0x2a0] sm:$0xff]
        %v785 = vld [vmem:[#allocation5 + $0x2a8] sm:$0xff]
        %v786 = vld [vmem:[#allocation5 + $0x2b0] sm:$0xff]
        %v787 = vld [vmem:[#allocation5 + $0x2b8] sm:$0xff]
        %v788 = vld [vmem:[#allocation5 + $0x2c0] sm:$0xff]
        %v789 = vld [vmem:[#allocation5 + $0x2c8] sm:$0xff]
        %v790 = vld [vmem:[#allocation5 + $0x2d0] sm:$0xff]
        %v791 = vld [vmem:[#allocation5 + $0x2d8] sm:$0xff]
        %v792 = vld [vmem:[#allocation5 + $0x2e0] sm:$0xff]
        %v793 = vld [vmem:[#allocation5 + $0x2e8] sm:$0xff]
        %v794 = vld [vmem:[#allocation5 + $0x2f0] sm:$0xff]
        %v795 = vld [vmem:[#allocation5 + $0x2f8] sm:$0xff]
        %v796 = vld [vmem:[#allocation5 + $0x300] sm:$0xff]
        %v797 = vld [vmem:[#allocation5 + $0x308] sm:$0xff]
        %v798 = vld [vmem:[#allocation5 + $0x310] sm:$0xff]
        %v799 = vld [vmem:[#allocation5 + $0x318] sm:$0xff]
        %v800 = vld [vmem:[#allocation5 + $0x320] sm:$0xff]
        %v801 = vld [vmem:[#allocation5 + $0x328] sm:$0xff]
        %v802 = vld [vmem:[#allocation5 + $0x330] sm:$0xff]
        %v803 = vld [vmem:[#allocation5 + $0x338] sm:$0xff]
        %v804 = vld [vmem:[#allocation5 + $0x340] sm:$0xff]
        %v805 = vld [vmem:[#allocation5 + $0x348] sm:$0xff]
        %v806 = vld [vmem:[#allocation5 + $0x350] sm:$0xff]
        %v807 = vld [vmem:[#allocation5 + $0x358] sm:$0xff]
        %v808 = vld [vmem:[#allocation5 + $0x360] sm:$0xff]
        %v809 = vld [vmem:[#allocation5 + $0x368] sm:$0xff]
        %v810 = vld [vmem:[#allocation5 + $0x370] sm:$0xff]
        %v811 = vld [vmem:[#allocation5 + $0x378] sm:$0xff]
        %v812 = vld [vmem:[#allocation5 + $0x380] sm:$0xff]
        %v813 = vld [vmem:[#allocation5 + $0x388] sm:$0xff]
        %v814 = vld [vmem:[#allocation5 + $0x390] sm:$0xff]
        %v815 = vld [vmem:[#allocation5 + $0x398] sm:$0xff]
        %v816 = vld [vmem:[#allocation5 + $0x3a0] sm:$0xff]
        %v817 = vld [vmem:[#allocation5 + $0x3a8] sm:$0xff]
        %v818 = vld [vmem:[#allocation5 + $0x3b0] sm:$0xff]
        %v819 = vld [vmem:[#allocation5 + $0x3b8] sm:$0xff]
        %v820 = vld [vmem:[#allocation5 + $0x3c0] sm:$0xff]
        %v821 = vld [vmem:[#allocation5 + $0x3c8] sm:$0xff]
        %v822 = vld [vmem:[#allocation5 + $0x3d0] sm:$0xff]
        %v823 = vld [vmem:[#allocation5 + $0x3d8] sm:$0xff]
        %v824 = vld [vmem:[#allocation5 + $0x3e0] sm:$0xff]
        %v825 = vld [vmem:[#allocation5 + $0x3e8] sm:$0xff]
        %v826 = vld [vmem:[#allocation5 + $0x3f0] sm:$0xff]
        %v827 = vld [vmem:[#allocation5 + $0x3f8] sm:$0xff]
        %v828 = vld [vmem:[#allocation5 + $0x400] sm:$0xff]
        %v829 = vld [vmem:[#allocation5 + $0x408] sm:$0xff]
        %v830 = vld [vmem:[#allocation5 + $0x410] sm:$0xff]
        %v831 = vld [vmem:[#allocation5 + $0x418] sm:$0xff]
        %v832 = vld [vmem:[#allocation5 + $0x420] sm:$0xff]
        %v833 = vld [vmem:[#allocation5 + $0x428] sm:$0xff]
        %v834 = vld [vmem:[#allocation5 + $0x430] sm:$0xff]
        %v835 = vld [vmem:[#allocation5 + $0x438] sm:$0xff]
        %v836 = vld [vmem:[#allocation5 + $0x440] sm:$0xff]
        %v837 = vld [vmem:[#allocation5 + $0x448] sm:$0xff]
        %v838 = vld [vmem:[#allocation5 + $0x450] sm:$0xff]
        %v839 = vld [vmem:[#allocation5 + $0x458] sm:$0xff]
        %v840 = vld [vmem:[#allocation5 + $0x460] sm:$0xff]
        %v841 = vld [vmem:[#allocation5 + $0x468] sm:$0xff]
        %v842 = vld [vmem:[#allocation5 + $0x470] sm:$0xff]
        %v843 = vld [vmem:[#allocation5 + $0x478] sm:$0xff]
        %v844 = vld [vmem:[%s2] sm:$0x3]
        %v846 = vlaneseq
        %v847 = vshrl.u32 %v846, 7
        %v848 = vsub.s32 0, %v847
        %v849 = vrot.slane %v844, %v848
        %v850 = vlaneseq
        %v851 = vshrl.u32 %v850, 7
        %v852 = vsub.s32 1, %v851
        %v853 = vrot.slane %v844, %v852
        %v1000 = vunpack.c.l.b16 %v700
        %v1001 = vunpack.c.h.b16 %v700
        %v1002 = vunpack.c.l.b16 %v701
        %v1003 = vunpack.c.h.b16 %v701
        %v1004 = vunpack.c.l.b16 %v702
        %v1005 = vunpack.c.h.b16 %v702
        %v1006 = vunpack.c.l.b16 %v703
        %v1007 = vunpack.c.h.b16 %v703
        %v1008 = vunpack.c.l.b16 %v704
        %v1009 = vunpack.c.h.b16 %v704
        %v1010 = vunpack.c.l.b16 %v705
        %v1011 = vunpack.c.h.b16 %v705
        %v1012 = vunpack.c.l.b16 %v706
        %v1013 = vunpack.c.h.b16 %v706
        %v1014 = vunpack.c.l.b16 %v707
        %v1015 = vunpack.c.h.b16 %v707
        %v1016 = vunpack.c.l.b16 %v708
        %v1017 = vunpack.c.h.b16 %v708
        %v1018 = vunpack.c.l.b16 %v709
        %v1019 = vunpack.c.h.b16 %v709
        %v1020 = vunpack.c.l.b16 %v710
        %v1021 = vunpack.c.h.b16 %v710
        %v1022 = vunpack.c.l.b16 %v711
        %v1023 = vunpack.c.h.b16 %v711
        %v1024 = vunpack.c.l.b16 %v712
        %v1025 = vunpack.c.h.b16 %v712
        %v1026 = vunpack.c.l.b16 %v713
        %v1027 = vunpack.c.h.b16 %v713
        %v1028 = vunpack.c.l.b16 %v714
        %v1029 = vunpack.c.h.b16 %v714
        %v1030 = vunpack.c.l.b16 %v715
        %v1031 = vunpack.c.h.b16 %v715
        %v1032 = vunpack.c.l.b16 %v716
        %v1033 = vunpack.c.h.b16 %v716
        %v1034 = vunpack.c.l.b16 %v717
        %v1035 = vunpack.c.h.b16 %v717
        %v1036 = vunpack.c.l.b16 %v718
        %v1037 = vunpack.c.h.b16 %v718
        %v1038 = vunpack.c.l.b16 %v719
        %v1039 = vunpack.c.h.b16 %v719
        %v1040 = vunpack.c.l.b16 %v720
        %v1041 = vunpack.c.h.b16 %v720
        %v1042 = vunpack.c.l.b16 %v721
        %v1043 = vunpack.c.h.b16 %v721
        %v1044 = vunpack.c.l.b16 %v722
        %v1045 = vunpack.c.h.b16 %v722
        %v1046 = vunpack.c.l.b16 %v723
        %v1047 = vunpack.c.h.b16 %v723
        %v1048 = vunpack.c.l.b16 %v724
        %v1049 = vunpack.c.h.b16 %v724
        %v1050 = vunpack.c.l.b16 %v725
        %v1051 = vunpack.c.h.b16 %v725
        %v1052 = vunpack.c.l.b16 %v726
        %v1053 = vunpack.c.h.b16 %v726
        %v1054 = vunpack.c.l.b16 %v727
        %v1055 = vunpack.c.h.b16 %v727
        %v1056 = vunpack.c.l.b16 %v728
        %v1057 = vunpack.c.h.b16 %v728
        %v1058 = vunpack.c.l.b16 %v729
        %v1059 = vunpack.c.h.b16 %v729
        %v1060 = vunpack.c.l.b16 %v730
        %v1061 = vunpack.c.h.b16 %v730
        %v1062 = vunpack.c.l.b16 %v731
        %v1063 = vunpack.c.h.b16 %v731
        %v1064 = vunpack.c.l.b16 %v732
        %v1065 = vunpack.c.h.b16 %v732
        %v1066 = vunpack.c.l.b16 %v733
        %v1067 = vunpack.c.h.b16 %v733
        %v1068 = vunpack.c.l.b16 %v734
        %v1069 = vunpack.c.h.b16 %v734
        %v1070 = vunpack.c.l.b16 %v735
        %v1071 = vunpack.c.h.b16 %v735
        %v1072 = vunpack.c.l.b16 %v736
        %v1073 = vunpack.c.h.b16 %v736
        %v1074 = vunpack.c.l.b16 %v737
        %v1075 = vunpack.c.h.b16 %v737
        %v1076 = vunpack.c.l.b16 %v738
        %v1077 = vunpack.c.h.b16 %v738
        %v1078 = vunpack.c.l.b16 %v739
        %v1079 = vunpack.c.h.b16 %v739
        %v1080 = vunpack.c.l.b16 %v740
        %v1081 = vunpack.c.h.b16 %v740
        %v1082 = vunpack.c.l.b16 %v741
        %v1083 = vunpack.c.h.b16 %v741
        %v1084 = vunpack.c.l.b16 %v742
        %v1085 = vunpack.c.h.b16 %v742
        %v1086 = vunpack.c.l.b16 %v743
        %v1087 = vunpack.c.h.b16 %v743
        %v1088 = vunpack.c.l.b16 %v744
        %v1089 = vunpack.c.h.b16 %v744
        %v1090 = vunpack.c.l.b16 %v745
        %v1091 = vunpack.c.h.b16 %v745
        %v1092 = vunpack.c.l.b16 %v746
        %v1093 = vunpack.c.h.b16 %v746
        %v1094 = vunpack.c.l.b16 %v747
        %v1095 = vunpack.c.h.b16 %v747
        %v1096 = vunpack.c.l.b16 %v748
        %v1097 = vunpack.c.h.b16 %v748
        %v1098 = vunpack.c.l.b16 %v749
        %v1099 = vunpack.c.h.b16 %v749
        %v1100 = vunpack.c.l.b16 %v750
        %v1101 = vunpack.c.h.b16 %v750
        %v1102 = vunpack.c.l.b16 %v751
        %v1103 = vunpack.c.h.b16 %v751
        %v1104 = vunpack.c.l.b16 %v752
        %v1105 = vunpack.c.h.b16 %v752
        %v1106 = vunpack.c.l.b16 %v753
        %v1107 = vunpack.c.h.b16 %v753
        %v1108 = vunpack.c.l.b16 %v754
        %v1109 = vunpack.c.h.b16 %v754
        %v1110 = vunpack.c.l.b16 %v755
        %v1111 = vunpack.c.h.b16 %v755
        %v1112 = vunpack.c.l.b16 %v756
        %v1113 = vunpack.c.h.b16 %v756
        %v1114 = vunpack.c.l.b16 %v757
        %v1115 = vunpack.c.h.b16 %v757
        %v1116 = vunpack.c.l.b16 %v758
        %v1117 = vunpack.c.h.b16 %v758
        %v1118 = vunpack.c.l.b16 %v759
        %v1119 = vunpack.c.h.b16 %v759
        %v1120 = vunpack.c.l.b16 %v760
        %v1121 = vunpack.c.h.b16 %v760
        %v1122 = vunpack.c.l.b16 %v761
        %v1123 = vunpack.c.h.b16 %v761
        %v1124 = vunpack.c.l.b16 %v762
        %v1125 = vunpack.c.h.b16 %v762
        %v1126 = vunpack.c.l.b16 %v763
        %v1127 = vunpack.c.h.b16 %v763
        %v1128 = vunpack.c.l.b16 %v764
        %v1129 = vunpack.c.h.b16 %v764
        %v1130 = vunpack.c.l.b16 %v765
        %v1131 = vunpack.c.h.b16 %v765
        %v1132 = vunpack.c.l.b16 %v766
        %v1133 = vunpack.c.h.b16 %v766
        %v1134 = vunpack.c.l.b16 %v767
        %v1135 = vunpack.c.h.b16 %v767
        %v1136 = vunpack.c.l.b16 %v768
        %v1137 = vunpack.c.h.b16 %v768
        %v1138 = vunpack.c.l.b16 %v769
        %v1139 = vunpack.c.h.b16 %v769
        %v1140 = vunpack.c.l.b16 %v770
        %v1141 = vunpack.c.h.b16 %v770
        %v1142 = vunpack.c.l.b16 %v771
        %v1143 = vunpack.c.h.b16 %v771
        %v1144 = vunpack.c.l.b16 %v772
        %v1145 = vunpack.c.h.b16 %v772
        %v1146 = vunpack.c.l.b16 %v773
        %v1147 = vunpack.c.h.b16 %v773
        %v1148 = vunpack.c.l.b16 %v774
        %v1149 = vunpack.c.h.b16 %v774
        %v1150 = vunpack.c.l.b16 %v775
        %v1151 = vunpack.c.h.b16 %v775
        %v1152 = vunpack.c.l.b16 %v776
        %v1153 = vunpack.c.h.b16 %v776
        %v1154 = vunpack.c.l.b16 %v777
        %v1155 = vunpack.c.h.b16 %v777
        %v1156 = vunpack.c.l.b16 %v778
        %v1157 = vunpack.c.h.b16 %v778
        %v1158 = vunpack.c.l.b16 %v779
        %v1159 = vunpack.c.h.b16 %v779
        %v1160 = vunpack.c.l.b16 %v780
        %v1161 = vunpack.c.h.b16 %v780
        %v1162 = vunpack.c.l.b16 %v781
        %v1163 = vunpack.c.h.b16 %v781
        %v1164 = vunpack.c.l.b16 %v782
        %v1165 = vunpack.c.h.b16 %v782
        %v1166 = vunpack.c.l.b16 %v783
        %v1167 = vunpack.c.h.b16 %v783
        %v1168 = vunpack.c.l.b16 %v784
        %v1169 = vunpack.c.h.b16 %v784
        %v1170 = vunpack.c.l.b16 %v785
        %v1171 = vunpack.c.h.b16 %v785
        %v1172 = vunpack.c.l.b16 %v786
        %v1173 = vunpack.c.h.b16 %v786
        %v1174 = vunpack.c.l.b16 %v787
        %v1175 = vunpack.c.h.b16 %v787
        %v1176 = vunpack.c.l.b16 %v788
        %v1177 = vunpack.c.h.b16 %v788
        %v1178 = vunpack.c.l.b16 %v789
        %v1179 = vunpack.c.h.b16 %v789
        %v1180 = vunpack.c.l.b16 %v790
        %v1181 = vunpack.c.h.b16 %v790
        %v1182 = vunpack.c.l.b16 %v791
        %v1183 = vunpack.c.h.b16 %v791
        %v1184 = vunpack.c.l.b16 %v792
        %v1185 = vunpack.c.h.b16 %v792
        %v1186 = vunpack.c.l.b16 %v793
        %v1187 = vunpack.c.h.b16 %v793
        %v1188 = vunpack.c.l.b16 %v794
        %v1189 = vunpack.c.h.b16 %v794
        %v1190 = vunpack.c.l.b16 %v795
        %v1191 = vunpack.c.h.b16 %v795
        %v1192 = vunpack.c.l.b16 %v796
        %v1193 = vunpack.c.h.b16 %v796
        %v1194 = vunpack.c.l.b16 %v797
        %v1195 = vunpack.c.h.b16 %v797
        %v1196 = vunpack.c.l.b16 %v798
        %v1197 = vunpack.c.h.b16 %v798
        %v1198 = vunpack.c.l.b16 %v799
        %v1199 = vunpack.c.h.b16 %v799
        %v1200 = vunpack.c.l.b16 %v800
        %v1201 = vunpack.c.h.b16 %v800
        %v1202 = vunpack.c.l.b16 %v801
        %v1203 = vunpack.c.h.b16 %v801
        %v1204 = vunpack.c.l.b16 %v802
        %v1205 = vunpack.c.h.b16 %v802
        %v1206 = vunpack.c.l.b16 %v803
        %v1207 = vunpack.c.h.b16 %v803
        %v1208 = vunpack.c.l.b16 %v804
        %v1209 = vunpack.c.h.b16 %v804
        %v1210 = vunpack.c.l.b16 %v805
        %v1211 = vunpack.c.h.b16 %v805
        %v1212 = vunpack.c.l.b16 %v806
        %v1213 = vunpack.c.h.b16 %v806
        %v1214 = vunpack.c.l.b16 %v807
        %v1215 = vunpack.c.h.b16 %v807
        %v1216 = vunpack.c.l.b16 %v808
        %v1217 = vunpack.c.h.b16 %v808
        %v1218 = vunpack.c.l.b16 %v809
        %v1219 = vunpack.c.h.b16 %v809
        %v1220 = vunpack.c.l.b16 %v810
        %v1221 = vunpack.c.h.b16 %v810
        %v1222 = vunpack.c.l.b16 %v811
        %v1223 = vunpack.c.h.b16 %v811
        %v1224 = vunpack.c.l.b16 %v812
        %v1225 = vunpack.c.h.b16 %v812
        %v1226 = vunpack.c.l.b16 %v813
        %v1227 = vunpack.c.h.b16 %v813
        %v1228 = vunpack.c.l.b16 %v814
        %v1229 = vunpack.c.h.b16 %v814
        %v1230 = vunpack.c.l.b16 %v815
        %v1231 = vunpack.c.h.b16 %v815
        %v1232 = vunpack.c.l.b16 %v816
        %v1233 = vunpack.c.h.b16 %v816
        %v1234 = vunpack.c.l.b16 %v817
        %v1235 = vunpack.c.h.b16 %v817
        %v1236 = vunpack.c.l.b16 %v818
        %v1237 = vunpack.c.h.b16 %v818
        %v1238 = vunpack.c.l.b16 %v819
        %v1239 = vunpack.c.h.b16 %v819
        %v1240 = vunpack.c.l.b16 %v820
        %v1241 = vunpack.c.h.b16 %v820
        %v1242 = vunpack.c.l.b16 %v821
        %v1243 = vunpack.c.h.b16 %v821
        %v1244 = vunpack.c.l.b16 %v822
        %v1245 = vunpack.c.h.b16 %v822
        %v1246 = vunpack.c.l.b16 %v823
        %v1247 = vunpack.c.h.b16 %v823
        %v1248 = vunpack.c.l.b16 %v824
        %v1249 = vunpack.c.h.b16 %v824
        %v1250 = vunpack.c.l.b16 %v825
        %v1251 = vunpack.c.h.b16 %v825
        %v1252 = vunpack.c.l.b16 %v826
        %v1253 = vunpack.c.h.b16 %v826
        %v1254 = vunpack.c.l.b16 %v827
        %v1255 = vunpack.c.h.b16 %v827
        %v1256 = vunpack.c.l.b16 %v828
        %v1257 = vunpack.c.h.b16 %v828
        %v1258 = vunpack.c.l.b16 %v829
        %v1259 = vunpack.c.h.b16 %v829
        %v1260 = vunpack.c.l.b16 %v830
        %v1261 = vunpack.c.h.b16 %v830
        %v1262 = vunpack.c.l.b16 %v831
        %v1263 = vunpack.c.h.b16 %v831
        %v1264 = vunpack.c.l.b16 %v832
        %v1265 = vunpack.c.h.b16 %v832
        %v1266 = vunpack.c.l.b16 %v833
        %v1267 = vunpack.c.h.b16 %v833
        %v1268 = vunpack.c.l.b16 %v834
        %v1269 = vunpack.c.h.b16 %v834
        %v1270 = vunpack.c.l.b16 %v835
        %v1271 = vunpack.c.h.b16 %v835
        %v1272 = vunpack.c.l.b16 %v836
        %v1273 = vunpack.c.h.b16 %v836
        %v1274 = vunpack.c.l.b16 %v837
        %v1275 = vunpack.c.h.b16 %v837
        %v1276 = vunpack.c.l.b16 %v838
        %v1277 = vunpack.c.h.b16 %v838
        %v1278 = vunpack.c.l.b16 %v839
        %v1279 = vunpack.c.h.b16 %v839
        %v1280 = vunpack.c.l.b16 %v840
        %v1281 = vunpack.c.h.b16 %v840
        %v1282 = vunpack.c.l.b16 %v841
        %v1283 = vunpack.c.h.b16 %v841
        %v1284 = vunpack.c.l.b16 %v842
        %v1285 = vunpack.c.h.b16 %v842
        %v1286 = vunpack.c.l.b16 %v843
        %v1287 = vunpack.c.h.b16 %v843
        %v1288 = vpack.c.b16 %v1002, %v1000
        %v1289 = vpack.c.b16 %v1003, %v1001
        %v1290 = vpack.c.b16 %v1006, %v1004
        %v1291 = vpack.c.b16 %v1007, %v1005
        %v1292 = vpack.c.b16 %v1010, %v1008
        %v1293 = vpack.c.b16 %v1011, %v1009
        %v1294 = vpack.c.b16 %v1014, %v1012
        %v1295 = vpack.c.b16 %v1015, %v1013
        %v1296 = vpack.c.b16 %v1018, %v1016
        %v1297 = vpack.c.b16 %v1019, %v1017
        %v1298 = vpack.c.b16 %v1022, %v1020
        %v1299 = vpack.c.b16 %v1023, %v1021
        %v1300 = vpack.c.b16 %v1026, %v1024
        %v1301 = vpack.c.b16 %v1027, %v1025
        %v1302 = vpack.c.b16 %v1030, %v1028
        %v1303 = vpack.c.b16 %v1031, %v1029
        %v1304 = vpack.c.b16 %v1034, %v1032
        %v1305 = vpack.c.b16 %v1035, %v1033
        %v1306 = vpack.c.b16 %v1038, %v1036
        %v1307 = vpack.c.b16 %v1039, %v1037
        %v1308 = vpack.c.b16 %v1042, %v1040
        %v1309 = vpack.c.b16 %v1043, %v1041
        %v1310 = vpack.c.b16 %v1046, %v1044
        %v1311 = vpack.c.b16 %v1047, %v1045
        %v1312 = vpack.c.b16 %v1050, %v1048
        %v1313 = vpack.c.b16 %v1051, %v1049
        %v1314 = vpack.c.b16 %v1054, %v1052
        %v1315 = vpack.c.b16 %v1055, %v1053
        %v1316 = vpack.c.b16 %v1058, %v1056
        %v1317 = vpack.c.b16 %v1059, %v1057
        %v1318 = vpack.c.b16 %v1062, %v1060
        %v1319 = vpack.c.b16 %v1063, %v1061
        %v1320 = vpack.c.b16 %v1066, %v1064
        %v1321 = vpack.c.b16 %v1067, %v1065
        %v1322 = vpack.c.b16 %v1070, %v1068
        %v1323 = vpack.c.b16 %v1071, %v1069
        %v1324 = vpack.c.b16 %v1074, %v1072
        %v1325 = vpack.c.b16 %v1075, %v1073
        %v1326 = vpack.c.b16 %v1078, %v1076
        %v1327 = vpack.c.b16 %v1079, %v1077
        %v1328 = vpack.c.b16 %v1082, %v1080
        %v1329 = vpack.c.b16 %v1083, %v1081
        %v1330 = vpack.c.b16 %v1086, %v1084
        %v1331 = vpack.c.b16 %v1087, %v1085
        %v1332 = vpack.c.b16 %v1090, %v1088
        %v1333 = vpack.c.b16 %v1091, %v1089
        %v1334 = vpack.c.b16 %v1094, %v1092
        %v1335 = vpack.c.b16 %v1095, %v1093
        %v1336 = vpack.c.b16 %v1098, %v1096
        %v1337 = vpack.c.b16 %v1099, %v1097
        %v1338 = vpack.c.b16 %v1102, %v1100
        %v1339 = vpack.c.b16 %v1103, %v1101
        %v1340 = vpack.c.b16 %v1106, %v1104
        %v1341 = vpack.c.b16 %v1107, %v1105
        %v1342 = vpack.c.b16 %v1110, %v1108
        %v1343 = vpack.c.b16 %v1111, %v1109
        %v1344 = vpack.c.b16 %v1114, %v1112
        %v1345 = vpack.c.b16 %v1115, %v1113
        %v1346 = vpack.c.b16 %v1118, %v1116
        %v1347 = vpack.c.b16 %v1119, %v1117
        %v1348 = vpack.c.b16 %v1122, %v1120
        %v1349 = vpack.c.b16 %v1123, %v1121
        %v1350 = vpack.c.b16 %v1126, %v1124
        %v1351 = vpack.c.b16 %v1127, %v1125
        %v1352 = vpack.c.b16 %v1130, %v1128
        %v1353 = vpack.c.b16 %v1131, %v1129
        %v1354 = vpack.c.b16 %v1134, %v1132
        %v1355 = vpack.c.b16 %v1135, %v1133
        %v1356 = vpack.c.b16 %v1138, %v1136
        %v1357 = vpack.c.b16 %v1139, %v1137
        %v1358 = vpack.c.b16 %v1142, %v1140
        %v1359 = vpack.c.b16 %v1143, %v1141
        %v1360 = vpack.c.b16 %v1146, %v1144
        %v1361 = vpack.c.b16 %v1147, %v1145
        %v1362 = vpack.c.b16 %v1150, %v1148
        %v1363 = vpack.c.b16 %v1151, %v1149
        %v1364 = vpack.c.b16 %v1154, %v1152
        %v1365 = vpack.c.b16 %v1155, %v1153
        %v1366 = vpack.c.b16 %v1158, %v1156
        %v1367 = vpack.c.b16 %v1159, %v1157
        %v1368 = vpack.c.b16 %v1162, %v1160
        %v1369 = vpack.c.b16 %v1163, %v1161
        %v1370 = vpack.c.b16 %v1166, %v1164
        %v1371 = vpack.c.b16 %v1167, %v1165
        %v1372 = vpack.c.b16 %v1170, %v1168
        %v1373 = vpack.c.b16 %v1171, %v1169
        %v1374 = vpack.c.b16 %v1174, %v1172
        %v1375 = vpack.c.b16 %v1175, %v1173
        %v1376 = vpack.c.b16 %v1178, %v1176
        %v1377 = vpack.c.b16 %v1179, %v1177
        %v1378 = vpack.c.b16 %v1182, %v1180
        %v1379 = vpack.c.b16 %v1183, %v1181
        %v1380 = vpack.c.b16 %v1186, %v1184
        %v1381 = vpack.c.b16 %v1187, %v1185
        %v1382 = vpack.c.b16 %v1190, %v1188
        %v1383 = vpack.c.b16 %v1191, %v1189
        %v1384 = vpack.c.b16 %v1194, %v1192
        %v1385 = vpack.c.b16 %v1195, %v1193
        %v1386 = vpack.c.b16 %v1198, %v1196
        %v1387 = vpack.c.b16 %v1199, %v1197
        %v1388 = vpack.c.b16 %v1202, %v1200
        %v1389 = vpack.c.b16 %v1203, %v1201
        %v1390 = vpack.c.b16 %v1206, %v1204
        %v1391 = vpack.c.b16 %v1207, %v1205
        %v1392 = vpack.c.b16 %v1210, %v1208
        %v1393 = vpack.c.b16 %v1211, %v1209
        %v1394 = vpack.c.b16 %v1214, %v1212
        %v1395 = vpack.c.b16 %v1215, %v1213
        %v1396 = vpack.c.b16 %v1218, %v1216
        %v1397 = vpack.c.b16 %v1219, %v1217
        %v1398 = vpack.c.b16 %v1222, %v1220
        %v1399 = vpack.c.b16 %v1223, %v1221
        %v1400 = vpack.c.b16 %v1226, %v1224
        %v1401 = vpack.c.b16 %v1227, %v1225
        %v1402 = vpack.c.b16 %v1230, %v1228
        %v1403 = vpack.c.b16 %v1231, %v1229
        %v1404 = vpack.c.b16 %v1234, %v1232
        %v1405 = vpack.c.b16 %v1235, %v1233
        %v1406 = vpack.c.b16 %v1238, %v1236
        %v1407 = vpack.c.b16 %v1239, %v1237
        %v1408 = vpack.c.b16 %v1242, %v1240
        %v1409 = vpack.c.b16 %v1243, %v1241
        %v1410 = vpack.c.b16 %v1246, %v1244
        %v1411 = vpack.c.b16 %v1247, %v1245
        %v1412 = vpack.c.b16 %v1250, %v1248
        %v1413 = vpack.c.b16 %v1251, %v1249
        %v1414 = vpack.c.b16 %v1254, %v1252
        %v1415 = vpack.c.b16 %v1255, %v1253
        %v1416 = vpack.c.b16 %v1258, %v1256
        %v1417 = vpack.c.b16 %v1259, %v1257
        %v1418 = vpack.c.b16 %v1262, %v1260
        %v1419 = vpack.c.b16 %v1263, %v1261
        %v1420 = vpack.c.b16 %v1266, %v1264
        %v1421 = vpack.c.b16 %v1267, %v1265
        %v1422 = vpack.c.b16 %v1270, %v1268
        %v1423 = vpack.c.b16 %v1271, %v1269
        %v1424 = vpack.c.b16 %v1274, %v1272
        %v1425 = vpack.c.b16 %v1275, %v1273
        %v1426 = vpack.c.b16 %v1278, %v1276
        %v1427 = vpack.c.b16 %v1279, %v1277
        %v1428 = vpack.c.b16 %v1282, %v1280
        %v1429 = vpack.c.b16 %v1283, %v1281
        %v1430 = vpack.c.b16 %v1286, %v1284
        %v1431 = vpack.c.b16 %v1287, %v1285
        %1576 = vmatprep.subr.bf16.mxu0 %v1303
        %1577 = vmatpush1.bf16.msra.mxu0 %v1302
        %1578 = vmatprep.subr.bf16.mxu0 %v1301
        %1579 = vmatpush1.bf16.msra.mxu0 %v1300
        %1580 = vmatprep.subr.bf16.mxu0 %v1299
        %1581 = vmatpush1.bf16.msra.mxu0 %v1298
        %1582 = vmatprep.subr.bf16.mxu0 %v1297
        %1583 = vmatpush1.bf16.msra.mxu0 %v1296
        %1584 = vmatprep.subr.bf16.mxu0 %v1295
        %1585 = vmatpush1.bf16.msra.mxu0 %v1294
        %1586 = vmatprep.subr.bf16.mxu0 %v1293
        %1587 = vmatpush1.bf16.msra.mxu0 %v1292
        %1588 = vmatprep.subr.bf16.mxu0 %v1291
        %1589 = vmatpush1.bf16.msra.mxu0 %v1290
        %1590 = vmatprep.subr.bf16.mxu0 %v1289
        %1591 = vmatpush1.bf16.msra.mxu0 %v1288
        %1592 = vmatprep.subr.bf16.mxu0 %v1319
        %1593 = vmatpush2.bf16.msra.mxu0 %v1318
        %1594 = vmatprep.subr.bf16.mxu0 %v1317
        %1595 = vmatpush2.bf16.msra.mxu0 %v1316
        %1596 = vmatprep.subr.bf16.mxu0 %v1315
        %1597 = vmatpush2.bf16.msra.mxu0 %v1314
        %1598 = vmatprep.subr.bf16.mxu0 %v1313
        %1599 = vmatpush2.bf16.msra.mxu0 %v1312
        %1600 = vmatprep.subr.bf16.mxu0 %v1311
        %1601 = vmatpush2.bf16.msra.mxu0 %v1310
        %1602 = vmatprep.subr.bf16.mxu0 %v1309
        %1603 = vmatpush2.bf16.msra.mxu0 %v1308
        %1604 = vmatprep.subr.bf16.mxu0 %v1307
        %1605 = vmatpush2.bf16.msra.mxu0 %v1306
        %1606 = vmatprep.subr.bf16.mxu0 %v1305
        %1607 = vmatpush2.bf16.msra.mxu0 %v1304
        %1608 = vmatprep.mubr.bf16.mxu0 %v571
        %1609 = vmatmul.mubr.bf16.gmra.mxu0 %v547
        %v1610 = vpop.f32.mrf.mxu0
        %v1611 = vadd.f32 %v849, %v1610
        %v1612 = vpop.f32.mrf.mxu0
        %v1613 = vadd.f32 %v853, %v1612
        %v1614 = vpop.f32.mrf.mxu0
        %v1615 = vadd.f32 %v849, %v1614
        %v1616 = vpop.f32.mrf.mxu0
        %v1617 = vadd.f32 %v853, %v1616
        %1618 = vmatprep.mubr.bf16.mxu0 %v572
        %1619 = vmatmul.mubr.bf16.gmra.mxu0 %v548
        %v1620 = vpop.f32.mrf.mxu0
        %v1621 = vadd.f32 %v849, %v1620
        %v1622 = vpop.f32.mrf.mxu0
        %v1623 = vadd.f32 %v853, %v1622
        %v1624 = vpop.f32.mrf.mxu0
        %v1625 = vadd.f32 %v849, %v1624
        %v1626 = vpop.f32.mrf.mxu0
        %v1627 = vadd.f32 %v853, %v1626
        %1628 = vmatprep.mubr.bf16.mxu0 %v573
        %1629 = vmatmul.mubr.bf16.gmra.mxu0 %v549
        %v1630 = vpop.f32.mrf.mxu0
        %v1631 = vadd.f32 %v849, %v1630
        %v1632 = vpop.f32.mrf.mxu0
        %v1633 = vadd.f32 %v853, %v1632
        %v1634 = vpop.f32.mrf.mxu0
        %v1635 = vadd.f32 %v849, %v1634
        %v1636 = vpop.f32.mrf.mxu0
        %v1637 = vadd.f32 %v853, %v1636
        %1638 = vmatprep.mubr.bf16.mxu0 %v574
        %1639 = vmatmul.mubr.bf16.gmra.mxu0 %v550
        %v1640 = vpop.f32.mrf.mxu0
        %v1641 = vadd.f32 %v849, %v1640
        %v1642 = vpop.f32.mrf.mxu0
        %v1643 = vadd.f32 %v853, %v1642
        %v1644 = vpop.f32.mrf.mxu0
        %v1645 = vadd.f32 %v849, %v1644
        %v1646 = vpop.f32.mrf.mxu0
        %v1647 = vadd.f32 %v853, %v1646
        %1648 = vmatprep.mubr.bf16.mxu0 %v575
        %1649 = vmatmul.mubr.bf16.gmra.mxu0 %v551
        %v1650 = vpop.f32.mrf.mxu0
        %v1651 = vadd.f32 %v849, %v1650
        %v1652 = vpop.f32.mrf.mxu0
        %v1653 = vadd.f32 %v853, %v1652
        %v1654 = vpop.f32.mrf.mxu0
        %v1655 = vadd.f32 %v849, %v1654
        %v1656 = vpop.f32.mrf.mxu0
        %v1657 = vadd.f32 %v853, %v1656
        %1658 = vmatprep.mubr.bf16.mxu0 %v576
        %1659 = vmatmul.mubr.bf16.gmra.mxu0 %v552
        %v1660 = vpop.f32.mrf.mxu0
        %v1661 = vadd.f32 %v849, %v1660
        %v1662 = vpop.f32.mrf.mxu0
        %v1663 = vadd.f32 %v853, %v1662
        %v1664 = vpop.f32.mrf.mxu0
        %v1665 = vadd.f32 %v849, %v1664
        %v1666 = vpop.f32.mrf.mxu0
        %v1667 = vadd.f32 %v853, %v1666
        %1668 = vmatprep.mubr.bf16.mxu0 %v577
        %1669 = vmatmul.mubr.bf16.gmra.mxu0 %v553
        %v1670 = vpop.f32.mrf.mxu0
        %v1671 = vadd.f32 %v849, %v1670
        %v1672 = vpop.f32.mrf.mxu0
        %v1673 = vadd.f32 %v853, %v1672
        %v1674 = vpop.f32.mrf.mxu0
        %v1675 = vadd.f32 %v849, %v1674
        %v1676 = vpop.f32.mrf.mxu0
        %v1677 = vadd.f32 %v853, %v1676
        %1678 = vmatprep.mubr.bf16.mxu0 %v578
        %1679 = vmatmul.mubr.bf16.gmra.mxu0 %v554
        %v1680 = vpop.f32.mrf.mxu0
        %v1681 = vadd.f32 %v849, %v1680
        %v1682 = vpop.f32.mrf.mxu0
        %v1683 = vadd.f32 %v853, %v1682
        %v1684 = vpop.f32.mrf.mxu0
        %v1685 = vadd.f32 %v849, %v1684
        %v1686 = vpop.f32.mrf.mxu0
        %v1687 = vadd.f32 %v853, %v1686
        %1688 = vmatprep.mubr.bf16.mxu0 %v579
        %1689 = vmatmul.mubr.bf16.gmra.mxu0 %v555
        %v1690 = vpop.f32.mrf.mxu0
        %v1691 = vadd.f32 %v849, %v1690
        %v1692 = vpop.f32.mrf.mxu0
        %v1693 = vadd.f32 %v853, %v1692
        %v1694 = vpop.f32.mrf.mxu0
        %v1695 = vadd.f32 %v849, %v1694
        %v1696 = vpop.f32.mrf.mxu0
        %v1697 = vadd.f32 %v853, %v1696
        %1698 = vmatprep.mubr.bf16.mxu0 %v580
        %1699 = vmatmul.mubr.bf16.gmra.mxu0 %v556
        %v1700 = vpop.f32.mrf.mxu0
        %v1701 = vadd.f32 %v849, %v1700
        %v1702 = vpop.f32.mrf.mxu0
        %v1703 = vadd.f32 %v853, %v1702
        %v1704 = vpop.f32.mrf.mxu0
        %v1705 = vadd.f32 %v849, %v1704
        %v1706 = vpop.f32.mrf.mxu0
        %v1707 = vadd.f32 %v853, %v1706
        %1708 = vmatprep.mubr.bf16.mxu0 %v581
        %1709 = vmatmul.mubr.bf16.gmra.mxu0 %v557
        %v1710 = vpop.f32.mrf.mxu0
        %v1711 = vadd.f32 %v849, %v1710
        %v1712 = vpop.f32.mrf.mxu0
        %v1713 = vadd.f32 %v853, %v1712
        %v1714 = vpop.f32.mrf.mxu0
        %v1715 = vadd.f32 %v849, %v1714
        %v1716 = vpop.f32.mrf.mxu0
        %v1717 = vadd.f32 %v853, %v1716
        %1718 = vmatprep.mubr.bf16.mxu0 %v582
        %1719 = vmatmul.mubr.bf16.gmra.mxu0 %v558
        %v1720 = vpop.f32.mrf.mxu0
        %v1721 = vadd.f32 %v849, %v1720
        %v1722 = vpop.f32.mrf.mxu0
        %v1723 = vadd.f32 %v853, %v1722
        %v1724 = vpop.f32.mrf.mxu0
        %v1725 = vadd.f32 %v849, %v1724
        %v1726 = vpop.f32.mrf.mxu0
        %v1727 = vadd.f32 %v853, %v1726
        %1728 = vmatprep.mubr.bf16.mxu0 %v583
        %1729 = vmatmul.mubr.bf16.gmra.mxu0 %v559
        %v1730 = vpop.f32.mrf.mxu0
        %v1731 = vadd.f32 %v849, %v1730
        %v1732 = vpop.f32.mrf.mxu0
        %v1733 = vadd.f32 %v853, %v1732
        %v1734 = vpop.f32.mrf.mxu0
        %v1735 = vadd.f32 %v849, %v1734
        %v1736 = vpop.f32.mrf.mxu0
        %v1737 = vadd.f32 %v853, %v1736
        %1738 = vmatprep.mubr.bf16.mxu0 %v584
        %1739 = vmatmul.mubr.bf16.gmra.mxu0 %v560
        %v1740 = vpop.f32.mrf.mxu0
        %v1741 = vadd.f32 %v849, %v1740
        %v1742 = vpop.f32.mrf.mxu0
        %v1743 = vadd.f32 %v853, %v1742
        %v1744 = vpop.f32.mrf.mxu0
        %v1745 = vadd.f32 %v849, %v1744
        %v1746 = vpop.f32.mrf.mxu0
        %v1747 = vadd.f32 %v853, %v1746
        %1748 = vmatprep.mubr.bf16.mxu0 %v585
        %1749 = vmatmul.mubr.bf16.gmra.mxu0 %v561
        %v1750 = vpop.f32.mrf.mxu0
        %v1751 = vadd.f32 %v849, %v1750
        %v1752 = vpop.f32.mrf.mxu0
        %v1753 = vadd.f32 %v853, %v1752
        %v1754 = vpop.f32.mrf.mxu0
        %v1755 = vadd.f32 %v849, %v1754
        %v1756 = vpop.f32.mrf.mxu0
        %v1757 = vadd.f32 %v853, %v1756
        %1758 = vmatprep.mubr.bf16.mxu0 %v586
        %1759 = vmatmul.mubr.bf16.gmra.mxu0 %v562
        %v1760 = vpop.f32.mrf.mxu0
        %v1761 = vadd.f32 %v849, %v1760
        %v1762 = vpop.f32.mrf.mxu0
        %v1763 = vadd.f32 %v853, %v1762
        %v1764 = vpop.f32.mrf.mxu0
        %v1765 = vadd.f32 %v849, %v1764
        %v1766 = vpop.f32.mrf.mxu0
        %v1767 = vadd.f32 %v853, %v1766
        %1768 = vmatprep.mubr.bf16.mxu0 %v587
        %1769 = vmatmul.mubr.bf16.gmra.mxu0 %v563
        %v1770 = vpop.f32.mrf.mxu0
        %v1771 = vadd.f32 %v849, %v1770
        %v1772 = vpop.f32.mrf.mxu0
        %v1773 = vadd.f32 %v853, %v1772
        %v1774 = vpop.f32.mrf.mxu0
        %v1775 = vadd.f32 %v849, %v1774
        %v1776 = vpop.f32.mrf.mxu0
        %v1777 = vadd.f32 %v853, %v1776
        %1778 = vmatprep.mubr.bf16.mxu0 %v588
        %1779 = vmatmul.mubr.bf16.gmra.mxu0 %v564
        %v1780 = vpop.f32.mrf.mxu0
        %v1781 = vadd.f32 %v849, %v1780
        %v1782 = vpop.f32.mrf.mxu0
        %v1783 = vadd.f32 %v853, %v1782
        %v1784 = vpop.f32.mrf.mxu0
        %v1785 = vadd.f32 %v849, %v1784
        %v1786 = vpop.f32.mrf.mxu0
        %v1787 = vadd.f32 %v853, %v1786
        %1788 = vmatprep.mubr.bf16.mxu0 %v589
        %1789 = vmatmul.mubr.bf16.gmra.mxu0 %v565
        %v1790 = vpop.f32.mrf.mxu0
        %v1791 = vadd.f32 %v849, %v1790
        %v1792 = vpop.f32.mrf.mxu0
        %v1793 = vadd.f32 %v853, %v1792
        %v1794 = vpop.f32.mrf.mxu0
        %v1795 = vadd.f32 %v849, %v1794
        %v1796 = vpop.f32.mrf.mxu0
        %v1797 = vadd.f32 %v853, %v1796
        %1798 = vmatprep.mubr.bf16.mxu0 %v590
        %1799 = vmatmul.mubr.bf16.gmra.mxu0 %v566
        %v1800 = vpop.f32.mrf.mxu0
        %v1801 = vadd.f32 %v849, %v1800
        %v1802 = vpop.f32.mrf.mxu0
        %v1803 = vadd.f32 %v853, %v1802
        %v1804 = vpop.f32.mrf.mxu0
        %v1805 = vadd.f32 %v849, %v1804
        %v1806 = vpop.f32.mrf.mxu0
        %v1807 = vadd.f32 %v853, %v1806
        %1808 = vmatprep.mubr.bf16.mxu0 %v591
        %1809 = vmatmul.mubr.bf16.gmra.mxu0 %v567
        %v1810 = vpop.f32.mrf.mxu0
        %v1811 = vadd.f32 %v849, %v1810
        %v1812 = vpop.f32.mrf.mxu0
        %v1813 = vadd.f32 %v853, %v1812
        %v1814 = vpop.f32.mrf.mxu0
        %v1815 = vadd.f32 %v849, %v1814
        %v1816 = vpop.f32.mrf.mxu0
        %v1817 = vadd.f32 %v853, %v1816
        %1818 = vmatprep.mubr.bf16.mxu0 %v592
        %1819 = vmatmul.mubr.bf16.gmra.mxu0 %v568
        %v1820 = vpop.f32.mrf.mxu0
        %v1821 = vadd.f32 %v849, %v1820
        %v1822 = vpop.f32.mrf.mxu0
        %v1823 = vadd.f32 %v853, %v1822
        %v1824 = vpop.f32.mrf.mxu0
        %v1825 = vadd.f32 %v849, %v1824
        %v1826 = vpop.f32.mrf.mxu0
        %v1827 = vadd.f32 %v853, %v1826
        %1828 = vmatprep.mubr.bf16.mxu0 %v593
        %1829 = vmatmul.mubr.bf16.gmra.mxu0 %v569
        %v1830 = vpop.f32.mrf.mxu0
        %v1831 = vadd.f32 %v849, %v1830
        %v1832 = vpop.f32.mrf.mxu0
        %v1833 = vadd.f32 %v853, %v1832
        %v1834 = vpop.f32.mrf.mxu0
        %v1835 = vadd.f32 %v849, %v1834
        %v1836 = vpop.f32.mrf.mxu0
        %v1837 = vadd.f32 %v853, %v1836
        %1838 = vmatprep.mubr.bf16.mxu0 %v594
        %1839 = vmatmul.mubr.bf16.gmra.mxu0 %v570
        %v1840 = vpop.f32.mrf.mxu0
        %v1841 = vadd.f32 %v849, %v1840
        %v1842 = vpop.f32.mrf.mxu0
        %v1843 = vadd.f32 %v853, %v1842
        %v1844 = vpop.f32.mrf.mxu0
        %v1845 = vadd.f32 %v849, %v1844
        %v1846 = vpop.f32.mrf.mxu0
        %v1847 = vadd.f32 %v853, %v1846
        %1848 = vdwg.mxu0
        %1849 = vmatprep.subr.bf16.mxu0 %v1335
        %1850 = vmatpush1.bf16.msra.mxu0 %v1334
        %1851 = vmatprep.subr.bf16.mxu0 %v1333
        %1852 = vmatpush1.bf16.msra.mxu0 %v1332
        %1853 = vmatprep.subr.bf16.mxu0 %v1331
        %1854 = vmatpush1.bf16.msra.mxu0 %v1330
        %1855 = vmatprep.subr.bf16.mxu0 %v1329
        %1856 = vmatpush1.bf16.msra.mxu0 %v1328
        %1857 = vmatprep.subr.bf16.mxu0 %v1327
        %1858 = vmatpush1.bf16.msra.mxu0 %v1326
        %1859 = vmatprep.subr.bf16.mxu0 %v1325
        %1860 = vmatpush1.bf16.msra.mxu0 %v1324
        %1861 = vmatprep.subr.bf16.mxu0 %v1323
        %1862 = vmatpush1.bf16.msra.mxu0 %v1322
        %1863 = vmatprep.subr.bf16.mxu0 %v1321
        %1864 = vmatpush1.bf16.msra.mxu0 %v1320
        %1865 = vmatprep.subr.bf16.mxu0 %v1351
        %1866 = vmatpush2.bf16.msra.mxu0 %v1350
        %1867 = vmatprep.subr.bf16.mxu0 %v1349
        %1868 = vmatpush2.bf16.msra.mxu0 %v1348
        %1869 = vmatprep.subr.bf16.mxu0 %v1347
        %1870 = vmatpush2.bf16.msra.mxu0 %v1346
        %1871 = vmatprep.subr.bf16.mxu0 %v1345
        %1872 = vmatpush2.bf16.msra.mxu0 %v1344
        %1873 = vmatprep.subr.bf16.mxu0 %v1343
        %1874 = vmatpush2.bf16.msra.mxu0 %v1342
        %1875 = vmatprep.subr.bf16.mxu0 %v1341
        %1876 = vmatpush2.bf16.msra.mxu0 %v1340
        %1877 = vmatprep.subr.bf16.mxu0 %v1339
        %1878 = vmatpush2.bf16.msra.mxu0 %v1338
        %1879 = vmatprep.subr.bf16.mxu0 %v1337
        %1880 = vmatpush2.bf16.msra.mxu0 %v1336
        %1881 = vmatprep.mubr.bf16.mxu0 %v619
        %1882 = vmatmul.mubr.bf16.gmra.mxu0 %v595
        %v1883 = vpop.f32.mrf.mxu0
        %v1884 = vadd.f32 %v1611, %v1883
        %v1885 = vpop.f32.mrf.mxu0
        %v1886 = vadd.f32 %v1613, %v1885
        %v1887 = vpop.f32.mrf.mxu0
        %v1888 = vadd.f32 %v1615, %v1887
        %v1889 = vpop.f32.mrf.mxu0
        %v1890 = vadd.f32 %v1617, %v1889
        %1891 = vmatprep.mubr.bf16.mxu0 %v620
        %1892 = vmatmul.mubr.bf16.gmra.mxu0 %v596
        %v1893 = vpop.f32.mrf.mxu0
        %v1894 = vadd.f32 %v1621, %v1893
        %v1895 = vpop.f32.mrf.mxu0
        %v1896 = vadd.f32 %v1623, %v1895
        %v1897 = vpop.f32.mrf.mxu0
        %v1898 = vadd.f32 %v1625, %v1897
        %v1899 = vpop.f32.mrf.mxu0
        %v1900 = vadd.f32 %v1627, %v1899
        %1901 = vmatprep.mubr.bf16.mxu0 %v621
        %1902 = vmatmul.mubr.bf16.gmra.mxu0 %v597
        %v1903 = vpop.f32.mrf.mxu0
        %v1904 = vadd.f32 %v1631, %v1903
        %v1905 = vpop.f32.mrf.mxu0
        %v1906 = vadd.f32 %v1633, %v1905
        %v1907 = vpop.f32.mrf.mxu0
        %v1908 = vadd.f32 %v1635, %v1907
        %v1909 = vpop.f32.mrf.mxu0
        %v1910 = vadd.f32 %v1637, %v1909
        %1911 = vmatprep.mubr.bf16.mxu0 %v622
        %1912 = vmatmul.mubr.bf16.gmra.mxu0 %v598
        %v1913 = vpop.f32.mrf.mxu0
        %v1914 = vadd.f32 %v1641, %v1913
        %v1915 = vpop.f32.mrf.mxu0
        %v1916 = vadd.f32 %v1643, %v1915
        %v1917 = vpop.f32.mrf.mxu0
        %v1918 = vadd.f32 %v1645, %v1917
        %v1919 = vpop.f32.mrf.mxu0
        %v1920 = vadd.f32 %v1647, %v1919
        %1921 = vmatprep.mubr.bf16.mxu0 %v623
        %1922 = vmatmul.mubr.bf16.gmra.mxu0 %v599
        %v1923 = vpop.f32.mrf.mxu0
        %v1924 = vadd.f32 %v1651, %v1923
        %v1925 = vpop.f32.mrf.mxu0
        %v1926 = vadd.f32 %v1653, %v1925
        %v1927 = vpop.f32.mrf.mxu0
        %v1928 = vadd.f32 %v1655, %v1927
        %v1929 = vpop.f32.mrf.mxu0
        %v1930 = vadd.f32 %v1657, %v1929
        %1931 = vmatprep.mubr.bf16.mxu0 %v624
        %1932 = vmatmul.mubr.bf16.gmra.mxu0 %v600
        %v1933 = vpop.f32.mrf.mxu0
        %v1934 = vadd.f32 %v1661, %v1933
        %v1935 = vpop.f32.mrf.mxu0
        %v1936 = vadd.f32 %v1663, %v1935
        %v1937 = vpop.f32.mrf.mxu0
        %v1938 = vadd.f32 %v1665, %v1937
        %v1939 = vpop.f32.mrf.mxu0
        %v1940 = vadd.f32 %v1667, %v1939
        %1941 = vmatprep.mubr.bf16.mxu0 %v625
        %1942 = vmatmul.mubr.bf16.gmra.mxu0 %v601
        %v1943 = vpop.f32.mrf.mxu0
        %v1944 = vadd.f32 %v1671, %v1943
        %v1945 = vpop.f32.mrf.mxu0
        %v1946 = vadd.f32 %v1673, %v1945
        %v1947 = vpop.f32.mrf.mxu0
        %v1948 = vadd.f32 %v1675, %v1947
        %v1949 = vpop.f32.mrf.mxu0
        %v1950 = vadd.f32 %v1677, %v1949
        %1951 = vmatprep.mubr.bf16.mxu0 %v626
        %1952 = vmatmul.mubr.bf16.gmra.mxu0 %v602
        %v1953 = vpop.f32.mrf.mxu0
        %v1954 = vadd.f32 %v1681, %v1953
        %v1955 = vpop.f32.mrf.mxu0
        %v1956 = vadd.f32 %v1683, %v1955
        %v1957 = vpop.f32.mrf.mxu0
        %v1958 = vadd.f32 %v1685, %v1957
        %v1959 = vpop.f32.mrf.mxu0
        %v1960 = vadd.f32 %v1687, %v1959
        %1961 = vmatprep.mubr.bf16.mxu0 %v627
        %1962 = vmatmul.mubr.bf16.gmra.mxu0 %v603
        %v1963 = vpop.f32.mrf.mxu0
        %v1964 = vadd.f32 %v1691, %v1963
        %v1965 = vpop.f32.mrf.mxu0
        %v1966 = vadd.f32 %v1693, %v1965
        %v1967 = vpop.f32.mrf.mxu0
        %v1968 = vadd.f32 %v1695, %v1967
        %v1969 = vpop.f32.mrf.mxu0
        %v1970 = vadd.f32 %v1697, %v1969
        %1971 = vmatprep.mubr.bf16.mxu0 %v628
        %1972 = vmatmul.mubr.bf16.gmra.mxu0 %v604
        %v1973 = vpop.f32.mrf.mxu0
        %v1974 = vadd.f32 %v1701, %v1973
        %v1975 = vpop.f32.mrf.mxu0
        %v1976 = vadd.f32 %v1703, %v1975
        %v1977 = vpop.f32.mrf.mxu0
        %v1978 = vadd.f32 %v1705, %v1977
        %v1979 = vpop.f32.mrf.mxu0
        %v1980 = vadd.f32 %v1707, %v1979
        %1981 = vmatprep.mubr.bf16.mxu0 %v629
        %1982 = vmatmul.mubr.bf16.gmra.mxu0 %v605
        %v1983 = vpop.f32.mrf.mxu0
        %v1984 = vadd.f32 %v1711, %v1983
        %v1985 = vpop.f32.mrf.mxu0
        %v1986 = vadd.f32 %v1713, %v1985
        %v1987 = vpop.f32.mrf.mxu0
        %v1988 = vadd.f32 %v1715, %v1987
        %v1989 = vpop.f32.mrf.mxu0
        %v1990 = vadd.f32 %v1717, %v1989
        %1991 = vmatprep.mubr.bf16.mxu0 %v630
        %1992 = vmatmul.mubr.bf16.gmra.mxu0 %v606
        %v1993 = vpop.f32.mrf.mxu0
        %v1994 = vadd.f32 %v1721, %v1993
        %v1995 = vpop.f32.mrf.mxu0
        %v1996 = vadd.f32 %v1723, %v1995
        %v1997 = vpop.f32.mrf.mxu0
        %v1998 = vadd.f32 %v1725, %v1997
        %v1999 = vpop.f32.mrf.mxu0
        %v2000 = vadd.f32 %v1727, %v1999
        %2001 = vmatprep.mubr.bf16.mxu0 %v631
        %2002 = vmatmul.mubr.bf16.gmra.mxu0 %v607
        %v2003 = vpop.f32.mrf.mxu0
        %v2004 = vadd.f32 %v1731, %v2003
        %v2005 = vpop.f32.mrf.mxu0
        %v2006 = vadd.f32 %v1733, %v2005
        %v2007 = vpop.f32.mrf.mxu0
        %v2008 = vadd.f32 %v1735, %v2007
        %v2009 = vpop.f32.mrf.mxu0
        %v2010 = vadd.f32 %v1737, %v2009
        %2011 = vmatprep.mubr.bf16.mxu0 %v632
        %2012 = vmatmul.mubr.bf16.gmra.mxu0 %v608
        %v2013 = vpop.f32.mrf.mxu0
        %v2014 = vadd.f32 %v1741, %v2013
        %v2015 = vpop.f32.mrf.mxu0
        %v2016 = vadd.f32 %v1743, %v2015
        %v2017 = vpop.f32.mrf.mxu0
        %v2018 = vadd.f32 %v1745, %v2017
        %v2019 = vpop.f32.mrf.mxu0
        %v2020 = vadd.f32 %v1747, %v2019
        %2021 = vmatprep.mubr.bf16.mxu0 %v633
        %2022 = vmatmul.mubr.bf16.gmra.mxu0 %v609
        %v2023 = vpop.f32.mrf.mxu0
        %v2024 = vadd.f32 %v1751, %v2023
        %v2025 = vpop.f32.mrf.mxu0
        %v2026 = vadd.f32 %v1753, %v2025
        %v2027 = vpop.f32.mrf.mxu0
        %v2028 = vadd.f32 %v1755, %v2027
        %v2029 = vpop.f32.mrf.mxu0
        %v2030 = vadd.f32 %v1757, %v2029
        %2031 = vmatprep.mubr.bf16.mxu0 %v634
        %2032 = vmatmul.mubr.bf16.gmra.mxu0 %v610
        %v2033 = vpop.f32.mrf.mxu0
        %v2034 = vadd.f32 %v1761, %v2033
        %v2035 = vpop.f32.mrf.mxu0
        %v2036 = vadd.f32 %v1763, %v2035
        %v2037 = vpop.f32.mrf.mxu0
        %v2038 = vadd.f32 %v1765, %v2037
        %v2039 = vpop.f32.mrf.mxu0
        %v2040 = vadd.f32 %v1767, %v2039
        %2041 = vmatprep.mubr.bf16.mxu0 %v635
        %2042 = vmatmul.mubr.bf16.gmra.mxu0 %v611
        %v2043 = vpop.f32.mrf.mxu0
        %v2044 = vadd.f32 %v1771, %v2043
        %v2045 = vpop.f32.mrf.mxu0
        %v2046 = vadd.f32 %v1773, %v2045
        %v2047 = vpop.f32.mrf.mxu0
        %v2048 = vadd.f32 %v1775, %v2047
        %v2049 = vpop.f32.mrf.mxu0
        %v2050 = vadd.f32 %v1777, %v2049
        %2051 = vmatprep.mubr.bf16.mxu0 %v636
        %2052 = vmatmul.mubr.bf16.gmra.mxu0 %v612
        %v2053 = vpop.f32.mrf.mxu0
        %v2054 = vadd.f32 %v1781, %v2053
        %v2055 = vpop.f32.mrf.mxu0
        %v2056 = vadd.f32 %v1783, %v2055
        %v2057 = vpop.f32.mrf.mxu0
        %v2058 = vadd.f32 %v1785, %v2057
        %v2059 = vpop.f32.mrf.mxu0
        %v2060 = vadd.f32 %v1787, %v2059
        %2061 = vmatprep.mubr.bf16.mxu0 %v637
        %2062 = vmatmul.mubr.bf16.gmra.mxu0 %v613
        %v2063 = vpop.f32.mrf.mxu0
        %v2064 = vadd.f32 %v1791, %v2063
        %v2065 = vpop.f32.mrf.mxu0
        %v2066 = vadd.f32 %v1793, %v2065
        %v2067 = vpop.f32.mrf.mxu0
        %v2068 = vadd.f32 %v1795, %v2067
        %v2069 = vpop.f32.mrf.mxu0
        %v2070 = vadd.f32 %v1797, %v2069
        %2071 = vmatprep.mubr.bf16.mxu0 %v638
        %2072 = vmatmul.mubr.bf16.gmra.mxu0 %v614
        %v2073 = vpop.f32.mrf.mxu0
        %v2074 = vadd.f32 %v1801, %v2073
        %v2075 = vpop.f32.mrf.mxu0
        %v2076 = vadd.f32 %v1803, %v2075
        %v2077 = vpop.f32.mrf.mxu0
        %v2078 = vadd.f32 %v1805, %v2077
        %v2079 = vpop.f32.mrf.mxu0
        %v2080 = vadd.f32 %v1807, %v2079
        %2081 = vmatprep.mubr.bf16.mxu0 %v639
        %2082 = vmatmul.mubr.bf16.gmra.mxu0 %v615
        %v2083 = vpop.f32.mrf.mxu0
        %v2084 = vadd.f32 %v1811, %v2083
        %v2085 = vpop.f32.mrf.mxu0
        %v2086 = vadd.f32 %v1813, %v2085
        %v2087 = vpop.f32.mrf.mxu0
        %v2088 = vadd.f32 %v1815, %v2087
        %v2089 = vpop.f32.mrf.mxu0
        %v2090 = vadd.f32 %v1817, %v2089
        %2091 = vmatprep.mubr.bf16.mxu0 %v640
        %2092 = vmatmul.mubr.bf16.gmra.mxu0 %v616
        %v2093 = vpop.f32.mrf.mxu0
        %v2094 = vadd.f32 %v1821, %v2093
        %v2095 = vpop.f32.mrf.mxu0
        %v2096 = vadd.f32 %v1823, %v2095
        %v2097 = vpop.f32.mrf.mxu0
        %v2098 = vadd.f32 %v1825, %v2097
        %v2099 = vpop.f32.mrf.mxu0
        %v2100 = vadd.f32 %v1827, %v2099
        %2101 = vmatprep.mubr.bf16.mxu0 %v641
        %2102 = vmatmul.mubr.bf16.gmra.mxu0 %v617
        %v2103 = vpop.f32.mrf.mxu0
        %v2104 = vadd.f32 %v1831, %v2103
        %v2105 = vpop.f32.mrf.mxu0
        %v2106 = vadd.f32 %v1833, %v2105
        %v2107 = vpop.f32.mrf.mxu0
        %v2108 = vadd.f32 %v1835, %v2107
        %v2109 = vpop.f32.mrf.mxu0
        %v2110 = vadd.f32 %v1837, %v2109
        %2111 = vmatprep.mubr.bf16.mxu0 %v642
        %2112 = vmatmul.mubr.bf16.gmra.mxu0 %v618
        %v2113 = vpop.f32.mrf.mxu0
        %v2114 = vadd.f32 %v1841, %v2113
        %v2115 = vpop.f32.mrf.mxu0
        %v2116 = vadd.f32 %v1843, %v2115
        %v2117 = vpop.f32.mrf.mxu0
        %v2118 = vadd.f32 %v1845, %v2117
        %v2119 = vpop.f32.mrf.mxu0
        %v2120 = vadd.f32 %v1847, %v2119
        %2121 = vdwg.mxu0
        %2122 = vmatprep.subr.bf16.mxu0 %v1367
        %2123 = vmatpush1.bf16.msra.mxu0 %v1366
        %2124 = vmatprep.subr.bf16.mxu0 %v1365
        %2125 = vmatpush1.bf16.msra.mxu0 %v1364
        %2126 = vmatprep.subr.bf16.mxu0 %v1363
        %2127 = vmatpush1.bf16.msra.mxu0 %v1362
        %2128 = vmatprep.subr.bf16.mxu0 %v1361
        %2129 = vmatpush1.bf16.msra.mxu0 %v1360
        %2130 = vmatprep.subr.bf16.mxu0 %v1359
        %2131 = vmatpush1.bf16.msra.mxu0 %v1358
        %2132 = vmatprep.subr.bf16.mxu0 %v1357
        %2133 = vmatpush1.bf16.msra.mxu0 %v1356
        %2134 = vmatprep.subr.bf16.mxu0 %v1355
        %2135 = vmatpush1.bf16.msra.mxu0 %v1354
        %2136 = vmatprep.subr.bf16.mxu0 %v1353
        %2137 = vmatpush1.bf16.msra.mxu0 %v1352
        %2138 = vmatprep.subr.bf16.mxu0 %v1383
        %2139 = vmatpush2.bf16.msra.mxu0 %v1382
        %2140 = vmatprep.subr.bf16.mxu0 %v1381
        %2141 = vmatpush2.bf16.msra.mxu0 %v1380
        %2142 = vmatprep.subr.bf16.mxu0 %v1379
        %2143 = vmatpush2.bf16.msra.mxu0 %v1378
        %2144 = vmatprep.subr.bf16.mxu0 %v1377
        %2145 = vmatpush2.bf16.msra.mxu0 %v1376
        %2146 = vmatprep.subr.bf16.mxu0 %v1375
        %2147 = vmatpush2.bf16.msra.mxu0 %v1374
        %2148 = vmatprep.subr.bf16.mxu0 %v1373
        %2149 = vmatpush2.bf16.msra.mxu0 %v1372
        %2150 = vmatprep.subr.bf16.mxu0 %v1371
        %2151 = vmatpush2.bf16.msra.mxu0 %v1370
        %2152 = vmatprep.subr.bf16.mxu0 %v1369
        %2153 = vmatpush2.bf16.msra.mxu0 %v1368
        %2154 = vmatprep.mubr.bf16.mxu0 %v667
        %2155 = vmatmul.mubr.bf16.gmra.mxu0 %v643
        %v2156 = vpop.f32.mrf.mxu0
        %v2157 = vadd.f32 %v1884, %v2156
        %v2158 = vpop.f32.mrf.mxu0
        %v2159 = vadd.f32 %v1886, %v2158
        %v2160 = vpop.f32.mrf.mxu0
        %v2161 = vadd.f32 %v1888, %v2160
        %v2162 = vpop.f32.mrf.mxu0
        %v2163 = vadd.f32 %v1890, %v2162
        %2164 = vmatprep.mubr.bf16.mxu0 %v668
        %2165 = vmatmul.mubr.bf16.gmra.mxu0 %v644
        %v2166 = vpop.f32.mrf.mxu0
        %v2167 = vadd.f32 %v1894, %v2166
        %v2168 = vpop.f32.mrf.mxu0
        %v2169 = vadd.f32 %v1896, %v2168
        %v2170 = vpop.f32.mrf.mxu0
        %v2171 = vadd.f32 %v1898, %v2170
        %v2172 = vpop.f32.mrf.mxu0
        %v2173 = vadd.f32 %v1900, %v2172
        %2174 = vmatprep.mubr.bf16.mxu0 %v669
        %2175 = vmatmul.mubr.bf16.gmra.mxu0 %v645
        %v2176 = vpop.f32.mrf.mxu0
        %v2177 = vadd.f32 %v1904, %v2176
        %v2178 = vpop.f32.mrf.mxu0
        %v2179 = vadd.f32 %v1906, %v2178
        %v2180 = vpop.f32.mrf.mxu0
        %v2181 = vadd.f32 %v1908, %v2180
        %v2182 = vpop.f32.mrf.mxu0
        %v2183 = vadd.f32 %v1910, %v2182
        %2184 = vmatprep.mubr.bf16.mxu0 %v670
        %2185 = vmatmul.mubr.bf16.gmra.mxu0 %v646
        %v2186 = vpop.f32.mrf.mxu0
        %v2187 = vadd.f32 %v1914, %v2186
        %v2188 = vpop.f32.mrf.mxu0
        %v2189 = vadd.f32 %v1916, %v2188
        %v2190 = vpop.f32.mrf.mxu0
        %v2191 = vadd.f32 %v1918, %v2190
        %v2192 = vpop.f32.mrf.mxu0
        %v2193 = vadd.f32 %v1920, %v2192
        %2194 = vmatprep.mubr.bf16.mxu0 %v671
        %2195 = vmatmul.mubr.bf16.gmra.mxu0 %v647
        %v2196 = vpop.f32.mrf.mxu0
        %v2197 = vadd.f32 %v1924, %v2196
        %v2198 = vpop.f32.mrf.mxu0
        %v2199 = vadd.f32 %v1926, %v2198
        %v2200 = vpop.f32.mrf.mxu0
        %v2201 = vadd.f32 %v1928, %v2200
        %v2202 = vpop.f32.mrf.mxu0
        %v2203 = vadd.f32 %v1930, %v2202
        %2204 = vmatprep.mubr.bf16.mxu0 %v672
        %2205 = vmatmul.mubr.bf16.gmra.mxu0 %v648
        %v2206 = vpop.f32.mrf.mxu0
        %v2207 = vadd.f32 %v1934, %v2206
        %v2208 = vpop.f32.mrf.mxu0
        %v2209 = vadd.f32 %v1936, %v2208
        %v2210 = vpop.f32.mrf.mxu0
        %v2211 = vadd.f32 %v1938, %v2210
        %v2212 = vpop.f32.mrf.mxu0
        %v2213 = vadd.f32 %v1940, %v2212
        %2214 = vmatprep.mubr.bf16.mxu0 %v673
        %2215 = vmatmul.mubr.bf16.gmra.mxu0 %v649
        %v2216 = vpop.f32.mrf.mxu0
        %v2217 = vadd.f32 %v1944, %v2216
        %v2218 = vpop.f32.mrf.mxu0
        %v2219 = vadd.f32 %v1946, %v2218
        %v2220 = vpop.f32.mrf.mxu0
        %v2221 = vadd.f32 %v1948, %v2220
        %v2222 = vpop.f32.mrf.mxu0
        %v2223 = vadd.f32 %v1950, %v2222
        %2224 = vmatprep.mubr.bf16.mxu0 %v674
        %2225 = vmatmul.mubr.bf16.gmra.mxu0 %v650
        %v2226 = vpop.f32.mrf.mxu0
        %v2227 = vadd.f32 %v1954, %v2226
        %v2228 = vpop.f32.mrf.mxu0
        %v2229 = vadd.f32 %v1956, %v2228
        %v2230 = vpop.f32.mrf.mxu0
        %v2231 = vadd.f32 %v1958, %v2230
        %v2232 = vpop.f32.mrf.mxu0
        %v2233 = vadd.f32 %v1960, %v2232
        %2234 = vmatprep.mubr.bf16.mxu0 %v675
        %2235 = vmatmul.mubr.bf16.gmra.mxu0 %v651
        %v2236 = vpop.f32.mrf.mxu0
        %v2237 = vadd.f32 %v1964, %v2236
        %v2238 = vpop.f32.mrf.mxu0
        %v2239 = vadd.f32 %v1966, %v2238
        %v2240 = vpop.f32.mrf.mxu0
        %v2241 = vadd.f32 %v1968, %v2240
        %v2242 = vpop.f32.mrf.mxu0
        %v2243 = vadd.f32 %v1970, %v2242
        %2244 = vmatprep.mubr.bf16.mxu0 %v676
        %2245 = vmatmul.mubr.bf16.gmra.mxu0 %v652
        %v2246 = vpop.f32.mrf.mxu0
        %v2247 = vadd.f32 %v1974, %v2246
        %v2248 = vpop.f32.mrf.mxu0
        %v2249 = vadd.f32 %v1976, %v2248
        %v2250 = vpop.f32.mrf.mxu0
        %v2251 = vadd.f32 %v1978, %v2250
        %v2252 = vpop.f32.mrf.mxu0
        %v2253 = vadd.f32 %v1980, %v2252
        %2254 = vmatprep.mubr.bf16.mxu0 %v677
        %2255 = vmatmul.mubr.bf16.gmra.mxu0 %v653
        %v2256 = vpop.f32.mrf.mxu0
        %v2257 = vadd.f32 %v1984, %v2256
        %v2258 = vpop.f32.mrf.mxu0
        %v2259 = vadd.f32 %v1986, %v2258
        %v2260 = vpop.f32.mrf.mxu0
        %v2261 = vadd.f32 %v1988, %v2260
        %v2262 = vpop.f32.mrf.mxu0
        %v2263 = vadd.f32 %v1990, %v2262
        %2264 = vmatprep.mubr.bf16.mxu0 %v678
        %2265 = vmatmul.mubr.bf16.gmra.mxu0 %v654
        %v2266 = vpop.f32.mrf.mxu0
        %v2267 = vadd.f32 %v1994, %v2266
        %v2268 = vpop.f32.mrf.mxu0
        %v2269 = vadd.f32 %v1996, %v2268
        %v2270 = vpop.f32.mrf.mxu0
        %v2271 = vadd.f32 %v1998, %v2270
        %v2272 = vpop.f32.mrf.mxu0
        %v2273 = vadd.f32 %v2000, %v2272
        %2274 = vmatprep.mubr.bf16.mxu0 %v679
        %2275 = vmatmul.mubr.bf16.gmra.mxu0 %v655
        %v2276 = vpop.f32.mrf.mxu0
        %v2277 = vadd.f32 %v2004, %v2276
        %v2278 = vpop.f32.mrf.mxu0
        %v2279 = vadd.f32 %v2006, %v2278
        %v2280 = vpop.f32.mrf.mxu0
        %v2281 = vadd.f32 %v2008, %v2280
        %v2282 = vpop.f32.mrf.mxu0
        %v2283 = vadd.f32 %v2010, %v2282
        %2284 = vmatprep.mubr.bf16.mxu0 %v680
        %2285 = vmatmul.mubr.bf16.gmra.mxu0 %v656
        %v2286 = vpop.f32.mrf.mxu0
        %v2287 = vadd.f32 %v2014, %v2286
        %v2288 = vpop.f32.mrf.mxu0
        %v2289 = vadd.f32 %v2016, %v2288
        %v2290 = vpop.f32.mrf.mxu0
        %v2291 = vadd.f32 %v2018, %v2290
        %v2292 = vpop.f32.mrf.mxu0
        %v2293 = vadd.f32 %v2020, %v2292
        %2294 = vmatprep.mubr.bf16.mxu0 %v681
        %2295 = vmatmul.mubr.bf16.gmra.mxu0 %v657
        %v2296 = vpop.f32.mrf.mxu0
        %v2297 = vadd.f32 %v2024, %v2296
        %v2298 = vpop.f32.mrf.mxu0
        %v2299 = vadd.f32 %v2026, %v2298
        %v2300 = vpop.f32.mrf.mxu0
        %v2301 = vadd.f32 %v2028, %v2300
        %v2302 = vpop.f32.mrf.mxu0
        %v2303 = vadd.f32 %v2030, %v2302
        %2304 = vmatprep.mubr.bf16.mxu0 %v682
        %2305 = vmatmul.mubr.bf16.gmra.mxu0 %v658
        %v2306 = vpop.f32.mrf.mxu0
        %v2307 = vadd.f32 %v2034, %v2306
        %v2308 = vpop.f32.mrf.mxu0
        %v2309 = vadd.f32 %v2036, %v2308
        %v2310 = vpop.f32.mrf.mxu0
        %v2311 = vadd.f32 %v2038, %v2310
        %v2312 = vpop.f32.mrf.mxu0
        %v2313 = vadd.f32 %v2040, %v2312
        %2314 = vmatprep.mubr.bf16.mxu0 %v683
        %2315 = vmatmul.mubr.bf16.gmra.mxu0 %v659
        %v2316 = vpop.f32.mrf.mxu0
        %v2317 = vadd.f32 %v2044, %v2316
        %v2318 = vpop.f32.mrf.mxu0
        %v2319 = vadd.f32 %v2046, %v2318
        %v2320 = vpop.f32.mrf.mxu0
        %v2321 = vadd.f32 %v2048, %v2320
        %v2322 = vpop.f32.mrf.mxu0
        %v2323 = vadd.f32 %v2050, %v2322
        %2324 = vmatprep.mubr.bf16.mxu0 %v684
        %2325 = vmatmul.mubr.bf16.gmra.mxu0 %v660
        %v2326 = vpop.f32.mrf.mxu0
        %v2327 = vadd.f32 %v2054, %v2326
        %v2328 = vpop.f32.mrf.mxu0
        %v2329 = vadd.f32 %v2056, %v2328
        %v2330 = vpop.f32.mrf.mxu0
        %v2331 = vadd.f32 %v2058, %v2330
        %v2332 = vpop.f32.mrf.mxu0
        %v2333 = vadd.f32 %v2060, %v2332
        %2334 = vmatprep.mubr.bf16.mxu0 %v685
        %2335 = vmatmul.mubr.bf16.gmra.mxu0 %v661
        %v2336 = vpop.f32.mrf.mxu0
        %v2337 = vadd.f32 %v2064, %v2336
        %v2338 = vpop.f32.mrf.mxu0
        %v2339 = vadd.f32 %v2066, %v2338
        %v2340 = vpop.f32.mrf.mxu0
        %v2341 = vadd.f32 %v2068, %v2340
        %v2342 = vpop.f32.mrf.mxu0
        %v2343 = vadd.f32 %v2070, %v2342
        %2344 = vmatprep.mubr.bf16.mxu0 %v686
        %2345 = vmatmul.mubr.bf16.gmra.mxu0 %v662
        %v2346 = vpop.f32.mrf.mxu0
        %v2347 = vadd.f32 %v2074, %v2346
        %v2348 = vpop.f32.mrf.mxu0
        %v2349 = vadd.f32 %v2076, %v2348
        %v2350 = vpop.f32.mrf.mxu0
        %v2351 = vadd.f32 %v2078, %v2350
        %v2352 = vpop.f32.mrf.mxu0
        %v2353 = vadd.f32 %v2080, %v2352
        %2354 = vmatprep.mubr.bf16.mxu0 %v687
        %2355 = vmatmul.mubr.bf16.gmra.mxu0 %v663
        %v2356 = vpop.f32.mrf.mxu0
        %v2357 = vadd.f32 %v2084, %v2356
        %v2358 = vpop.f32.mrf.mxu0
        %v2359 = vadd.f32 %v2086, %v2358
        %v2360 = vpop.f32.mrf.mxu0
        %v2361 = vadd.f32 %v2088, %v2360
        %v2362 = vpop.f32.mrf.mxu0
        %v2363 = vadd.f32 %v2090, %v2362
        %2364 = vmatprep.mubr.bf16.mxu0 %v688
        %2365 = vmatmul.mubr.bf16.gmra.mxu0 %v664
        %v2366 = vpop.f32.mrf.mxu0
        %v2367 = vadd.f32 %v2094, %v2366
        %v2368 = vpop.f32.mrf.mxu0
        %v2369 = vadd.f32 %v2096, %v2368
        %v2370 = vpop.f32.mrf.mxu0
        %v2371 = vadd.f32 %v2098, %v2370
        %v2372 = vpop.f32.mrf.mxu0
        %v2373 = vadd.f32 %v2100, %v2372
        %2374 = vmatprep.mubr.bf16.mxu0 %v689
        %2375 = vmatmul.mubr.bf16.gmra.mxu0 %v665
        %v2376 = vpop.f32.mrf.mxu0
        %v2377 = vadd.f32 %v2104, %v2376
        %v2378 = vpop.f32.mrf.mxu0
        %v2379 = vadd.f32 %v2106, %v2378
        %v2380 = vpop.f32.mrf.mxu0
        %v2381 = vadd.f32 %v2108, %v2380
        %v2382 = vpop.f32.mrf.mxu0
        %v2383 = vadd.f32 %v2110, %v2382
        %2384 = vmatprep.mubr.bf16.mxu0 %v690
        %2385 = vmatmul.mubr.bf16.gmra.mxu0 %v666
        %v2386 = vpop.f32.mrf.mxu0
        %v2387 = vadd.f32 %v2114, %v2386
        %v2388 = vpop.f32.mrf.mxu0
        %v2389 = vadd.f32 %v2116, %v2388
        %v2390 = vpop.f32.mrf.mxu0
        %v2391 = vadd.f32 %v2118, %v2390
        %v2392 = vpop.f32.mrf.mxu0
        %v2393 = vadd.f32 %v2120, %v2392
        %2394 = vdwg.mxu0
        %2395 = vmatprep.subr.bf16.mxu0 %v1399
        %2396 = vmatpush1.bf16.msra.mxu0 %v1398
        %2397 = vmatprep.subr.bf16.mxu0 %v1397
        %2398 = vmatpush1.bf16.msra.mxu0 %v1396
        %2399 = vmatprep.subr.bf16.mxu0 %v1395
        %2400 = vmatpush1.bf16.msra.mxu0 %v1394
        %2401 = vmatprep.subr.bf16.mxu0 %v1393
        %2402 = vmatpush1.bf16.msra.mxu0 %v1392
        %2403 = vmatprep.subr.bf16.mxu0 %v1391
        %2404 = vmatpush1.bf16.msra.mxu0 %v1390
        %2405 = vmatprep.subr.bf16.mxu0 %v1389
        %2406 = vmatpush1.bf16.msra.mxu0 %v1388
        %2407 = vmatprep.subr.bf16.mxu0 %v1387
        %2408 = vmatpush1.bf16.msra.mxu0 %v1386
        %2409 = vmatprep.subr.bf16.mxu0 %v1385
        %2410 = vmatpush1.bf16.msra.mxu0 %v1384
        %2411 = vmatprep.subr.bf16.mxu0 %v1415
        %2412 = vmatpush2.bf16.msra.mxu0 %v1414
        %2413 = vmatprep.subr.bf16.mxu0 %v1413
        %2414 = vmatpush2.bf16.msra.mxu0 %v1412
        %2415 = vmatprep.subr.bf16.mxu0 %v1411
        %2416 = vmatpush2.bf16.msra.mxu0 %v1410
        %2417 = vmatprep.subr.bf16.mxu0 %v1409
        %2418 = vmatpush2.bf16.msra.mxu0 %v1408
        %2419 = vmatprep.subr.bf16.mxu0 %v1407
        %2420 = vmatpush2.bf16.msra.mxu0 %v1406
        %2421 = vmatprep.subr.bf16.mxu0 %v1405
        %2422 = vmatpush2.bf16.msra.mxu0 %v1404
        %2423 = vmatprep.subr.bf16.mxu0 %v1403
        %2424 = vmatpush2.bf16.msra.mxu0 %v1402
        %2425 = vmatprep.subr.bf16.mxu0 %v1401
        %2426 = vmatpush2.bf16.msra.mxu0 %v1400
        %2427 = vmatprep.mubr.bf16.mxu0 %v574
        %2428 = vmatmul.mubr.bf16.gmra.mxu0 %v550
        %v2429 = vpop.f32.mrf.mxu0
        %v2430 = vadd.f32 %v2157, %v2429
        %v2431 = vpop.f32.mrf.mxu0
        %v2432 = vadd.f32 %v2159, %v2431
        %v2433 = vpop.f32.mrf.mxu0
        %v2434 = vadd.f32 %v2161, %v2433
        %v2435 = vpop.f32.mrf.mxu0
        %v2436 = vadd.f32 %v2163, %v2435
        %2437 = vmatprep.mubr.bf16.mxu0 %v575
        %2438 = vmatmul.mubr.bf16.gmra.mxu0 %v551
        %v2439 = vpop.f32.mrf.mxu0
        %v2440 = vadd.f32 %v2167, %v2439
        %v2441 = vpop.f32.mrf.mxu0
        %v2442 = vadd.f32 %v2169, %v2441
        %v2443 = vpop.f32.mrf.mxu0
        %v2444 = vadd.f32 %v2171, %v2443
        %v2445 = vpop.f32.mrf.mxu0
        %v2446 = vadd.f32 %v2173, %v2445
        %2447 = vmatprep.mubr.bf16.mxu0 %v576
        %2448 = vmatmul.mubr.bf16.gmra.mxu0 %v552
        %v2449 = vpop.f32.mrf.mxu0
        %v2450 = vadd.f32 %v2177, %v2449
        %v2451 = vpop.f32.mrf.mxu0
        %v2452 = vadd.f32 %v2179, %v2451
        %v2453 = vpop.f32.mrf.mxu0
        %v2454 = vadd.f32 %v2181, %v2453
        %v2455 = vpop.f32.mrf.mxu0
        %v2456 = vadd.f32 %v2183, %v2455
        %2457 = vmatprep.mubr.bf16.mxu0 %v577
        %2458 = vmatmul.mubr.bf16.gmra.mxu0 %v553
        %v2459 = vpop.f32.mrf.mxu0
        %v2460 = vadd.f32 %v2187, %v2459
        %v2461 = vpop.f32.mrf.mxu0
        %v2462 = vadd.f32 %v2189, %v2461
        %v2463 = vpop.f32.mrf.mxu0
        %v2464 = vadd.f32 %v2191, %v2463
        %v2465 = vpop.f32.mrf.mxu0
        %v2466 = vadd.f32 %v2193, %v2465
        %2467 = vmatprep.mubr.bf16.mxu0 %v578
        %2468 = vmatmul.mubr.bf16.gmra.mxu0 %v554
        %v2469 = vpop.f32.mrf.mxu0
        %v2470 = vadd.f32 %v2197, %v2469
        %v2471 = vpop.f32.mrf.mxu0
        %v2472 = vadd.f32 %v2199, %v2471
        %v2473 = vpop.f32.mrf.mxu0
        %v2474 = vadd.f32 %v2201, %v2473
        %v2475 = vpop.f32.mrf.mxu0
        %v2476 = vadd.f32 %v2203, %v2475
        %2477 = vmatprep.mubr.bf16.mxu0 %v579
        %2478 = vmatmul.mubr.bf16.gmra.mxu0 %v555
        %v2479 = vpop.f32.mrf.mxu0
        %v2480 = vadd.f32 %v2207, %v2479
        %v2481 = vpop.f32.mrf.mxu0
        %v2482 = vadd.f32 %v2209, %v2481
        %v2483 = vpop.f32.mrf.mxu0
        %v2484 = vadd.f32 %v2211, %v2483
        %v2485 = vpop.f32.mrf.mxu0
        %v2486 = vadd.f32 %v2213, %v2485
        %2487 = vmatprep.mubr.bf16.mxu0 %v580
        %2488 = vmatmul.mubr.bf16.gmra.mxu0 %v556
        %v2489 = vpop.f32.mrf.mxu0
        %v2490 = vadd.f32 %v2217, %v2489
        %v2491 = vpop.f32.mrf.mxu0
        %v2492 = vadd.f32 %v2219, %v2491
        %v2493 = vpop.f32.mrf.mxu0
        %v2494 = vadd.f32 %v2221, %v2493
        %v2495 = vpop.f32.mrf.mxu0
        %v2496 = vadd.f32 %v2223, %v2495
        %2497 = vmatprep.mubr.bf16.mxu0 %v581
        %2498 = vmatmul.mubr.bf16.gmra.mxu0 %v557
        %v2499 = vpop.f32.mrf.mxu0
        %v2500 = vadd.f32 %v2227, %v2499
        %v2501 = vpop.f32.mrf.mxu0
        %v2502 = vadd.f32 %v2229, %v2501
        %v2503 = vpop.f32.mrf.mxu0
        %v2504 = vadd.f32 %v2231, %v2503
        %v2505 = vpop.f32.mrf.mxu0
        %v2506 = vadd.f32 %v2233, %v2505
        %2507 = vmatprep.mubr.bf16.mxu0 %v582
        %2508 = vmatmul.mubr.bf16.gmra.mxu0 %v558
        %v2509 = vpop.f32.mrf.mxu0
        %v2510 = vadd.f32 %v2237, %v2509
        %v2511 = vpop.f32.mrf.mxu0
        %v2512 = vadd.f32 %v2239, %v2511
        %v2513 = vpop.f32.mrf.mxu0
        %v2514 = vadd.f32 %v2241, %v2513
        %v2515 = vpop.f32.mrf.mxu0
        %v2516 = vadd.f32 %v2243, %v2515
        %2517 = vmatprep.mubr.bf16.mxu0 %v583
        %2518 = vmatmul.mubr.bf16.gmra.mxu0 %v559
        %v2519 = vpop.f32.mrf.mxu0
        %v2520 = vadd.f32 %v2247, %v2519
        %v2521 = vpop.f32.mrf.mxu0
        %v2522 = vadd.f32 %v2249, %v2521
        %v2523 = vpop.f32.mrf.mxu0
        %v2524 = vadd.f32 %v2251, %v2523
        %v2525 = vpop.f32.mrf.mxu0
        %v2526 = vadd.f32 %v2253, %v2525
        %2527 = vmatprep.mubr.bf16.mxu0 %v584
        %2528 = vmatmul.mubr.bf16.gmra.mxu0 %v560
        %v2529 = vpop.f32.mrf.mxu0
        %v2530 = vadd.f32 %v2257, %v2529
        %v2531 = vpop.f32.mrf.mxu0
        %v2532 = vadd.f32 %v2259, %v2531
        %v2533 = vpop.f32.mrf.mxu0
        %v2534 = vadd.f32 %v2261, %v2533
        %v2535 = vpop.f32.mrf.mxu0
        %v2536 = vadd.f32 %v2263, %v2535
        %2537 = vmatprep.mubr.bf16.mxu0 %v585
        %2538 = vmatmul.mubr.bf16.gmra.mxu0 %v561
        %v2539 = vpop.f32.mrf.mxu0
        %v2540 = vadd.f32 %v2267, %v2539
        %v2541 = vpop.f32.mrf.mxu0
        %v2542 = vadd.f32 %v2269, %v2541
        %v2543 = vpop.f32.mrf.mxu0
        %v2544 = vadd.f32 %v2271, %v2543
        %v2545 = vpop.f32.mrf.mxu0
        %v2546 = vadd.f32 %v2273, %v2545
        %2547 = vmatprep.mubr.bf16.mxu0 %v586
        %2548 = vmatmul.mubr.bf16.gmra.mxu0 %v562
        %v2549 = vpop.f32.mrf.mxu0
        %v2550 = vadd.f32 %v2277, %v2549
        %v2551 = vpop.f32.mrf.mxu0
        %v2552 = vadd.f32 %v2279, %v2551
        %v2553 = vpop.f32.mrf.mxu0
        %v2554 = vadd.f32 %v2281, %v2553
        %v2555 = vpop.f32.mrf.mxu0
        %v2556 = vadd.f32 %v2283, %v2555
        %2557 = vmatprep.mubr.bf16.mxu0 %v587
        %2558 = vmatmul.mubr.bf16.gmra.mxu0 %v563
        %v2559 = vpop.f32.mrf.mxu0
        %v2560 = vadd.f32 %v2287, %v2559
        %v2561 = vpop.f32.mrf.mxu0
        %v2562 = vadd.f32 %v2289, %v2561
        %v2563 = vpop.f32.mrf.mxu0
        %v2564 = vadd.f32 %v2291, %v2563
        %v2565 = vpop.f32.mrf.mxu0
        %v2566 = vadd.f32 %v2293, %v2565
        %2567 = vmatprep.mubr.bf16.mxu0 %v588
        %2568 = vmatmul.mubr.bf16.gmra.mxu0 %v564
        %v2569 = vpop.f32.mrf.mxu0
        %v2570 = vadd.f32 %v2297, %v2569
        %v2571 = vpop.f32.mrf.mxu0
        %v2572 = vadd.f32 %v2299, %v2571
        %v2573 = vpop.f32.mrf.mxu0
        %v2574 = vadd.f32 %v2301, %v2573
        %v2575 = vpop.f32.mrf.mxu0
        %v2576 = vadd.f32 %v2303, %v2575
        %2577 = vmatprep.mubr.bf16.mxu0 %v589
        %2578 = vmatmul.mubr.bf16.gmra.mxu0 %v565
        %v2579 = vpop.f32.mrf.mxu0
        %v2580 = vadd.f32 %v2307, %v2579
        %v2581 = vpop.f32.mrf.mxu0
        %v2582 = vadd.f32 %v2309, %v2581
        %v2583 = vpop.f32.mrf.mxu0
        %v2584 = vadd.f32 %v2311, %v2583
        %v2585 = vpop.f32.mrf.mxu0
        %v2586 = vadd.f32 %v2313, %v2585
        %2587 = vmatprep.mubr.bf16.mxu0 %v590
        %2588 = vmatmul.mubr.bf16.gmra.mxu0 %v566
        %v2589 = vpop.f32.mrf.mxu0
        %v2590 = vadd.f32 %v2317, %v2589
        %v2591 = vpop.f32.mrf.mxu0
        %v2592 = vadd.f32 %v2319, %v2591
        %v2593 = vpop.f32.mrf.mxu0
        %v2594 = vadd.f32 %v2321, %v2593
        %v2595 = vpop.f32.mrf.mxu0
        %v2596 = vadd.f32 %v2323, %v2595
        %2597 = vmatprep.mubr.bf16.mxu0 %v591
        %2598 = vmatmul.mubr.bf16.gmra.mxu0 %v567
        %v2599 = vpop.f32.mrf.mxu0
        %v2600 = vadd.f32 %v2327, %v2599
        %v2601 = vpop.f32.mrf.mxu0
        %v2602 = vadd.f32 %v2329, %v2601
        %v2603 = vpop.f32.mrf.mxu0
        %v2604 = vadd.f32 %v2331, %v2603
        %v2605 = vpop.f32.mrf.mxu0
        %v2606 = vadd.f32 %v2333, %v2605
        %2607 = vmatprep.mubr.bf16.mxu0 %v592
        %2608 = vmatmul.mubr.bf16.gmra.mxu0 %v568
        %v2609 = vpop.f32.mrf.mxu0
        %v2610 = vadd.f32 %v2337, %v2609
        %v2611 = vpop.f32.mrf.mxu0
        %v2612 = vadd.f32 %v2339, %v2611
        %v2613 = vpop.f32.mrf.mxu0
        %v2614 = vadd.f32 %v2341, %v2613
        %v2615 = vpop.f32.mrf.mxu0
        %v2616 = vadd.f32 %v2343, %v2615
        %2617 = vmatprep.mubr.bf16.mxu0 %v593
        %2618 = vmatmul.mubr.bf16.gmra.mxu0 %v569
        %v2619 = vpop.f32.mrf.mxu0
        %v2620 = vadd.f32 %v2347, %v2619
        %v2621 = vpop.f32.mrf.mxu0
        %v2622 = vadd.f32 %v2349, %v2621
        %v2623 = vpop.f32.mrf.mxu0
        %v2624 = vadd.f32 %v2351, %v2623
        %v2625 = vpop.f32.mrf.mxu0
        %v2626 = vadd.f32 %v2353, %v2625
        %2627 = vmatprep.mubr.bf16.mxu0 %v594
        %2628 = vmatmul.mubr.bf16.gmra.mxu0 %v570
        %v2629 = vpop.f32.mrf.mxu0
        %v2630 = vadd.f32 %v2357, %v2629
        %v2631 = vpop.f32.mrf.mxu0
        %v2632 = vadd.f32 %v2359, %v2631
        %v2633 = vpop.f32.mrf.mxu0
        %v2634 = vadd.f32 %v2361, %v2633
        %v2635 = vpop.f32.mrf.mxu0
        %v2636 = vadd.f32 %v2363, %v2635
        %2637 = vmatprep.mubr.bf16.mxu0 %v694
        %2638 = vmatmul.mubr.bf16.gmra.mxu0 %v691
        %v2639 = vpop.f32.mrf.mxu0
        %v2640 = vadd.f32 %v2367, %v2639
        %v2641 = vpop.f32.mrf.mxu0
        %v2642 = vadd.f32 %v2369, %v2641
        %v2643 = vpop.f32.mrf.mxu0
        %v2644 = vadd.f32 %v2371, %v2643
        %v2645 = vpop.f32.mrf.mxu0
        %v2646 = vadd.f32 %v2373, %v2645
        %2647 = vmatprep.mubr.bf16.mxu0 %v695
        %2648 = vmatmul.mubr.bf16.gmra.mxu0 %v692
        %v2649 = vpop.f32.mrf.mxu0
        %v2650 = vadd.f32 %v2377, %v2649
        %v2651 = vpop.f32.mrf.mxu0
        %v2652 = vadd.f32 %v2379, %v2651
        %v2653 = vpop.f32.mrf.mxu0
        %v2654 = vadd.f32 %v2381, %v2653
        %v2655 = vpop.f32.mrf.mxu0
        %v2656 = vadd.f32 %v2383, %v2655
        %2657 = vmatprep.mubr.bf16.mxu0 %v696
        %2658 = vmatmul.mubr.bf16.gmra.mxu0 %v693
        %v2659 = vpop.f32.mrf.mxu0
        %v2660 = vadd.f32 %v2387, %v2659
        %v2661 = vpop.f32.mrf.mxu0
        %v2662 = vadd.f32 %v2389, %v2661
        %v2663 = vpop.f32.mrf.mxu0
        %v2664 = vadd.f32 %v2391, %v2663
        %v2665 = vpop.f32.mrf.mxu0
        %v2666 = vadd.f32 %v2393, %v2665
        %2667 = vdwg.mxu0
        %2668 = vmatprep.subr.bf16.mxu0 %v1431
        %2669 = vmatpush1.bf16.msra.mxu0 %v1430
        %2670 = vmatprep.subr.bf16.mxu0 %v1429
        %2671 = vmatpush1.bf16.msra.mxu0 %v1428
        %2672 = vmatprep.subr.bf16.mxu0 %v1427
        %2673 = vmatpush1.bf16.msra.mxu0 %v1426
        %2674 = vmatprep.subr.bf16.mxu0 %v1425
        %2675 = vmatpush1.bf16.msra.mxu0 %v1424
        %2676 = vmatprep.subr.bf16.mxu0 %v1423
        %2677 = vmatpush1.bf16.msra.mxu0 %v1422
        %2678 = vmatprep.subr.bf16.mxu0 %v1421
        %2679 = vmatpush1.bf16.msra.mxu0 %v1420
        %2680 = vmatprep.subr.bf16.mxu0 %v1419
        %2681 = vmatpush1.bf16.msra.mxu0 %v1418
        %2682 = vmatprep.subr.bf16.mxu0 %v1417
        %2683 = vmatpush1.bf16.msra.mxu0 %v1416
        %2684 = vmatprep.subr.bf16.mxu0 0
        %2685 = vmatpush2.bf16.msra.mxu0 0
        %2686 = vmatprep.subr.bf16.mxu0 0
        %2687 = vmatpush2.bf16.msra.mxu0 0
        %2688 = vmatprep.subr.bf16.mxu0 0
        %2689 = vmatpush2.bf16.msra.mxu0 0
        %2690 = vmatprep.subr.bf16.mxu0 0
        %2691 = vmatpush2.bf16.msra.mxu0 0
        %2692 = vmatprep.subr.bf16.mxu0 0
        %2693 = vmatpush2.bf16.msra.mxu0 0
        %2694 = vmatprep.subr.bf16.mxu0 0
        %2695 = vmatpush2.bf16.msra.mxu0 0
        %2696 = vmatprep.subr.bf16.mxu0 0
        %2697 = vmatpush2.bf16.msra.mxu0 0
        %2698 = vmatprep.subr.bf16.mxu0 0
        %2699 = vmatpush2.bf16.msra.mxu0 0
        %2700 = vmatprep.mubr.bf16.mxu0 0
        %2701 = vmatmul.mubr.bf16.gmra.mxu0 %v598
        %v2702 = vpop.f32.mrf.mxu0
        %v2703 = vadd.f32 %v2430, %v2702
        %v2704 = vpop.f32.mrf.mxu0
        %v2705 = vadd.f32 %v2432, %v2704
        %v2706 = vpop.f32.mrf.mxu0
        %v2707 = vadd.f32 %v2434, %v2706
        %v2708 = vpop.f32.mrf.mxu0
        %v2709 = vadd.f32 %v2436, %v2708
        %2710 = vmatprep.mubr.bf16.mxu0 0
        %2711 = vmatmul.mubr.bf16.gmra.mxu0 %v599
        %v2712 = vpop.f32.mrf.mxu0
        %v2713 = vadd.f32 %v2440, %v2712
        %v2714 = vpop.f32.mrf.mxu0
        %v2715 = vadd.f32 %v2442, %v2714
        %v2716 = vpop.f32.mrf.mxu0
        %v2717 = vadd.f32 %v2444, %v2716
        %v2718 = vpop.f32.mrf.mxu0
        %v2719 = vadd.f32 %v2446, %v2718
        %2720 = vmatprep.mubr.bf16.mxu0 0
        %2721 = vmatmul.mubr.bf16.gmra.mxu0 %v600
        %v2722 = vpop.f32.mrf.mxu0
        %v2723 = vadd.f32 %v2450, %v2722
        %v2724 = vpop.f32.mrf.mxu0
        %v2725 = vadd.f32 %v2452, %v2724
        %v2726 = vpop.f32.mrf.mxu0
        %v2727 = vadd.f32 %v2454, %v2726
        %v2728 = vpop.f32.mrf.mxu0
        %v2729 = vadd.f32 %v2456, %v2728
        %2730 = vmatprep.mubr.bf16.mxu0 0
        %2731 = vmatmul.mubr.bf16.gmra.mxu0 %v601
        %v2732 = vpop.f32.mrf.mxu0
        %v2733 = vadd.f32 %v2460, %v2732
        %v2734 = vpop.f32.mrf.mxu0
        %v2735 = vadd.f32 %v2462, %v2734
        %v2736 = vpop.f32.mrf.mxu0
        %v2737 = vadd.f32 %v2464, %v2736
        %v2738 = vpop.f32.mrf.mxu0
        %v2739 = vadd.f32 %v2466, %v2738
        %2740 = vmatprep.mubr.bf16.mxu0 0
        %2741 = vmatmul.mubr.bf16.gmra.mxu0 %v602
        %v2742 = vpop.f32.mrf.mxu0
        %v2743 = vadd.f32 %v2470, %v2742
        %v2744 = vpop.f32.mrf.mxu0
        %v2745 = vadd.f32 %v2472, %v2744
        %v2746 = vpop.f32.mrf.mxu0
        %v2747 = vadd.f32 %v2474, %v2746
        %v2748 = vpop.f32.mrf.mxu0
        %v2749 = vadd.f32 %v2476, %v2748
        %2750 = vmatprep.mubr.bf16.mxu0 0
        %2751 = vmatmul.mubr.bf16.gmra.mxu0 %v603
        %v2752 = vpop.f32.mrf.mxu0
        %v2753 = vadd.f32 %v2480, %v2752
        %v2754 = vpop.f32.mrf.mxu0
        %v2755 = vadd.f32 %v2482, %v2754
        %v2756 = vpop.f32.mrf.mxu0
        %v2757 = vadd.f32 %v2484, %v2756
        %v2758 = vpop.f32.mrf.mxu0
        %v2759 = vadd.f32 %v2486, %v2758
        %2760 = vmatprep.mubr.bf16.mxu0 0
        %2761 = vmatmul.mubr.bf16.gmra.mxu0 %v604
        %v2762 = vpop.f32.mrf.mxu0
        %v2763 = vadd.f32 %v2490, %v2762
        %v2764 = vpop.f32.mrf.mxu0
        %v2765 = vadd.f32 %v2492, %v2764
        %v2766 = vpop.f32.mrf.mxu0
        %v2767 = vadd.f32 %v2494, %v2766
        %v2768 = vpop.f32.mrf.mxu0
        %v2769 = vadd.f32 %v2496, %v2768
        %2770 = vmatprep.mubr.bf16.mxu0 0
        %2771 = vmatmul.mubr.bf16.gmra.mxu0 %v605
        %v2772 = vpop.f32.mrf.mxu0
        %v2773 = vadd.f32 %v2500, %v2772
        %v2774 = vpop.f32.mrf.mxu0
        %v2775 = vadd.f32 %v2502, %v2774
        %v2776 = vpop.f32.mrf.mxu0
        %v2777 = vadd.f32 %v2504, %v2776
        %v2778 = vpop.f32.mrf.mxu0
        %v2779 = vadd.f32 %v2506, %v2778
        %2780 = vmatprep.mubr.bf16.mxu0 0
        %2781 = vmatmul.mubr.bf16.gmra.mxu0 %v606
        %v2782 = vpop.f32.mrf.mxu0
        %v2783 = vadd.f32 %v2510, %v2782
        %v2784 = vpop.f32.mrf.mxu0
        %v2785 = vadd.f32 %v2512, %v2784
        %v2786 = vpop.f32.mrf.mxu0
        %v2787 = vadd.f32 %v2514, %v2786
        %v2788 = vpop.f32.mrf.mxu0
        %v2789 = vadd.f32 %v2516, %v2788
        %2790 = vmatprep.mubr.bf16.mxu0 0
        %2791 = vmatmul.mubr.bf16.gmra.mxu0 %v607
        %v2792 = vpop.f32.mrf.mxu0
        %v2793 = vadd.f32 %v2520, %v2792
        %v2794 = vpop.f32.mrf.mxu0
        %v2795 = vadd.f32 %v2522, %v2794
        %v2796 = vpop.f32.mrf.mxu0
        %v2797 = vadd.f32 %v2524, %v2796
        %v2798 = vpop.f32.mrf.mxu0
        %v2799 = vadd.f32 %v2526, %v2798
        %2800 = vmatprep.mubr.bf16.mxu0 0
        %2801 = vmatmul.mubr.bf16.gmra.mxu0 %v608
        %v2802 = vpop.f32.mrf.mxu0
        %v2803 = vadd.f32 %v2530, %v2802
        %v2804 = vpop.f32.mrf.mxu0
        %v2805 = vadd.f32 %v2532, %v2804
        %v2806 = vpop.f32.mrf.mxu0
        %v2807 = vadd.f32 %v2534, %v2806
        %v2808 = vpop.f32.mrf.mxu0
        %v2809 = vadd.f32 %v2536, %v2808
        %2810 = vmatprep.mubr.bf16.mxu0 0
        %2811 = vmatmul.mubr.bf16.gmra.mxu0 %v609
        %v2812 = vpop.f32.mrf.mxu0
        %v2813 = vadd.f32 %v2540, %v2812
        %v2814 = vpop.f32.mrf.mxu0
        %v2815 = vadd.f32 %v2542, %v2814
        %v2816 = vpop.f32.mrf.mxu0
        %v2817 = vadd.f32 %v2544, %v2816
        %v2818 = vpop.f32.mrf.mxu0
        %v2819 = vadd.f32 %v2546, %v2818
        %2820 = vmatprep.mubr.bf16.mxu0 0
        %2821 = vmatmul.mubr.bf16.gmra.mxu0 %v610
        %v2822 = vpop.f32.mrf.mxu0
        %v2823 = vadd.f32 %v2550, %v2822
        %v2824 = vpop.f32.mrf.mxu0
        %v2825 = vadd.f32 %v2552, %v2824
        %v2826 = vpop.f32.mrf.mxu0
        %v2827 = vadd.f32 %v2554, %v2826
        %v2828 = vpop.f32.mrf.mxu0
        %v2829 = vadd.f32 %v2556, %v2828
        %2830 = vmatprep.mubr.bf16.mxu0 0
        %2831 = vmatmul.mubr.bf16.gmra.mxu0 %v611
        %v2832 = vpop.f32.mrf.mxu0
        %v2833 = vadd.f32 %v2560, %v2832
        %v2834 = vpop.f32.mrf.mxu0
        %v2835 = vadd.f32 %v2562, %v2834
        %v2836 = vpop.f32.mrf.mxu0
        %v2837 = vadd.f32 %v2564, %v2836
        %v2838 = vpop.f32.mrf.mxu0
        %v2839 = vadd.f32 %v2566, %v2838
        %2840 = vmatprep.mubr.bf16.mxu0 0
        %2841 = vmatmul.mubr.bf16.gmra.mxu0 %v612
        %v2842 = vpop.f32.mrf.mxu0
        %v2843 = vadd.f32 %v2570, %v2842
        %v2844 = vpop.f32.mrf.mxu0
        %v2845 = vadd.f32 %v2572, %v2844
        %v2846 = vpop.f32.mrf.mxu0
        %v2847 = vadd.f32 %v2574, %v2846
        %v2848 = vpop.f32.mrf.mxu0
        %v2849 = vadd.f32 %v2576, %v2848
        %2850 = vmatprep.mubr.bf16.mxu0 0
        %2851 = vmatmul.mubr.bf16.gmra.mxu0 %v613
        %v2852 = vpop.f32.mrf.mxu0
        %v2853 = vadd.f32 %v2580, %v2852
        %v2854 = vpop.f32.mrf.mxu0
        %v2855 = vadd.f32 %v2582, %v2854
        %v2856 = vpop.f32.mrf.mxu0
        %v2857 = vadd.f32 %v2584, %v2856
        %v2858 = vpop.f32.mrf.mxu0
        %v2859 = vadd.f32 %v2586, %v2858
        %2860 = vmatprep.mubr.bf16.mxu0 0
        %2861 = vmatmul.mubr.bf16.gmra.mxu0 %v614
        %v2862 = vpop.f32.mrf.mxu0
        %v2863 = vadd.f32 %v2590, %v2862
        %v2864 = vpop.f32.mrf.mxu0
        %v2865 = vadd.f32 %v2592, %v2864
        %v2866 = vpop.f32.mrf.mxu0
        %v2867 = vadd.f32 %v2594, %v2866
        %v2868 = vpop.f32.mrf.mxu0
        %v2869 = vadd.f32 %v2596, %v2868
        %2870 = vmatprep.mubr.bf16.mxu0 0
        %2871 = vmatmul.mubr.bf16.gmra.mxu0 %v615
        %v2872 = vpop.f32.mrf.mxu0
        %v2873 = vadd.f32 %v2600, %v2872
        %v2874 = vpop.f32.mrf.mxu0
        %v2875 = vadd.f32 %v2602, %v2874
        %v2876 = vpop.f32.mrf.mxu0
        %v2877 = vadd.f32 %v2604, %v2876
        %v2878 = vpop.f32.mrf.mxu0
        %v2879 = vadd.f32 %v2606, %v2878
        %2880 = vmatprep.mubr.bf16.mxu0 0
        %2881 = vmatmul.mubr.bf16.gmra.mxu0 %v616
        %v2882 = vpop.f32.mrf.mxu0
        %v2883 = vadd.f32 %v2610, %v2882
        %v2884 = vpop.f32.mrf.mxu0
        %v2885 = vadd.f32 %v2612, %v2884
        %v2886 = vpop.f32.mrf.mxu0
        %v2887 = vadd.f32 %v2614, %v2886
        %v2888 = vpop.f32.mrf.mxu0
        %v2889 = vadd.f32 %v2616, %v2888
        %2890 = vmatprep.mubr.bf16.mxu0 0
        %2891 = vmatmul.mubr.bf16.gmra.mxu0 %v617
        %v2892 = vpop.f32.mrf.mxu0
        %v2893 = vadd.f32 %v2620, %v2892
        %v2894 = vpop.f32.mrf.mxu0
        %v2895 = vadd.f32 %v2622, %v2894
        %v2896 = vpop.f32.mrf.mxu0
        %v2897 = vadd.f32 %v2624, %v2896
        %v2898 = vpop.f32.mrf.mxu0
        %v2899 = vadd.f32 %v2626, %v2898
        %2900 = vmatprep.mubr.bf16.mxu0 0
        %2901 = vmatmul.mubr.bf16.gmra.mxu0 %v618
        %v2902 = vpop.f32.mrf.mxu0
        %v2903 = vadd.f32 %v2630, %v2902
        %v2904 = vpop.f32.mrf.mxu0
        %v2905 = vadd.f32 %v2632, %v2904
        %v2906 = vpop.f32.mrf.mxu0
        %v2907 = vadd.f32 %v2634, %v2906
        %v2908 = vpop.f32.mrf.mxu0
        %v2909 = vadd.f32 %v2636, %v2908
        %2910 = vmatprep.mubr.bf16.mxu0 0
        %2911 = vmatmul.mubr.bf16.gmra.mxu0 %v697
        %v2912 = vpop.f32.mrf.mxu0
        %v2913 = vadd.f32 %v2640, %v2912
        %v2914 = vpop.f32.mrf.mxu0
        %v2915 = vadd.f32 %v2642, %v2914
        %v2916 = vpop.f32.mrf.mxu0
        %v2917 = vadd.f32 %v2644, %v2916
        %v2918 = vpop.f32.mrf.mxu0
        %v2919 = vadd.f32 %v2646, %v2918
        %2920 = vmatprep.mubr.bf16.mxu0 0
        %2921 = vmatmul.mubr.bf16.gmra.mxu0 %v698
        %v2922 = vpop.f32.mrf.mxu0
        %v2923 = vadd.f32 %v2650, %v2922
        %v2924 = vpop.f32.mrf.mxu0
        %v2925 = vadd.f32 %v2652, %v2924
        %v2926 = vpop.f32.mrf.mxu0
        %v2927 = vadd.f32 %v2654, %v2926
        %v2928 = vpop.f32.mrf.mxu0
        %v2929 = vadd.f32 %v2656, %v2928
        %2930 = vmatprep.mubr.bf16.mxu0 0
        %2931 = vmatmul.mubr.bf16.gmra.mxu0 %v699
        %v2932 = vpop.f32.mrf.mxu0
        %v2933 = vadd.f32 %v2660, %v2932
        %v2934 = vpop.f32.mrf.mxu0
        %v2935 = vadd.f32 %v2662, %v2934
        %v2936 = vpop.f32.mrf.mxu0
        %v2937 = vadd.f32 %v2664, %v2936
        %v2938 = vpop.f32.mrf.mxu0
        %v2939 = vadd.f32 %v2666, %v2938
        %2940 = vdwg.mxu0
        %v2941 = vmax.f32 %v2703, 0.0
        %v2942 = vmax.f32 %v2707, 0.0
        %v2943 = vmax.f32 %v2713, 0.0
        %v2944 = vmax.f32 %v2717, 0.0
        %v2945 = vmax.f32 %v2723, 0.0
        %v2946 = vmax.f32 %v2727, 0.0
        %v2947 = vmax.f32 %v2733, 0.0
        %v2948 = vmax.f32 %v2737, 0.0
        %v2949 = vmax.f32 %v2743, 0.0
        %v2950 = vmax.f32 %v2747, 0.0
        %v2951 = vmax.f32 %v2753, 0.0
        %v2952 = vmax.f32 %v2757, 0.0
        %v2953 = vmax.f32 %v2763, 0.0
        %v2954 = vmax.f32 %v2767, 0.0
        %v2955 = vmax.f32 %v2773, 0.0
        %v2956 = vmax.f32 %v2777, 0.0
        %v2957 = vmax.f32 %v2783, 0.0
        %v2958 = vmax.f32 %v2787, 0.0
        %v2959 = vmax.f32 %v2793, 0.0
        %v2960 = vmax.f32 %v2797, 0.0
        %v2961 = vmax.f32 %v2803, 0.0
        %v2962 = vmax.f32 %v2807, 0.0
        %v2963 = vmax.f32 %v2813, 0.0
        %v2964 = vmax.f32 %v2817, 0.0
        %v2965 = vmax.f32 %v2823, 0.0
        %v2966 = vmax.f32 %v2827, 0.0
        %v2967 = vmax.f32 %v2833, 0.0
        %v2968 = vmax.f32 %v2837, 0.0
        %v2969 = vmax.f32 %v2843, 0.0
        %v2970 = vmax.f32 %v2847, 0.0
        %v2971 = vmax.f32 %v2853, 0.0
        %v2972 = vmax.f32 %v2857, 0.0
        %v2973 = vmax.f32 %v2863, 0.0
        %v2974 = vmax.f32 %v2867, 0.0
        %v2975 = vmax.f32 %v2873, 0.0
        %v2976 = vmax.f32 %v2877, 0.0
        %v2977 = vmax.f32 %v2883, 0.0
        %v2978 = vmax.f32 %v2887, 0.0
        %v2979 = vmax.f32 %v2893, 0.0
        %v2980 = vmax.f32 %v2897, 0.0
        %v2981 = vmax.f32 %v2903, 0.0
        %v2982 = vmax.f32 %v2907, 0.0
        %v2983 = vmax.f32 %v2913, 0.0
        %v2984 = vmax.f32 %v2917, 0.0
        %v2985 = vmax.f32 %v2923, 0.0
        %v2986 = vmax.f32 %v2927, 0.0
        %v2987 = vmax.f32 %v2933, 0.0
        %v2988 = vmax.f32 %v2937, 0.0
        %v2989 = vadd.s32 %v382, 8
        %v2990 = vadd.s32 %v382, 16
        %vm2991 = vcmp.ge.s32.totalorder %v382, 1
        %vm2992 = vcmp.ge.s32.totalorder %v2989, 1
        %vm2993 = vcmp.ge.s32.totalorder %v2990, 1
        %vm2994 = vcmp.le.s32.totalorder %v382, 16
        %vm2995 = vcmp.le.s32.totalorder %v2989, 16
        %vm2996 = vcmp.le.s32.totalorder %v2990, 16
        %vm2997 = vmand %vm2991, %vm2994
        %vm2998 = vmand %vm2992, %vm2995
        %vm2999 = vmand %vm2993, %vm2996
        %v3000 = vsel %vm2997, %v2941, 0.0
        %v3001 = vsel %vm2998, %v2942, 0.0
        %v3002 = vsel %vm2999, %v2943, 0.0
        %v3003 = vsel %vm2997, %v2944, 0.0
        %v3004 = vsel %vm2998, %v2945, 0.0
        %v3005 = vsel %vm2999, %v2946, 0.0
        %v3006 = vsel %vm2997, %v2947, 0.0
        %v3007 = vsel %vm2998, %v2948, 0.0
        %v3008 = vsel %vm2999, %v2949, 0.0
        %v3009 = vsel %vm2997, %v2950, 0.0
        %v3010 = vsel %vm2998, %v2951, 0.0
        %v3011 = vsel %vm2999, %v2952, 0.0
        %v3012 = vsel %vm2997, %v2953, 0.0
        %v3013 = vsel %vm2998, %v2954, 0.0
        %v3014 = vsel %vm2999, %v2955, 0.0
        %v3015 = vsel %vm2997, %v2956, 0.0
        %v3016 = vsel %vm2998, %v2957, 0.0
        %v3017 = vsel %vm2999, %v2958, 0.0
        %v3018 = vsel %vm2997, %v2959, 0.0
        %v3019 = vsel %vm2998, %v2960, 0.0
        %v3020 = vsel %vm2999, %v2961, 0.0
        %v3021 = vsel %vm2997, %v2962, 0.0
        %v3022 = vsel %vm2998, %v2963, 0.0
        %v3023 = vsel %vm2999, %v2964, 0.0
        %v3024 = vsel %vm2997, %v2965, 0.0
        %v3025 = vsel %vm2998, %v2966, 0.0
        %v3026 = vsel %vm2999, %v2967, 0.0
        %v3027 = vsel %vm2997, %v2968, 0.0
        %v3028 = vsel %vm2998, %v2969, 0.0
        %v3029 = vsel %vm2999, %v2970, 0.0
        %v3030 = vsel %vm2997, %v2971, 0.0
        %v3031 = vsel %vm2998, %v2972, 0.0
        %v3032 = vsel %vm2999, %v2973, 0.0
        %v3033 = vsel %vm2997, %v2974, 0.0
        %v3034 = vsel %vm2998, %v2975, 0.0
        %v3035 = vsel %vm2999, %v2976, 0.0
        %v3036 = vsel %vm2997, %v2977, 0.0
        %v3037 = vsel %vm2998, %v2978, 0.0
        %v3038 = vsel %vm2999, %v2979, 0.0
        %v3039 = vsel %vm2997, %v2980, 0.0
        %v3040 = vsel %vm2998, %v2981, 0.0
        %v3041 = vsel %vm2999, %v2982, 0.0
        %v3042 = vsel %vm2997, %v2983, 0.0
        %v3043 = vsel %vm2998, %v2984, 0.0
        %v3044 = vsel %vm2999, %v2985, 0.0
        %v3045 = vsel %vm2997, %v2986, 0.0
        %v3046 = vsel %vm2998, %v2987, 0.0
        %v3047 = vsel %vm2999, %v2988, 0.0
        %v3048 = vrot.slane %v3000, 7
        %v3049 = vrot.slane %v3001, 7
        %v3050 = vrot.slane %v3002, 7
        %v3051 = vrot.slane %v3003, 7
        %v3052 = vrot.slane %v3004, 7
        %v3053 = vrot.slane %v3005, 7
        %v3054 = vrot.slane %v3006, 7
        %v3055 = vrot.slane %v3007, 7
        %v3056 = vrot.slane %v3008, 7
        %v3057 = vrot.slane %v3009, 7
        %v3058 = vrot.slane %v3010, 7
        %v3059 = vrot.slane %v3011, 7
        %v3060 = vrot.slane %v3012, 7
        %v3061 = vrot.slane %v3013, 7
        %v3062 = vrot.slane %v3014, 7
        %v3063 = vrot.slane %v3015, 7
        %v3064 = vrot.slane %v3016, 7
        %v3065 = vrot.slane %v3017, 7
        %v3066 = vrot.slane %v3018, 7
        %v3067 = vrot.slane %v3019, 7
        %v3068 = vrot.slane %v3020, 7
        %v3069 = vrot.slane %v3021, 7
        %v3070 = vrot.slane %v3022, 7
        %v3071 = vrot.slane %v3023, 7
        %v3072 = vrot.slane %v3024, 7
        %v3073 = vrot.slane %v3025, 7
        %v3074 = vrot.slane %v3026, 7
        %v3075 = vrot.slane %v3027, 7
        %v3076 = vrot.slane %v3028, 7
        %v3077 = vrot.slane %v3029, 7
        %v3078 = vrot.slane %v3030, 7
        %v3079 = vrot.slane %v3031, 7
        %v3080 = vrot.slane %v3032, 7
        %v3081 = vrot.slane %v3033, 7
        %v3082 = vrot.slane %v3034, 7
        %v3083 = vrot.slane %v3035, 7
        %v3084 = vrot.slane %v3036, 7
        %v3085 = vrot.slane %v3037, 7
        %v3086 = vrot.slane %v3038, 7
        %v3087 = vrot.slane %v3039, 7
        %v3088 = vrot.slane %v3040, 7
        %v3089 = vrot.slane %v3041, 7
        %v3090 = vrot.slane %v3042, 7
        %v3091 = vrot.slane %v3043, 7
        %v3092 = vrot.slane %v3044, 7
        %v3093 = vrot.slane %v3045, 7
        %v3094 = vrot.slane %v3046, 7
        %v3095 = vrot.slane %v3047, 7
        %v3096 = vsel %vm383, %v3095, 0.0
        %v3097 = vsel %vm383, %v3094, %v3095
        %v3098 = vsel %vm383, %v3093, %v3094
        %v3099 = vsel %vm383, %v3092, %v3093
        %v3100 = vsel %vm383, %v3091, %v3092
        %v3101 = vsel %vm383, %v3090, %v3091
        %v3102 = vsel %vm383, %v3089, %v3090
        %v3103 = vsel %vm383, %v3088, %v3089
        %v3104 = vsel %vm383, %v3087, %v3088
        %v3105 = vsel %vm383, %v3086, %v3087
        %v3106 = vsel %vm383, %v3085, %v3086
        %v3107 = vsel %vm383, %v3084, %v3085
        %v3108 = vsel %vm383, %v3083, %v3084
        %v3109 = vsel %vm383, %v3082, %v3083
        %v3110 = vsel %vm383, %v3081, %v3082
        %v3111 = vsel %vm383, %v3080, %v3081
        %v3112 = vsel %vm383, %v3079, %v3080
        %v3113 = vsel %vm383, %v3078, %v3079
        %v3114 = vsel %vm383, %v3077, %v3078
        %v3115 = vsel %vm383, %v3076, %v3077
        %v3116 = vsel %vm383, %v3075, %v3076
        %v3117 = vsel %vm383, %v3074, %v3075
        %v3118 = vsel %vm383, %v3073, %v3074
        %v3119 = vsel %vm383, %v3072, %v3073
        %v3120 = vsel %vm383, %v3071, %v3072
        %v3121 = vsel %vm383, %v3070, %v3071
        %v3122 = vsel %vm383, %v3069, %v3070
        %v3123 = vsel %vm383, %v3068, %v3069
        %v3124 = vsel %vm383, %v3067, %v3068
        %v3125 = vsel %vm383, %v3066, %v3067
        %v3126 = vsel %vm383, %v3065, %v3066
        %v3127 = vsel %vm383, %v3064, %v3065
        %v3128 = vsel %vm383, %v3063, %v3064
        %v3129 = vsel %vm383, %v3062, %v3063
        %v3130 = vsel %vm383, %v3061, %v3062
        %v3131 = vsel %vm383, %v3060, %v3061
        %v3132 = vsel %vm383, %v3059, %v3060
        %v3133 = vsel %vm383, %v3058, %v3059
        %v3134 = vsel %vm383, %v3057, %v3058
        %v3135 = vsel %vm383, %v3056, %v3057
        %v3136 = vsel %vm383, %v3055, %v3056
        %v3137 = vsel %vm383, %v3054, %v3055
        %v3138 = vsel %vm383, %v3053, %v3054
        %v3139 = vsel %vm383, %v3052, %v3053
        %v3140 = vsel %vm383, %v3051, %v3052
        %v3141 = vsel %vm383, %v3050, %v3051
        %v3142 = vsel %vm383, %v3049, %v3050
        %v3143 = vsel %vm383, %v3048, %v3049
        %v3144 = vsel %vm383, 0.0, %v3048
        %v3145 = vrot.slane %v3000, 1
        %v3146 = vrot.slane %v3001, 1
        %v3147 = vrot.slane %v3002, 1
        %v3148 = vrot.slane %v3003, 1
        %v3149 = vrot.slane %v3004, 1
        %v3150 = vrot.slane %v3005, 1
        %v3151 = vrot.slane %v3006, 1
        %v3152 = vrot.slane %v3007, 1
        %v3153 = vrot.slane %v3008, 1
        %v3154 = vrot.slane %v3009, 1
        %v3155 = vrot.slane %v3010, 1
        %v3156 = vrot.slane %v3011, 1
        %v3157 = vrot.slane %v3012, 1
        %v3158 = vrot.slane %v3013, 1
        %v3159 = vrot.slane %v3014, 1
        %v3160 = vrot.slane %v3015, 1
        %v3161 = vrot.slane %v3016, 1
        %v3162 = vrot.slane %v3017, 1
        %v3163 = vrot.slane %v3018, 1
        %v3164 = vrot.slane %v3019, 1
        %v3165 = vrot.slane %v3020, 1
        %v3166 = vrot.slane %v3021, 1
        %v3167 = vrot.slane %v3022, 1
        %v3168 = vrot.slane %v3023, 1
        %v3169 = vrot.slane %v3024, 1
        %v3170 = vrot.slane %v3025, 1
        %v3171 = vrot.slane %v3026, 1
        %v3172 = vrot.slane %v3027, 1
        %v3173 = vrot.slane %v3028, 1
        %v3174 = vrot.slane %v3029, 1
        %v3175 = vrot.slane %v3030, 1
        %v3176 = vrot.slane %v3031, 1
        %v3177 = vrot.slane %v3032, 1
        %v3178 = vrot.slane %v3033, 1
        %v3179 = vrot.slane %v3034, 1
        %v3180 = vrot.slane %v3035, 1
        %v3181 = vrot.slane %v3036, 1
        %v3182 = vrot.slane %v3037, 1
        %v3183 = vrot.slane %v3038, 1
        %v3184 = vrot.slane %v3039, 1
        %v3185 = vrot.slane %v3040, 1
        %v3186 = vrot.slane %v3041, 1
        %v3187 = vrot.slane %v3042, 1
        %v3188 = vrot.slane %v3043, 1
        %v3189 = vrot.slane %v3044, 1
        %v3190 = vrot.slane %v3045, 1
        %v3191 = vrot.slane %v3046, 1
        %v3192 = vrot.slane %v3047, 1
        %v3193 = vsel %vm492, %v3192, 0.0
        %v3194 = vsel %vm492, %v3191, %v3192
        %v3195 = vsel %vm492, %v3190, %v3191
        %v3196 = vsel %vm492, %v3189, %v3190
        %v3197 = vsel %vm492, %v3188, %v3189
        %v3198 = vsel %vm492, %v3187, %v3188
        %v3199 = vsel %vm492, %v3186, %v3187
        %v3200 = vsel %vm492, %v3185, %v3186
        %v3201 = vsel %vm492, %v3184, %v3185
        %v3202 = vsel %vm492, %v3183, %v3184
        %v3203 = vsel %vm492, %v3182, %v3183
        %v3204 = vsel %vm492, %v3181, %v3182
        %v3205 = vsel %vm492, %v3180, %v3181
        %v3206 = vsel %vm492, %v3179, %v3180
        %v3207 = vsel %vm492, %v3178, %v3179
        %v3208 = vsel %vm492, %v3177, %v3178
        %v3209 = vsel %vm492, %v3176, %v3177
        %v3210 = vsel %vm492, %v3175, %v3176
        %v3211 = vsel %vm492, %v3174, %v3175
        %v3212 = vsel %vm492, %v3173, %v3174
        %v3213 = vsel %vm492, %v3172, %v3173
        %v3214 = vsel %vm492, %v3171, %v3172
        %v3215 = vsel %vm492, %v3170, %v3171
        %v3216 = vsel %vm492, %v3169, %v3170
        %v3217 = vsel %vm492, %v3168, %v3169
        %v3218 = vsel %vm492, %v3167, %v3168
        %v3219 = vsel %vm492, %v3166, %v3167
        %v3220 = vsel %vm492, %v3165, %v3166
        %v3221 = vsel %vm492, %v3164, %v3165
        %v3222 = vsel %vm492, %v3163, %v3164
        %v3223 = vsel %vm492, %v3162, %v3163
        %v3224 = vsel %vm492, %v3161, %v3162
        %v3225 = vsel %vm492, %v3160, %v3161
        %v3226 = vsel %vm492, %v3159, %v3160
        %v3227 = vsel %vm492, %v3158, %v3159
        %v3228 = vsel %vm492, %v3157, %v3158
        %v3229 = vsel %vm492, %v3156, %v3157
        %v3230 = vsel %vm492, %v3155, %v3156
        %v3231 = vsel %vm492, %v3154, %v3155
        %v3232 = vsel %vm492, %v3153, %v3154
        %v3233 = vsel %vm492, %v3152, %v3153
        %v3234 = vsel %vm492, %v3151, %v3152
        %v3235 = vsel %vm492, %v3150, %v3151
        %v3236 = vsel %vm492, %v3149, %v3150
        %v3237 = vsel %vm492, %v3148, %v3149
        %v3238 = vsel %vm492, %v3147, %v3148
        %v3239 = vsel %vm492, %v3146, %v3147
        %v3240 = vsel %vm492, %v3145, %v3146
        %v3241 = vsel %vm492, 0.0, %v3145
        %v3242 = vpack.c.bf16 0.0, 0.0
        %v3243 = vpack.c.bf16 %v3144, 0.0
        %v3244 = vpack.c.bf16 %v3142, %v3143
        %v3245 = vpack.c.bf16 %v3140, %v3141
        %v3246 = vpack.c.bf16 %v3138, %v3139
        %v3247 = vpack.c.bf16 %v3136, %v3137
        %v3248 = vpack.c.bf16 %v3134, %v3135
        %v3249 = vpack.c.bf16 %v3132, %v3133
        %v3250 = vpack.c.bf16 %v3130, %v3131
        %v3251 = vpack.c.bf16 %v3128, %v3129
        %v3252 = vpack.c.bf16 %v3126, %v3127
        %v3253 = vpack.c.bf16 %v3124, %v3125
        %v3254 = vpack.c.bf16 %v3122, %v3123
        %v3255 = vpack.c.bf16 %v3120, %v3121
        %v3256 = vpack.c.bf16 %v3118, %v3119
        %v3257 = vpack.c.bf16 %v3116, %v3117
        %v3258 = vpack.c.bf16 %v3114, %v3115
        %v3259 = vpack.c.bf16 %v3112, %v3113
        %v3260 = vpack.c.bf16 %v3110, %v3111
        %v3261 = vpack.c.bf16 %v3108, %v3109
        %v3262 = vpack.c.bf16 %v3106, %v3107
        %v3263 = vpack.c.bf16 %v3104, %v3105
        %v3264 = vpack.c.bf16 %v3102, %v3103
        %v3265 = vpack.c.bf16 %v3100, %v3101
        %v3266 = vpack.c.bf16 0.0, 0.0
        %v3267 = vpack.c.bf16 %v3000, 0.0
        %v3268 = vpack.c.bf16 %v3002, %v3001
        %v3269 = vpack.c.bf16 %v3004, %v3003
        %v3270 = vpack.c.bf16 %v3006, %v3005
        %v3271 = vpack.c.bf16 %v3008, %v3007
        %v3272 = vpack.c.bf16 %v3010, %v3009
        %v3273 = vpack.c.bf16 %v3012, %v3011
        %v3274 = vpack.c.bf16 %v3014, %v3013
        %v3275 = vpack.c.bf16 %v3016, %v3015
        %v3276 = vpack.c.bf16 %v3018, %v3017
        %v3277 = vpack.c.bf16 %v3020, %v3019
        %v3278 = vpack.c.bf16 %v3022, %v3021
        %v3279 = vpack.c.bf16 %v3024, %v3023
        %v3280 = vpack.c.bf16 %v3026, %v3025
        %v3281 = vpack.c.bf16 %v3028, %v3027
        %v3282 = vpack.c.bf16 %v3030, %v3029
        %v3283 = vpack.c.bf16 %v3032, %v3031
        %v3284 = vpack.c.bf16 %v3034, %v3033
        %v3285 = vpack.c.bf16 %v3036, %v3035
        %v3286 = vpack.c.bf16 %v3038, %v3037
        %v3287 = vpack.c.bf16 %v3040, %v3039
        %v3288 = vpack.c.bf16 %v3042, %v3041
        %v3289 = vpack.c.bf16 %v3044, %v3043
        %v3290 = vpack.c.bf16 0.0, 0.0
        %v3291 = vpack.c.bf16 %v3240, %v3241
        %v3292 = vpack.c.bf16 %v3238, %v3239
        %v3293 = vpack.c.bf16 %v3236, %v3237
        %v3294 = vpack.c.bf16 %v3234, %v3235
        %v3295 = vpack.c.bf16 %v3232, %v3233
        %v3296 = vpack.c.bf16 %v3230, %v3231
        %v3297 = vpack.c.bf16 %v3228, %v3229
        %v3298 = vpack.c.bf16 %v3226, %v3227
        %v3299 = vpack.c.bf16 %v3224, %v3225
        %v3300 = vpack.c.bf16 %v3222, %v3223
        %v3301 = vpack.c.bf16 %v3220, %v3221
        %v3302 = vpack.c.bf16 %v3218, %v3219
        %v3303 = vpack.c.bf16 %v3216, %v3217
        %v3304 = vpack.c.bf16 %v3214, %v3215
        %v3305 = vpack.c.bf16 %v3212, %v3213
        %v3306 = vpack.c.bf16 %v3210, %v3211
        %v3307 = vpack.c.bf16 %v3208, %v3209
        %v3308 = vpack.c.bf16 %v3206, %v3207
        %v3309 = vpack.c.bf16 %v3204, %v3205
        %v3310 = vpack.c.bf16 %v3202, %v3203
        %v3311 = vpack.c.bf16 %v3200, %v3201
        %v3312 = vpack.c.bf16 %v3198, %v3199
        %v3313 = vpack.c.bf16 %v3196, %v3197
        %v3314 = vpack.c.bf16 %v3143, %v3144
        %v3315 = vpack.c.bf16 %v3141, %v3142
        %v3316 = vpack.c.bf16 %v3139, %v3140
        %v3317 = vpack.c.bf16 %v3137, %v3138
        %v3318 = vpack.c.bf16 %v3135, %v3136
        %v3319 = vpack.c.bf16 %v3133, %v3134
        %v3320 = vpack.c.bf16 %v3131, %v3132
        %v3321 = vpack.c.bf16 %v3129, %v3130
        %v3322 = vpack.c.bf16 %v3127, %v3128
        %v3323 = vpack.c.bf16 %v3125, %v3126
        %v3324 = vpack.c.bf16 %v3123, %v3124
        %v3325 = vpack.c.bf16 %v3121, %v3122
        %v3326 = vpack.c.bf16 %v3119, %v3120
        %v3327 = vpack.c.bf16 %v3117, %v3118
        %v3328 = vpack.c.bf16 %v3115, %v3116
        %v3329 = vpack.c.bf16 %v3113, %v3114
        %v3330 = vpack.c.bf16 %v3111, %v3112
        %v3331 = vpack.c.bf16 %v3109, %v3110
        %v3332 = vpack.c.bf16 %v3107, %v3108
        %v3333 = vpack.c.bf16 %v3105, %v3106
        %v3334 = vpack.c.bf16 %v3103, %v3104
        %v3335 = vpack.c.bf16 %v3101, %v3102
        %v3336 = vpack.c.bf16 %v3099, %v3100
        %v3337 = vpack.c.bf16 %v3097, %v3098
        %v3338 = vpack.c.bf16 %v3001, %v3000
        %v3339 = vpack.c.bf16 %v3003, %v3002
        %v3340 = vpack.c.bf16 %v3005, %v3004
        %v3341 = vpack.c.bf16 %v3007, %v3006
        %v3342 = vpack.c.bf16 %v3009, %v3008
        %v3343 = vpack.c.bf16 %v3011, %v3010
        %v3344 = vpack.c.bf16 %v3013, %v3012
        %v3345 = vpack.c.bf16 %v3015, %v3014
        %v3346 = vpack.c.bf16 %v3017, %v3016
        %v3347 = vpack.c.bf16 %v3019, %v3018
        %v3348 = vpack.c.bf16 %v3021, %v3020
        %v3349 = vpack.c.bf16 %v3023, %v3022
        %v3350 = vpack.c.bf16 %v3025, %v3024
        %v3351 = vpack.c.bf16 %v3027, %v3026
        %v3352 = vpack.c.bf16 %v3029, %v3028
        %v3353 = vpack.c.bf16 %v3031, %v3030
        %v3354 = vpack.c.bf16 %v3033, %v3032
        %v3355 = vpack.c.bf16 %v3035, %v3034
        %v3356 = vpack.c.bf16 %v3037, %v3036
        %v3357 = vpack.c.bf16 %v3039, %v3038
        %v3358 = vpack.c.bf16 %v3041, %v3040
        %v3359 = vpack.c.bf16 %v3043, %v3042
        %v3360 = vpack.c.bf16 %v3045, %v3044
        %v3361 = vpack.c.bf16 %v3047, %v3046
        %v3362 = vpack.c.bf16 %v3239, %v3240
        %v3363 = vpack.c.bf16 %v3237, %v3238
        %v3364 = vpack.c.bf16 %v3235, %v3236
        %v3365 = vpack.c.bf16 %v3233, %v3234
        %v3366 = vpack.c.bf16 %v3231, %v3232
        %v3367 = vpack.c.bf16 %v3229, %v3230
        %v3368 = vpack.c.bf16 %v3227, %v3228
        %v3369 = vpack.c.bf16 %v3225, %v3226
        %v3370 = vpack.c.bf16 %v3223, %v3224
        %v3371 = vpack.c.bf16 %v3221, %v3222
        %v3372 = vpack.c.bf16 %v3219, %v3220
        %v3373 = vpack.c.bf16 %v3217, %v3218
        %v3374 = vpack.c.bf16 %v3215, %v3216
        %v3375 = vpack.c.bf16 %v3213, %v3214
        %v3376 = vpack.c.bf16 %v3211, %v3212
        %v3377 = vpack.c.bf16 %v3209, %v3210
        %v3378 = vpack.c.bf16 %v3207, %v3208
        %v3379 = vpack.c.bf16 %v3205, %v3206
        %v3380 = vpack.c.bf16 %v3203, %v3204
        %v3381 = vpack.c.bf16 %v3201, %v3202
        %v3382 = vpack.c.bf16 %v3199, %v3200
        %v3383 = vpack.c.bf16 %v3197, %v3198
        %v3384 = vpack.c.bf16 %v3195, %v3196
        %v3385 = vpack.c.bf16 %v3193, %v3194
        %v3386 = vpack.c.bf16 %v3098, %v3099
        %v3387 = vpack.c.bf16 %v3096, %v3097
        %v3388 = vpack.c.bf16 %v3046, %v3045
        %v3389 = vpack.c.bf16 0.0, %v3047
        %v3390 = vpack.c.bf16 %v3194, %v3195
        %v3391 = vpack.c.bf16 0.0, %v3193
        %v3392 = vld [vmem:[#allocation7] sm:$0xf]
        %v3393 = vld [vmem:[#allocation7 + $0x4] sm:$0xf]
        %v3394 = vld [vmem:[#allocation7 + $0x8] sm:$0xf]
        %v3395 = vld [vmem:[#allocation7 + $0xc] sm:$0xf]
        %v3396 = vld [vmem:[#allocation7 + $0x10] sm:$0xf]
        %v3397 = vld [vmem:[#allocation7 + $0x14] sm:$0xf]
        %v3398 = vld [vmem:[#allocation7 + $0x18] sm:$0xf]
        %v3399 = vld [vmem:[#allocation7 + $0x1c] sm:$0xf]
        %v3400 = vld [vmem:[#allocation7 + $0x20] sm:$0xf]
        %v3401 = vld [vmem:[#allocation7 + $0x24] sm:$0xf]
        %v3402 = vld [vmem:[#allocation7 + $0x28] sm:$0xf]
        %v3403 = vld [vmem:[#allocation7 + $0x2c] sm:$0xf]
        %v3404 = vld [vmem:[#allocation7 + $0x30] sm:$0xf]
        %v3405 = vld [vmem:[#allocation7 + $0x34] sm:$0xf]
        %v3406 = vld [vmem:[#allocation7 + $0x38] sm:$0xf]
        %v3407 = vld [vmem:[#allocation7 + $0x3c] sm:$0xf]
        %v3408 = vld [vmem:[#allocation7 + $0x40] sm:$0xf]
        %v3409 = vld [vmem:[#allocation7 + $0x44] sm:$0xf]
        %v3410 = vld [vmem:[#allocation7 + $0x48] sm:$0xf]
        %v3411 = vld [vmem:[#allocation7 + $0x4c] sm:$0xf]
        %v3412 = vld [vmem:[#allocation7 + $0x50] sm:$0xf]
        %v3413 = vld [vmem:[#allocation7 + $0x54] sm:$0xf]
        %v3414 = vld [vmem:[#allocation7 + $0x58] sm:$0xf]
        %v3415 = vld [vmem:[#allocation7 + $0x5c] sm:$0xf]
        %v3416 = vld [vmem:[#allocation7 + $0x60] sm:$0xf]
        %v3417 = vld [vmem:[#allocation7 + $0x64] sm:$0xf]
        %v3418 = vld [vmem:[#allocation7 + $0x68] sm:$0xf]
        %v3419 = vld [vmem:[#allocation7 + $0x6c] sm:$0xf]
        %v3420 = vld [vmem:[#allocation7 + $0x70] sm:$0xf]
        %v3421 = vld [vmem:[#allocation7 + $0x74] sm:$0xf]
        %v3422 = vld [vmem:[#allocation7 + $0x78] sm:$0xf]
        %v3423 = vld [vmem:[#allocation7 + $0x7c] sm:$0xf]
        %v3424 = vld [vmem:[#allocation7 + $0x80] sm:$0xf]
        %v3425 = vld [vmem:[#allocation7 + $0x84] sm:$0xf]
        %v3426 = vld [vmem:[#allocation7 + $0x88] sm:$0xf]
        %v3427 = vld [vmem:[#allocation7 + $0x8c] sm:$0xf]
        %v3428 = vld [vmem:[#allocation7 + $0x90] sm:$0xf]
        %v3429 = vld [vmem:[#allocation7 + $0x94] sm:$0xf]
        %v3430 = vld [vmem:[#allocation7 + $0x98] sm:$0xf]
        %v3431 = vld [vmem:[#allocation7 + $0x9c] sm:$0xf]
        %v3432 = vld [vmem:[#allocation7 + $0xa0] sm:$0xf]
        %v3433 = vld [vmem:[#allocation7 + $0xa4] sm:$0xf]
        %v3434 = vld [vmem:[#allocation7 + $0xa8] sm:$0xf]
        %v3435 = vld [vmem:[#allocation7 + $0xac] sm:$0xf]
        %v3436 = vld [vmem:[#allocation7 + $0xb0] sm:$0xf]
        %v3437 = vld [vmem:[#allocation7 + $0xb4] sm:$0xf]
        %v3438 = vld [vmem:[#allocation7 + $0xb8] sm:$0xf]
        %v3439 = vld [vmem:[#allocation7 + $0xbc] sm:$0xf]
        %v3440 = vld [vmem:[#allocation7 + $0xc0] sm:$0xf]
        %v3441 = vld [vmem:[#allocation7 + $0xc4] sm:$0xf]
        %v3442 = vld [vmem:[#allocation7 + $0xc8] sm:$0xf]
        %v3443 = vld [vmem:[#allocation7 + $0xcc] sm:$0xf]
        %v3444 = vld [vmem:[#allocation7 + $0xd0] sm:$0xf]
        %v3445 = vld [vmem:[#allocation7 + $0xd4] sm:$0xf]
        %v3446 = vld [vmem:[#allocation7 + $0xd8] sm:$0xf]
        %v3447 = vld [vmem:[#allocation7 + $0xdc] sm:$0xf]
        %v3448 = vld [vmem:[#allocation7 + $0xe0] sm:$0xf]
        %v3449 = vld [vmem:[#allocation7 + $0xe4] sm:$0xf]
        %v3450 = vld [vmem:[#allocation7 + $0xe8] sm:$0xf]
        %v3451 = vld [vmem:[#allocation7 + $0xec] sm:$0xf]
        %v3452 = vld [vmem:[#allocation7 + $0xf0] sm:$0xf]
        %v3453 = vld [vmem:[#allocation7 + $0xf4] sm:$0xf]
        %v3454 = vld [vmem:[#allocation7 + $0xf8] sm:$0xf]
        %v3455 = vld [vmem:[#allocation7 + $0xfc] sm:$0xf]
        %v3456 = vld [vmem:[#allocation7 + $0x100] sm:$0xf]
        %v3457 = vld [vmem:[#allocation7 + $0x104] sm:$0xf]
        %v3458 = vld [vmem:[#allocation7 + $0x108] sm:$0xf]
        %v3459 = vld [vmem:[#allocation7 + $0x10c] sm:$0xf]
        %v3460 = vld [vmem:[#allocation7 + $0x110] sm:$0xf]
        %v3461 = vld [vmem:[#allocation7 + $0x114] sm:$0xf]
        %v3462 = vld [vmem:[#allocation7 + $0x118] sm:$0xf]
        %v3463 = vld [vmem:[#allocation7 + $0x11c] sm:$0xf]
        %v3464 = vld [vmem:[#allocation7 + $0x120] sm:$0xf]
        %v3465 = vld [vmem:[#allocation7 + $0x124] sm:$0xf]
        %v3466 = vld [vmem:[#allocation7 + $0x128] sm:$0xf]
        %v3467 = vld [vmem:[#allocation7 + $0x12c] sm:$0xf]
        %v3468 = vld [vmem:[#allocation7 + $0x130] sm:$0xf]
        %v3469 = vld [vmem:[#allocation7 + $0x134] sm:$0xf]
        %v3470 = vld [vmem:[#allocation7 + $0x138] sm:$0xf]
        %v3471 = vld [vmem:[#allocation7 + $0x13c] sm:$0xf]
        %v3472 = vld [vmem:[#allocation7 + $0x140] sm:$0xf]
        %v3473 = vld [vmem:[#allocation7 + $0x144] sm:$0xf]
        %v3474 = vld [vmem:[#allocation7 + $0x148] sm:$0xf]
        %v3475 = vld [vmem:[#allocation7 + $0x14c] sm:$0xf]
        %v3476 = vld [vmem:[#allocation7 + $0x150] sm:$0xf]
        %v3477 = vld [vmem:[#allocation7 + $0x154] sm:$0xf]
        %v3478 = vld [vmem:[#allocation7 + $0x158] sm:$0xf]
        %v3479 = vld [vmem:[#allocation7 + $0x15c] sm:$0xf]
        %v3480 = vld [vmem:[#allocation7 + $0x160] sm:$0xf]
        %v3481 = vld [vmem:[#allocation7 + $0x164] sm:$0xf]
        %v3482 = vld [vmem:[#allocation7 + $0x168] sm:$0xf]
        %v3483 = vld [vmem:[#allocation7 + $0x16c] sm:$0xf]
        %v3484 = vld [vmem:[#allocation7 + $0x170] sm:$0xf]
        %v3485 = vld [vmem:[#allocation7 + $0x174] sm:$0xf]
        %v3486 = vld [vmem:[#allocation7 + $0x178] sm:$0xf]
        %v3487 = vld [vmem:[#allocation7 + $0x17c] sm:$0xf]
        %v3488 = vld [vmem:[#allocation7 + $0x180] sm:$0xf]
        %v3489 = vld [vmem:[#allocation7 + $0x184] sm:$0xf]
        %v3490 = vld [vmem:[#allocation7 + $0x188] sm:$0xf]
        %v3491 = vld [vmem:[#allocation7 + $0x18c] sm:$0xf]
        %v3492 = vld [vmem:[#allocation7 + $0x190] sm:$0xf]
        %v3493 = vld [vmem:[#allocation7 + $0x194] sm:$0xf]
        %v3494 = vld [vmem:[#allocation7 + $0x198] sm:$0xf]
        %v3495 = vld [vmem:[#allocation7 + $0x19c] sm:$0xf]
        %v3496 = vld [vmem:[#allocation7 + $0x1a0] sm:$0xf]
        %v3497 = vld [vmem:[#allocation7 + $0x1a4] sm:$0xf]
        %v3498 = vld [vmem:[#allocation7 + $0x1a8] sm:$0xf]
        %v3499 = vld [vmem:[#allocation7 + $0x1ac] sm:$0xf]
        %v3500 = vld [vmem:[#allocation7 + $0x1b0] sm:$0xf]
        %v3501 = vld [vmem:[#allocation7 + $0x1b4] sm:$0xf]
        %v3502 = vld [vmem:[#allocation7 + $0x1b8] sm:$0xf]
        %v3503 = vld [vmem:[#allocation7 + $0x1bc] sm:$0xf]
        %v3504 = vld [vmem:[#allocation7 + $0x1c0] sm:$0xf]
        %v3505 = vld [vmem:[#allocation7 + $0x1c4] sm:$0xf]
        %v3506 = vld [vmem:[#allocation7 + $0x1c8] sm:$0xf]
        %v3507 = vld [vmem:[#allocation7 + $0x1cc] sm:$0xf]
        %v3508 = vld [vmem:[#allocation7 + $0x1d0] sm:$0xf]
        %v3509 = vld [vmem:[#allocation7 + $0x1d4] sm:$0xf]
        %v3510 = vld [vmem:[#allocation7 + $0x1d8] sm:$0xf]
        %v3511 = vld [vmem:[#allocation7 + $0x1dc] sm:$0xf]
        %v3512 = vld [vmem:[#allocation7 + $0x1e0] sm:$0xf]
        %v3513 = vld [vmem:[#allocation7 + $0x1e4] sm:$0xf]
        %v3514 = vld [vmem:[#allocation7 + $0x1e8] sm:$0xf]
        %v3515 = vld [vmem:[#allocation7 + $0x1ec] sm:$0xf]
        %v3516 = vld [vmem:[#allocation7 + $0x1f0] sm:$0xf]
        %v3517 = vld [vmem:[#allocation7 + $0x1f4] sm:$0xf]
        %v3518 = vld [vmem:[#allocation7 + $0x1f8] sm:$0xf]
        %v3519 = vld [vmem:[#allocation7 + $0x1fc] sm:$0xf]
        %v3520 = vld [vmem:[#allocation7 + $0x200] sm:$0xf]
        %v3521 = vld [vmem:[#allocation7 + $0x204] sm:$0xf]
        %v3522 = vld [vmem:[#allocation7 + $0x208] sm:$0xf]
        %v3523 = vld [vmem:[#allocation7 + $0x20c] sm:$0xf]
        %v3524 = vld [vmem:[#allocation7 + $0x210] sm:$0xf]
        %v3525 = vld [vmem:[#allocation7 + $0x214] sm:$0xf]
        %v3526 = vld [vmem:[#allocation7 + $0x218] sm:$0xf]
        %v3527 = vld [vmem:[#allocation7 + $0x21c] sm:$0xf]
        %v3528 = vld [vmem:[#allocation7 + $0x220] sm:$0xf]
        %v3529 = vld [vmem:[#allocation7 + $0x224] sm:$0xf]
        %v3530 = vld [vmem:[#allocation7 + $0x228] sm:$0xf]
        %v3531 = vld [vmem:[#allocation7 + $0x22c] sm:$0xf]
        %v3532 = vld [vmem:[#allocation7 + $0x230] sm:$0xf]
        %v3533 = vld [vmem:[#allocation7 + $0x234] sm:$0xf]
        %v3534 = vld [vmem:[#allocation7 + $0x238] sm:$0xf]
        %v3535 = vld [vmem:[#allocation7 + $0x23c] sm:$0xf]
        %v3536 = vld [vmem:[%s4] sm:$0x1]
        %v3538 = vlaneseq
        %v3539 = vshrl.u32 %v3538, 7
        %v3540 = vsub.s32 0, %v3539
        %v3541 = vrot.slane %v3536, %v3540
        %v3687 = vunpack.c.l.b16 %v3392
        %v3688 = vunpack.c.l.b16 %v3393
        %v3689 = vunpack.c.l.b16 %v3394
        %v3690 = vunpack.c.l.b16 %v3395
        %v3691 = vunpack.c.l.b16 %v3396
        %v3692 = vunpack.c.l.b16 %v3397
        %v3693 = vunpack.c.l.b16 %v3398
        %v3694 = vunpack.c.l.b16 %v3399
        %v3695 = vunpack.c.l.b16 %v3400
        %v3696 = vunpack.c.l.b16 %v3401
        %v3697 = vunpack.c.l.b16 %v3402
        %v3698 = vunpack.c.l.b16 %v3403
        %v3699 = vunpack.c.l.b16 %v3404
        %v3700 = vunpack.c.l.b16 %v3405
        %v3701 = vunpack.c.l.b16 %v3406
        %v3702 = vunpack.c.l.b16 %v3407
        %v3703 = vunpack.c.l.b16 %v3408
        %v3704 = vunpack.c.l.b16 %v3409
        %v3705 = vunpack.c.l.b16 %v3410
        %v3706 = vunpack.c.l.b16 %v3411
        %v3707 = vunpack.c.l.b16 %v3412
        %v3708 = vunpack.c.l.b16 %v3413
        %v3709 = vunpack.c.l.b16 %v3414
        %v3710 = vunpack.c.l.b16 %v3415
        %v3711 = vunpack.c.l.b16 %v3416
        %v3712 = vunpack.c.l.b16 %v3417
        %v3713 = vunpack.c.l.b16 %v3418
        %v3714 = vunpack.c.l.b16 %v3419
        %v3715 = vunpack.c.l.b16 %v3420
        %v3716 = vunpack.c.l.b16 %v3421
        %v3717 = vunpack.c.l.b16 %v3422
        %v3718 = vunpack.c.l.b16 %v3423
        %v3719 = vunpack.c.l.b16 %v3424
        %v3720 = vunpack.c.l.b16 %v3425
        %v3721 = vunpack.c.l.b16 %v3426
        %v3722 = vunpack.c.l.b16 %v3427
        %v3723 = vunpack.c.l.b16 %v3428
        %v3724 = vunpack.c.l.b16 %v3429
        %v3725 = vunpack.c.l.b16 %v3430
        %v3726 = vunpack.c.l.b16 %v3431
        %v3727 = vunpack.c.l.b16 %v3432
        %v3728 = vunpack.c.l.b16 %v3433
        %v3729 = vunpack.c.l.b16 %v3434
        %v3730 = vunpack.c.l.b16 %v3435
        %v3731 = vunpack.c.l.b16 %v3436
        %v3732 = vunpack.c.l.b16 %v3437
        %v3733 = vunpack.c.l.b16 %v3438
        %v3734 = vunpack.c.l.b16 %v3439
        %v3735 = vunpack.c.l.b16 %v3440
        %v3736 = vunpack.c.l.b16 %v3441
        %v3737 = vunpack.c.l.b16 %v3442
        %v3738 = vunpack.c.l.b16 %v3443
        %v3739 = vunpack.c.l.b16 %v3444
        %v3740 = vunpack.c.l.b16 %v3445
        %v3741 = vunpack.c.l.b16 %v3446
        %v3742 = vunpack.c.l.b16 %v3447
        %v3743 = vunpack.c.l.b16 %v3448
        %v3744 = vunpack.c.l.b16 %v3449
        %v3745 = vunpack.c.l.b16 %v3450
        %v3746 = vunpack.c.l.b16 %v3451
        %v3747 = vunpack.c.l.b16 %v3452
        %v3748 = vunpack.c.l.b16 %v3453
        %v3749 = vunpack.c.l.b16 %v3454
        %v3750 = vunpack.c.l.b16 %v3455
        %v3751 = vunpack.c.l.b16 %v3456
        %v3752 = vunpack.c.l.b16 %v3457
        %v3753 = vunpack.c.l.b16 %v3458
        %v3754 = vunpack.c.l.b16 %v3459
        %v3755 = vunpack.c.l.b16 %v3460
        %v3756 = vunpack.c.l.b16 %v3461
        %v3757 = vunpack.c.l.b16 %v3462
        %v3758 = vunpack.c.l.b16 %v3463
        %v3759 = vunpack.c.l.b16 %v3464
        %v3760 = vunpack.c.l.b16 %v3465
        %v3761 = vunpack.c.l.b16 %v3466
        %v3762 = vunpack.c.l.b16 %v3467
        %v3763 = vunpack.c.l.b16 %v3468
        %v3764 = vunpack.c.l.b16 %v3469
        %v3765 = vunpack.c.l.b16 %v3470
        %v3766 = vunpack.c.l.b16 %v3471
        %v3767 = vunpack.c.l.b16 %v3472
        %v3768 = vunpack.c.l.b16 %v3473
        %v3769 = vunpack.c.l.b16 %v3474
        %v3770 = vunpack.c.l.b16 %v3475
        %v3771 = vunpack.c.l.b16 %v3476
        %v3772 = vunpack.c.l.b16 %v3477
        %v3773 = vunpack.c.l.b16 %v3478
        %v3774 = vunpack.c.l.b16 %v3479
        %v3775 = vunpack.c.l.b16 %v3480
        %v3776 = vunpack.c.l.b16 %v3481
        %v3777 = vunpack.c.l.b16 %v3482
        %v3778 = vunpack.c.l.b16 %v3483
        %v3779 = vunpack.c.l.b16 %v3484
        %v3780 = vunpack.c.l.b16 %v3485
        %v3781 = vunpack.c.l.b16 %v3486
        %v3782 = vunpack.c.l.b16 %v3487
        %v3783 = vunpack.c.l.b16 %v3488
        %v3784 = vunpack.c.l.b16 %v3489
        %v3785 = vunpack.c.l.b16 %v3490
        %v3786 = vunpack.c.l.b16 %v3491
        %v3787 = vunpack.c.l.b16 %v3492
        %v3788 = vunpack.c.l.b16 %v3493
        %v3789 = vunpack.c.l.b16 %v3494
        %v3790 = vunpack.c.l.b16 %v3495
        %v3791 = vunpack.c.l.b16 %v3496
        %v3792 = vunpack.c.l.b16 %v3497
        %v3793 = vunpack.c.l.b16 %v3498
        %v3794 = vunpack.c.l.b16 %v3499
        %v3795 = vunpack.c.l.b16 %v3500
        %v3796 = vunpack.c.l.b16 %v3501
        %v3797 = vunpack.c.l.b16 %v3502
        %v3798 = vunpack.c.l.b16 %v3503
        %v3799 = vunpack.c.l.b16 %v3504
        %v3800 = vunpack.c.l.b16 %v3505
        %v3801 = vunpack.c.l.b16 %v3506
        %v3802 = vunpack.c.l.b16 %v3507
        %v3803 = vunpack.c.l.b16 %v3508
        %v3804 = vunpack.c.l.b16 %v3509
        %v3805 = vunpack.c.l.b16 %v3510
        %v3806 = vunpack.c.l.b16 %v3511
        %v3807 = vunpack.c.l.b16 %v3512
        %v3808 = vunpack.c.l.b16 %v3513
        %v3809 = vunpack.c.l.b16 %v3514
        %v3810 = vunpack.c.l.b16 %v3515
        %v3811 = vunpack.c.l.b16 %v3516
        %v3812 = vunpack.c.l.b16 %v3517
        %v3813 = vunpack.c.l.b16 %v3518
        %v3814 = vunpack.c.l.b16 %v3519
        %v3815 = vunpack.c.l.b16 %v3520
        %v3816 = vunpack.c.l.b16 %v3521
        %v3817 = vunpack.c.l.b16 %v3522
        %v3818 = vunpack.c.l.b16 %v3523
        %v3819 = vunpack.c.l.b16 %v3524
        %v3820 = vunpack.c.l.b16 %v3525
        %v3821 = vunpack.c.l.b16 %v3526
        %v3822 = vunpack.c.l.b16 %v3527
        %v3823 = vunpack.c.l.b16 %v3528
        %v3824 = vunpack.c.l.b16 %v3529
        %v3825 = vunpack.c.l.b16 %v3530
        %v3826 = vunpack.c.l.b16 %v3531
        %v3827 = vunpack.c.l.b16 %v3532
        %v3828 = vunpack.c.l.b16 %v3533
        %v3829 = vunpack.c.l.b16 %v3534
        %v3830 = vunpack.c.l.b16 %v3535
        %v3831 = vpack.c.b16 %v3688, %v3687
        %v3832 = vpack.c.b16 %v3690, %v3689
        %v3833 = vpack.c.b16 %v3692, %v3691
        %v3834 = vpack.c.b16 %v3694, %v3693
        %v3835 = vpack.c.b16 %v3696, %v3695
        %v3836 = vpack.c.b16 %v3698, %v3697
        %v3837 = vpack.c.b16 %v3700, %v3699
        %v3838 = vpack.c.b16 %v3702, %v3701
        %v3839 = vpack.c.b16 %v3704, %v3703
        %v3840 = vpack.c.b16 %v3706, %v3705
        %v3841 = vpack.c.b16 %v3708, %v3707
        %v3842 = vpack.c.b16 %v3710, %v3709
        %v3843 = vpack.c.b16 %v3712, %v3711
        %v3844 = vpack.c.b16 %v3714, %v3713
        %v3845 = vpack.c.b16 %v3716, %v3715
        %v3846 = vpack.c.b16 %v3718, %v3717
        %v3847 = vpack.c.b16 %v3720, %v3719
        %v3848 = vpack.c.b16 %v3722, %v3721
        %v3849 = vpack.c.b16 %v3724, %v3723
        %v3850 = vpack.c.b16 %v3726, %v3725
        %v3851 = vpack.c.b16 %v3728, %v3727
        %v3852 = vpack.c.b16 %v3730, %v3729
        %v3853 = vpack.c.b16 %v3732, %v3731
        %v3854 = vpack.c.b16 %v3734, %v3733
        %v3855 = vpack.c.b16 %v3736, %v3735
        %v3856 = vpack.c.b16 %v3738, %v3737
        %v3857 = vpack.c.b16 %v3740, %v3739
        %v3858 = vpack.c.b16 %v3742, %v3741
        %v3859 = vpack.c.b16 %v3744, %v3743
        %v3860 = vpack.c.b16 %v3746, %v3745
        %v3861 = vpack.c.b16 %v3748, %v3747
        %v3862 = vpack.c.b16 %v3750, %v3749
        %v3863 = vpack.c.b16 %v3752, %v3751
        %v3864 = vpack.c.b16 %v3754, %v3753
        %v3865 = vpack.c.b16 %v3756, %v3755
        %v3866 = vpack.c.b16 %v3758, %v3757
        %v3867 = vpack.c.b16 %v3760, %v3759
        %v3868 = vpack.c.b16 %v3762, %v3761
        %v3869 = vpack.c.b16 %v3764, %v3763
        %v3870 = vpack.c.b16 %v3766, %v3765
        %v3871 = vpack.c.b16 %v3768, %v3767
        %v3872 = vpack.c.b16 %v3770, %v3769
        %v3873 = vpack.c.b16 %v3772, %v3771
        %v3874 = vpack.c.b16 %v3774, %v3773
        %v3875 = vpack.c.b16 %v3776, %v3775
        %v3876 = vpack.c.b16 %v3778, %v3777
        %v3877 = vpack.c.b16 %v3780, %v3779
        %v3878 = vpack.c.b16 %v3782, %v3781
        %v3879 = vpack.c.b16 %v3784, %v3783
        %v3880 = vpack.c.b16 %v3786, %v3785
        %v3881 = vpack.c.b16 %v3788, %v3787
        %v3882 = vpack.c.b16 %v3790, %v3789
        %v3883 = vpack.c.b16 %v3792, %v3791
        %v3884 = vpack.c.b16 %v3794, %v3793
        %v3885 = vpack.c.b16 %v3796, %v3795
        %v3886 = vpack.c.b16 %v3798, %v3797
        %v3887 = vpack.c.b16 %v3800, %v3799
        %v3888 = vpack.c.b16 %v3802, %v3801
        %v3889 = vpack.c.b16 %v3804, %v3803
        %v3890 = vpack.c.b16 %v3806, %v3805
        %v3891 = vpack.c.b16 %v3808, %v3807
        %v3892 = vpack.c.b16 %v3810, %v3809
        %v3893 = vpack.c.b16 %v3812, %v3811
        %v3894 = vpack.c.b16 %v3814, %v3813
        %v3895 = vpack.c.b16 %v3816, %v3815
        %v3896 = vpack.c.b16 %v3818, %v3817
        %v3897 = vpack.c.b16 %v3820, %v3819
        %v3898 = vpack.c.b16 %v3822, %v3821
        %v3899 = vpack.c.b16 %v3824, %v3823
        %v3900 = vpack.c.b16 %v3826, %v3825
        %v3901 = vpack.c.b16 %v3828, %v3827
        %v3902 = vpack.c.b16 %v3830, %v3829
        %3975 = vmatprep.subr.bf16.mxu0 0
        %3976 = vmatpush1.bf16.msra.mxu0 %v3838
        %3977 = vmatprep.subr.bf16.mxu0 0
        %3978 = vmatpush1.bf16.msra.mxu0 %v3837
        %3979 = vmatprep.subr.bf16.mxu0 0
        %3980 = vmatpush1.bf16.msra.mxu0 %v3836
        %3981 = vmatprep.subr.bf16.mxu0 0
        %3982 = vmatpush1.bf16.msra.mxu0 %v3835
        %3983 = vmatprep.subr.bf16.mxu0 0
        %3984 = vmatpush1.bf16.msra.mxu0 %v3834
        %3985 = vmatprep.subr.bf16.mxu0 0
        %3986 = vmatpush1.bf16.msra.mxu0 %v3833
        %3987 = vmatprep.subr.bf16.mxu0 0
        %3988 = vmatpush1.bf16.msra.mxu0 %v3832
        %3989 = vmatprep.subr.bf16.mxu0 0
        %3990 = vmatpush1.bf16.msra.mxu0 %v3831
        %3991 = vmatprep.subr.bf16.mxu0 0
        %3992 = vmatpush2.bf16.msra.mxu0 %v3846
        %3993 = vmatprep.subr.bf16.mxu0 0
        %3994 = vmatpush2.bf16.msra.mxu0 %v3845
        %3995 = vmatprep.subr.bf16.mxu0 0
        %3996 = vmatpush2.bf16.msra.mxu0 %v3844
        %3997 = vmatprep.subr.bf16.mxu0 0
        %3998 = vmatpush2.bf16.msra.mxu0 %v3843
        %3999 = vmatprep.subr.bf16.mxu0 0
        %4000 = vmatpush2.bf16.msra.mxu0 %v3842
        %4001 = vmatprep.subr.bf16.mxu0 0
        %4002 = vmatpush2.bf16.msra.mxu0 %v3841
        %4003 = vmatprep.subr.bf16.mxu0 0
        %4004 = vmatpush2.bf16.msra.mxu0 %v3840
        %4005 = vmatprep.subr.bf16.mxu0 0
        %4006 = vmatpush2.bf16.msra.mxu0 %v3839
        %4007 = vmatprep.mubr.bf16.mxu0 %v3266
        %4008 = vmatmul.mubr.bf16.gmra.mxu0 %v3242
        %v4009 = vpop.f32.mrf.mxu0
        %v4010 = vadd.f32 %v3541, %v4009
        %v4011 = vpop.f32.mrf.mxu0
        %v4012 = vpop.f32.mrf.mxu0
        %v4013 = vadd.f32 %v3541, %v4012
        %v4014 = vpop.f32.mrf.mxu0
        %4015 = vmatprep.mubr.bf16.mxu0 %v3267
        %4016 = vmatmul.mubr.bf16.gmra.mxu0 %v3243
        %v4017 = vpop.f32.mrf.mxu0
        %v4018 = vadd.f32 %v3541, %v4017
        %v4019 = vpop.f32.mrf.mxu0
        %v4020 = vpop.f32.mrf.mxu0
        %v4021 = vadd.f32 %v3541, %v4020
        %v4022 = vpop.f32.mrf.mxu0
        %4023 = vmatprep.mubr.bf16.mxu0 %v3268
        %4024 = vmatmul.mubr.bf16.gmra.mxu0 %v3244
        %v4025 = vpop.f32.mrf.mxu0
        %v4026 = vadd.f32 %v3541, %v4025
        %v4027 = vpop.f32.mrf.mxu0
        %v4028 = vpop.f32.mrf.mxu0
        %v4029 = vadd.f32 %v3541, %v4028
        %v4030 = vpop.f32.mrf.mxu0
        %4031 = vmatprep.mubr.bf16.mxu0 %v3269
        %4032 = vmatmul.mubr.bf16.gmra.mxu0 %v3245
        %v4033 = vpop.f32.mrf.mxu0
        %v4034 = vadd.f32 %v3541, %v4033
        %v4035 = vpop.f32.mrf.mxu0
        %v4036 = vpop.f32.mrf.mxu0
        %v4037 = vadd.f32 %v3541, %v4036
        %v4038 = vpop.f32.mrf.mxu0
        %4039 = vmatprep.mubr.bf16.mxu0 %v3270
        %4040 = vmatmul.mubr.bf16.gmra.mxu0 %v3246
        %v4041 = vpop.f32.mrf.mxu0
        %v4042 = vadd.f32 %v3541, %v4041
        %v4043 = vpop.f32.mrf.mxu0
        %v4044 = vpop.f32.mrf.mxu0
        %v4045 = vadd.f32 %v3541, %v4044
        %v4046 = vpop.f32.mrf.mxu0
        %4047 = vmatprep.mubr.bf16.mxu0 %v3271
        %4048 = vmatmul.mubr.bf16.gmra.mxu0 %v3247
        %v4049 = vpop.f32.mrf.mxu0
        %v4050 = vadd.f32 %v3541, %v4049
        %v4051 = vpop.f32.mrf.mxu0
        %v4052 = vpop.f32.mrf.mxu0
        %v4053 = vadd.f32 %v3541, %v4052
        %v4054 = vpop.f32.mrf.mxu0
        %4055 = vmatprep.mubr.bf16.mxu0 %v3272
        %4056 = vmatmul.mubr.bf16.gmra.mxu0 %v3248
        %v4057 = vpop.f32.mrf.mxu0
        %v4058 = vadd.f32 %v3541, %v4057
        %v4059 = vpop.f32.mrf.mxu0
        %v4060 = vpop.f32.mrf.mxu0
        %v4061 = vadd.f32 %v3541, %v4060
        %v4062 = vpop.f32.mrf.mxu0
        %4063 = vmatprep.mubr.bf16.mxu0 %v3273
        %4064 = vmatmul.mubr.bf16.gmra.mxu0 %v3249
        %v4065 = vpop.f32.mrf.mxu0
        %v4066 = vadd.f32 %v3541, %v4065
        %v4067 = vpop.f32.mrf.mxu0
        %v4068 = vpop.f32.mrf.mxu0
        %v4069 = vadd.f32 %v3541, %v4068
        %v4070 = vpop.f32.mrf.mxu0
        %4071 = vmatprep.mubr.bf16.mxu0 %v3274
        %4072 = vmatmul.mubr.bf16.gmra.mxu0 %v3250
        %v4073 = vpop.f32.mrf.mxu0
        %v4074 = vadd.f32 %v3541, %v4073
        %v4075 = vpop.f32.mrf.mxu0
        %v4076 = vpop.f32.mrf.mxu0
        %v4077 = vadd.f32 %v3541, %v4076
        %v4078 = vpop.f32.mrf.mxu0
        %4079 = vmatprep.mubr.bf16.mxu0 %v3275
        %4080 = vmatmul.mubr.bf16.gmra.mxu0 %v3251
        %v4081 = vpop.f32.mrf.mxu0
        %v4082 = vadd.f32 %v3541, %v4081
        %v4083 = vpop.f32.mrf.mxu0
        %v4084 = vpop.f32.mrf.mxu0
        %v4085 = vadd.f32 %v3541, %v4084
        %v4086 = vpop.f32.mrf.mxu0
        %4087 = vmatprep.mubr.bf16.mxu0 %v3276
        %4088 = vmatmul.mubr.bf16.gmra.mxu0 %v3252
        %v4089 = vpop.f32.mrf.mxu0
        %v4090 = vadd.f32 %v3541, %v4089
        %v4091 = vpop.f32.mrf.mxu0
        %v4092 = vpop.f32.mrf.mxu0
        %v4093 = vadd.f32 %v3541, %v4092
        %v4094 = vpop.f32.mrf.mxu0
        %4095 = vmatprep.mubr.bf16.mxu0 %v3277
        %4096 = vmatmul.mubr.bf16.gmra.mxu0 %v3253
        %v4097 = vpop.f32.mrf.mxu0
        %v4098 = vadd.f32 %v3541, %v4097
        %v4099 = vpop.f32.mrf.mxu0
        %v4100 = vpop.f32.mrf.mxu0
        %v4101 = vadd.f32 %v3541, %v4100
        %v4102 = vpop.f32.mrf.mxu0
        %4103 = vmatprep.mubr.bf16.mxu0 %v3278
        %4104 = vmatmul.mubr.bf16.gmra.mxu0 %v3254
        %v4105 = vpop.f32.mrf.mxu0
        %v4106 = vadd.f32 %v3541, %v4105
        %v4107 = vpop.f32.mrf.mxu0
        %v4108 = vpop.f32.mrf.mxu0
        %v4109 = vadd.f32 %v3541, %v4108
        %v4110 = vpop.f32.mrf.mxu0
        %4111 = vmatprep.mubr.bf16.mxu0 %v3279
        %4112 = vmatmul.mubr.bf16.gmra.mxu0 %v3255
        %v4113 = vpop.f32.mrf.mxu0
        %v4114 = vadd.f32 %v3541, %v4113
        %v4115 = vpop.f32.mrf.mxu0
        %v4116 = vpop.f32.mrf.mxu0
        %v4117 = vadd.f32 %v3541, %v4116
        %v4118 = vpop.f32.mrf.mxu0
        %4119 = vmatprep.mubr.bf16.mxu0 %v3280
        %4120 = vmatmul.mubr.bf16.gmra.mxu0 %v3256
        %v4121 = vpop.f32.mrf.mxu0
        %v4122 = vadd.f32 %v3541, %v4121
        %v4123 = vpop.f32.mrf.mxu0
        %v4124 = vpop.f32.mrf.mxu0
        %v4125 = vadd.f32 %v3541, %v4124
        %v4126 = vpop.f32.mrf.mxu0
        %4127 = vmatprep.mubr.bf16.mxu0 %v3281
        %4128 = vmatmul.mubr.bf16.gmra.mxu0 %v3257
        %v4129 = vpop.f32.mrf.mxu0
        %v4130 = vadd.f32 %v3541, %v4129
        %v4131 = vpop.f32.mrf.mxu0
        %v4132 = vpop.f32.mrf.mxu0
        %v4133 = vadd.f32 %v3541, %v4132
        %v4134 = vpop.f32.mrf.mxu0
        %4135 = vmatprep.mubr.bf16.mxu0 %v3282
        %4136 = vmatmul.mubr.bf16.gmra.mxu0 %v3258
        %v4137 = vpop.f32.mrf.mxu0
        %v4138 = vadd.f32 %v3541, %v4137
        %v4139 = vpop.f32.mrf.mxu0
        %v4140 = vpop.f32.mrf.mxu0
        %v4141 = vadd.f32 %v3541, %v4140
        %v4142 = vpop.f32.mrf.mxu0
        %4143 = vmatprep.mubr.bf16.mxu0 %v3283
        %4144 = vmatmul.mubr.bf16.gmra.mxu0 %v3259
        %v4145 = vpop.f32.mrf.mxu0
        %v4146 = vadd.f32 %v3541, %v4145
        %v4147 = vpop.f32.mrf.mxu0
        %v4148 = vpop.f32.mrf.mxu0
        %v4149 = vadd.f32 %v3541, %v4148
        %v4150 = vpop.f32.mrf.mxu0
        %4151 = vmatprep.mubr.bf16.mxu0 %v3284
        %4152 = vmatmul.mubr.bf16.gmra.mxu0 %v3260
        %v4153 = vpop.f32.mrf.mxu0
        %v4154 = vadd.f32 %v3541, %v4153
        %v4155 = vpop.f32.mrf.mxu0
        %v4156 = vpop.f32.mrf.mxu0
        %v4157 = vadd.f32 %v3541, %v4156
        %v4158 = vpop.f32.mrf.mxu0
        %4159 = vmatprep.mubr.bf16.mxu0 %v3285
        %4160 = vmatmul.mubr.bf16.gmra.mxu0 %v3261
        %v4161 = vpop.f32.mrf.mxu0
        %v4162 = vadd.f32 %v3541, %v4161
        %v4163 = vpop.f32.mrf.mxu0
        %v4164 = vpop.f32.mrf.mxu0
        %v4165 = vadd.f32 %v3541, %v4164
        %v4166 = vpop.f32.mrf.mxu0
        %4167 = vmatprep.mubr.bf16.mxu0 %v3286
        %4168 = vmatmul.mubr.bf16.gmra.mxu0 %v3262
        %v4169 = vpop.f32.mrf.mxu0
        %v4170 = vadd.f32 %v3541, %v4169
        %v4171 = vpop.f32.mrf.mxu0
        %v4172 = vpop.f32.mrf.mxu0
        %v4173 = vadd.f32 %v3541, %v4172
        %v4174 = vpop.f32.mrf.mxu0
        %4175 = vmatprep.mubr.bf16.mxu0 %v3287
        %4176 = vmatmul.mubr.bf16.gmra.mxu0 %v3263
        %v4177 = vpop.f32.mrf.mxu0
        %v4178 = vadd.f32 %v3541, %v4177
        %v4179 = vpop.f32.mrf.mxu0
        %v4180 = vpop.f32.mrf.mxu0
        %v4181 = vadd.f32 %v3541, %v4180
        %v4182 = vpop.f32.mrf.mxu0
        %4183 = vmatprep.mubr.bf16.mxu0 %v3288
        %4184 = vmatmul.mubr.bf16.gmra.mxu0 %v3264
        %v4185 = vpop.f32.mrf.mxu0
        %v4186 = vadd.f32 %v3541, %v4185
        %v4187 = vpop.f32.mrf.mxu0
        %v4188 = vpop.f32.mrf.mxu0
        %v4189 = vadd.f32 %v3541, %v4188
        %v4190 = vpop.f32.mrf.mxu0
        %4191 = vmatprep.mubr.bf16.mxu0 %v3289
        %4192 = vmatmul.mubr.bf16.gmra.mxu0 %v3265
        %v4193 = vpop.f32.mrf.mxu0
        %v4194 = vadd.f32 %v3541, %v4193
        %v4195 = vpop.f32.mrf.mxu0
        %v4196 = vpop.f32.mrf.mxu0
        %v4197 = vadd.f32 %v3541, %v4196
        %v4198 = vpop.f32.mrf.mxu0
        %4199 = vdwg.mxu0
        %4200 = vmatprep.subr.bf16.mxu0 0
        %4201 = vmatpush1.bf16.msra.mxu0 %v3854
        %4202 = vmatprep.subr.bf16.mxu0 0
        %4203 = vmatpush1.bf16.msra.mxu0 %v3853
        %4204 = vmatprep.subr.bf16.mxu0 0
        %4205 = vmatpush1.bf16.msra.mxu0 %v3852
        %4206 = vmatprep.subr.bf16.mxu0 0
        %4207 = vmatpush1.bf16.msra.mxu0 %v3851
        %4208 = vmatprep.subr.bf16.mxu0 0
        %4209 = vmatpush1.bf16.msra.mxu0 %v3850
        %4210 = vmatprep.subr.bf16.mxu0 0
        %4211 = vmatpush1.bf16.msra.mxu0 %v3849
        %4212 = vmatprep.subr.bf16.mxu0 0
        %4213 = vmatpush1.bf16.msra.mxu0 %v3848
        %4214 = vmatprep.subr.bf16.mxu0 0
        %4215 = vmatpush1.bf16.msra.mxu0 %v3847
        %4216 = vmatprep.subr.bf16.mxu0 0
        %4217 = vmatpush2.bf16.msra.mxu0 %v3862
        %4218 = vmatprep.subr.bf16.mxu0 0
        %4219 = vmatpush2.bf16.msra.mxu0 %v3861
        %4220 = vmatprep.subr.bf16.mxu0 0
        %4221 = vmatpush2.bf16.msra.mxu0 %v3860
        %4222 = vmatprep.subr.bf16.mxu0 0
        %4223 = vmatpush2.bf16.msra.mxu0 %v3859
        %4224 = vmatprep.subr.bf16.mxu0 0
        %4225 = vmatpush2.bf16.msra.mxu0 %v3858
        %4226 = vmatprep.subr.bf16.mxu0 0
        %4227 = vmatpush2.bf16.msra.mxu0 %v3857
        %4228 = vmatprep.subr.bf16.mxu0 0
        %4229 = vmatpush2.bf16.msra.mxu0 %v3856
        %4230 = vmatprep.subr.bf16.mxu0 0
        %4231 = vmatpush2.bf16.msra.mxu0 %v3855
        %4232 = vmatprep.mubr.bf16.mxu0 %v3314
        %4233 = vmatmul.mubr.bf16.gmra.mxu0 %v3290
        %v4234 = vpop.f32.mrf.mxu0
        %v4235 = vadd.f32 %v4010, %v4234
        %v4236 = vpop.f32.mrf.mxu0
        %v4237 = vpop.f32.mrf.mxu0
        %v4238 = vadd.f32 %v4013, %v4237
        %v4239 = vpop.f32.mrf.mxu0
        %4240 = vmatprep.mubr.bf16.mxu0 %v3315
        %4241 = vmatmul.mubr.bf16.gmra.mxu0 %v3291
        %v4242 = vpop.f32.mrf.mxu0
        %v4243 = vadd.f32 %v4018, %v4242
        %v4244 = vpop.f32.mrf.mxu0
        %v4245 = vpop.f32.mrf.mxu0
        %v4246 = vadd.f32 %v4021, %v4245
        %v4247 = vpop.f32.mrf.mxu0
        %4248 = vmatprep.mubr.bf16.mxu0 %v3316
        %4249 = vmatmul.mubr.bf16.gmra.mxu0 %v3292
        %v4250 = vpop.f32.mrf.mxu0
        %v4251 = vadd.f32 %v4026, %v4250
        %v4252 = vpop.f32.mrf.mxu0
        %v4253 = vpop.f32.mrf.mxu0
        %v4254 = vadd.f32 %v4029, %v4253
        %v4255 = vpop.f32.mrf.mxu0
        %4256 = vmatprep.mubr.bf16.mxu0 %v3317
        %4257 = vmatmul.mubr.bf16.gmra.mxu0 %v3293
        %v4258 = vpop.f32.mrf.mxu0
        %v4259 = vadd.f32 %v4034, %v4258
        %v4260 = vpop.f32.mrf.mxu0
        %v4261 = vpop.f32.mrf.mxu0
        %v4262 = vadd.f32 %v4037, %v4261
        %v4263 = vpop.f32.mrf.mxu0
        %4264 = vmatprep.mubr.bf16.mxu0 %v3318
        %4265 = vmatmul.mubr.bf16.gmra.mxu0 %v3294
        %v4266 = vpop.f32.mrf.mxu0
        %v4267 = vadd.f32 %v4042, %v4266
        %v4268 = vpop.f32.mrf.mxu0
        %v4269 = vpop.f32.mrf.mxu0
        %v4270 = vadd.f32 %v4045, %v4269
        %v4271 = vpop.f32.mrf.mxu0
        %4272 = vmatprep.mubr.bf16.mxu0 %v3319
        %4273 = vmatmul.mubr.bf16.gmra.mxu0 %v3295
        %v4274 = vpop.f32.mrf.mxu0
        %v4275 = vadd.f32 %v4050, %v4274
        %v4276 = vpop.f32.mrf.mxu0
        %v4277 = vpop.f32.mrf.mxu0
        %v4278 = vadd.f32 %v4053, %v4277
        %v4279 = vpop.f32.mrf.mxu0
        %4280 = vmatprep.mubr.bf16.mxu0 %v3320
        %4281 = vmatmul.mubr.bf16.gmra.mxu0 %v3296
        %v4282 = vpop.f32.mrf.mxu0
        %v4283 = vadd.f32 %v4058, %v4282
        %v4284 = vpop.f32.mrf.mxu0
        %v4285 = vpop.f32.mrf.mxu0
        %v4286 = vadd.f32 %v4061, %v4285
        %v4287 = vpop.f32.mrf.mxu0
        %4288 = vmatprep.mubr.bf16.mxu0 %v3321
        %4289 = vmatmul.mubr.bf16.gmra.mxu0 %v3297
        %v4290 = vpop.f32.mrf.mxu0
        %v4291 = vadd.f32 %v4066, %v4290
        %v4292 = vpop.f32.mrf.mxu0
        %v4293 = vpop.f32.mrf.mxu0
        %v4294 = vadd.f32 %v4069, %v4293
        %v4295 = vpop.f32.mrf.mxu0
        %4296 = vmatprep.mubr.bf16.mxu0 %v3322
        %4297 = vmatmul.mubr.bf16.gmra.mxu0 %v3298
        %v4298 = vpop.f32.mrf.mxu0
        %v4299 = vadd.f32 %v4074, %v4298
        %v4300 = vpop.f32.mrf.mxu0
        %v4301 = vpop.f32.mrf.mxu0
        %v4302 = vadd.f32 %v4077, %v4301
        %v4303 = vpop.f32.mrf.mxu0
        %4304 = vmatprep.mubr.bf16.mxu0 %v3323
        %4305 = vmatmul.mubr.bf16.gmra.mxu0 %v3299
        %v4306 = vpop.f32.mrf.mxu0
        %v4307 = vadd.f32 %v4082, %v4306
        %v4308 = vpop.f32.mrf.mxu0
        %v4309 = vpop.f32.mrf.mxu0
        %v4310 = vadd.f32 %v4085, %v4309
        %v4311 = vpop.f32.mrf.mxu0
        %4312 = vmatprep.mubr.bf16.mxu0 %v3324
        %4313 = vmatmul.mubr.bf16.gmra.mxu0 %v3300
        %v4314 = vpop.f32.mrf.mxu0
        %v4315 = vadd.f32 %v4090, %v4314
        %v4316 = vpop.f32.mrf.mxu0
        %v4317 = vpop.f32.mrf.mxu0
        %v4318 = vadd.f32 %v4093, %v4317
        %v4319 = vpop.f32.mrf.mxu0
        %4320 = vmatprep.mubr.bf16.mxu0 %v3325
        %4321 = vmatmul.mubr.bf16.gmra.mxu0 %v3301
        %v4322 = vpop.f32.mrf.mxu0
        %v4323 = vadd.f32 %v4098, %v4322
        %v4324 = vpop.f32.mrf.mxu0
        %v4325 = vpop.f32.mrf.mxu0
        %v4326 = vadd.f32 %v4101, %v4325
        %v4327 = vpop.f32.mrf.mxu0
        %4328 = vmatprep.mubr.bf16.mxu0 %v3326
        %4329 = vmatmul.mubr.bf16.gmra.mxu0 %v3302
        %v4330 = vpop.f32.mrf.mxu0
        %v4331 = vadd.f32 %v4106, %v4330
        %v4332 = vpop.f32.mrf.mxu0
        %v4333 = vpop.f32.mrf.mxu0
        %v4334 = vadd.f32 %v4109, %v4333
        %v4335 = vpop.f32.mrf.mxu0
        %4336 = vmatprep.mubr.bf16.mxu0 %v3327
        %4337 = vmatmul.mubr.bf16.gmra.mxu0 %v3303
        %v4338 = vpop.f32.mrf.mxu0
        %v4339 = vadd.f32 %v4114, %v4338
        %v4340 = vpop.f32.mrf.mxu0
        %v4341 = vpop.f32.mrf.mxu0
        %v4342 = vadd.f32 %v4117, %v4341
        %v4343 = vpop.f32.mrf.mxu0
        %4344 = vmatprep.mubr.bf16.mxu0 %v3328
        %4345 = vmatmul.mubr.bf16.gmra.mxu0 %v3304
        %v4346 = vpop.f32.mrf.mxu0
        %v4347 = vadd.f32 %v4122, %v4346
        %v4348 = vpop.f32.mrf.mxu0
        %v4349 = vpop.f32.mrf.mxu0
        %v4350 = vadd.f32 %v4125, %v4349
        %v4351 = vpop.f32.mrf.mxu0
        %4352 = vmatprep.mubr.bf16.mxu0 %v3329
        %4353 = vmatmul.mubr.bf16.gmra.mxu0 %v3305
        %v4354 = vpop.f32.mrf.mxu0
        %v4355 = vadd.f32 %v4130, %v4354
        %v4356 = vpop.f32.mrf.mxu0
        %v4357 = vpop.f32.mrf.mxu0
        %v4358 = vadd.f32 %v4133, %v4357
        %v4359 = vpop.f32.mrf.mxu0
        %4360 = vmatprep.mubr.bf16.mxu0 %v3330
        %4361 = vmatmul.mubr.bf16.gmra.mxu0 %v3306
        %v4362 = vpop.f32.mrf.mxu0
        %v4363 = vadd.f32 %v4138, %v4362
        %v4364 = vpop.f32.mrf.mxu0
        %v4365 = vpop.f32.mrf.mxu0
        %v4366 = vadd.f32 %v4141, %v4365
        %v4367 = vpop.f32.mrf.mxu0
        %4368 = vmatprep.mubr.bf16.mxu0 %v3331
        %4369 = vmatmul.mubr.bf16.gmra.mxu0 %v3307
        %v4370 = vpop.f32.mrf.mxu0
        %v4371 = vadd.f32 %v4146, %v4370
        %v4372 = vpop.f32.mrf.mxu0
        %v4373 = vpop.f32.mrf.mxu0
        %v4374 = vadd.f32 %v4149, %v4373
        %v4375 = vpop.f32.mrf.mxu0
        %4376 = vmatprep.mubr.bf16.mxu0 %v3332
        %4377 = vmatmul.mubr.bf16.gmra.mxu0 %v3308
        %v4378 = vpop.f32.mrf.mxu0
        %v4379 = vadd.f32 %v4154, %v4378
        %v4380 = vpop.f32.mrf.mxu0
        %v4381 = vpop.f32.mrf.mxu0
        %v4382 = vadd.f32 %v4157, %v4381
        %v4383 = vpop.f32.mrf.mxu0
        %4384 = vmatprep.mubr.bf16.mxu0 %v3333
        %4385 = vmatmul.mubr.bf16.gmra.mxu0 %v3309
        %v4386 = vpop.f32.mrf.mxu0
        %v4387 = vadd.f32 %v4162, %v4386
        %v4388 = vpop.f32.mrf.mxu0
        %v4389 = vpop.f32.mrf.mxu0
        %v4390 = vadd.f32 %v4165, %v4389
        %v4391 = vpop.f32.mrf.mxu0
        %4392 = vmatprep.mubr.bf16.mxu0 %v3334
        %4393 = vmatmul.mubr.bf16.gmra.mxu0 %v3310
        %v4394 = vpop.f32.mrf.mxu0
        %v4395 = vadd.f32 %v4170, %v4394
        %v4396 = vpop.f32.mrf.mxu0
        %v4397 = vpop.f32.mrf.mxu0
        %v4398 = vadd.f32 %v4173, %v4397
        %v4399 = vpop.f32.mrf.mxu0
        %4400 = vmatprep.mubr.bf16.mxu0 %v3335
        %4401 = vmatmul.mubr.bf16.gmra.mxu0 %v3311
        %v4402 = vpop.f32.mrf.mxu0
        %v4403 = vadd.f32 %v4178, %v4402
        %v4404 = vpop.f32.mrf.mxu0
        %v4405 = vpop.f32.mrf.mxu0
        %v4406 = vadd.f32 %v4181, %v4405
        %v4407 = vpop.f32.mrf.mxu0
        %4408 = vmatprep.mubr.bf16.mxu0 %v3336
        %4409 = vmatmul.mubr.bf16.gmra.mxu0 %v3312
        %v4410 = vpop.f32.mrf.mxu0
        %v4411 = vadd.f32 %v4186, %v4410
        %v4412 = vpop.f32.mrf.mxu0
        %v4413 = vpop.f32.mrf.mxu0
        %v4414 = vadd.f32 %v4189, %v4413
        %v4415 = vpop.f32.mrf.mxu0
        %4416 = vmatprep.mubr.bf16.mxu0 %v3337
        %4417 = vmatmul.mubr.bf16.gmra.mxu0 %v3313
        %v4418 = vpop.f32.mrf.mxu0
        %v4419 = vadd.f32 %v4194, %v4418
        %v4420 = vpop.f32.mrf.mxu0
        %v4421 = vpop.f32.mrf.mxu0
        %v4422 = vadd.f32 %v4197, %v4421
        %v4423 = vpop.f32.mrf.mxu0
        %4424 = vdwg.mxu0
        %4425 = vmatprep.subr.bf16.mxu0 0
        %4426 = vmatpush1.bf16.msra.mxu0 %v3870
        %4427 = vmatprep.subr.bf16.mxu0 0
        %4428 = vmatpush1.bf16.msra.mxu0 %v3869
        %4429 = vmatprep.subr.bf16.mxu0 0
        %4430 = vmatpush1.bf16.msra.mxu0 %v3868
        %4431 = vmatprep.subr.bf16.mxu0 0
        %4432 = vmatpush1.bf16.msra.mxu0 %v3867
        %4433 = vmatprep.subr.bf16.mxu0 0
        %4434 = vmatpush1.bf16.msra.mxu0 %v3866
        %4435 = vmatprep.subr.bf16.mxu0 0
        %4436 = vmatpush1.bf16.msra.mxu0 %v3865
        %4437 = vmatprep.subr.bf16.mxu0 0
        %4438 = vmatpush1.bf16.msra.mxu0 %v3864
        %4439 = vmatprep.subr.bf16.mxu0 0
        %4440 = vmatpush1.bf16.msra.mxu0 %v3863
        %4441 = vmatprep.subr.bf16.mxu0 0
        %4442 = vmatpush2.bf16.msra.mxu0 %v3878
        %4443 = vmatprep.subr.bf16.mxu0 0
        %4444 = vmatpush2.bf16.msra.mxu0 %v3877
        %4445 = vmatprep.subr.bf16.mxu0 0
        %4446 = vmatpush2.bf16.msra.mxu0 %v3876
        %4447 = vmatprep.subr.bf16.mxu0 0
        %4448 = vmatpush2.bf16.msra.mxu0 %v3875
        %4449 = vmatprep.subr.bf16.mxu0 0
        %4450 = vmatpush2.bf16.msra.mxu0 %v3874
        %4451 = vmatprep.subr.bf16.mxu0 0
        %4452 = vmatpush2.bf16.msra.mxu0 %v3873
        %4453 = vmatprep.subr.bf16.mxu0 0
        %4454 = vmatpush2.bf16.msra.mxu0 %v3872
        %4455 = vmatprep.subr.bf16.mxu0 0
        %4456 = vmatpush2.bf16.msra.mxu0 %v3871
        %4457 = vmatprep.mubr.bf16.mxu0 %v3362
        %4458 = vmatmul.mubr.bf16.gmra.mxu0 %v3338
        %v4459 = vpop.f32.mrf.mxu0
        %v4460 = vadd.f32 %v4235, %v4459
        %v4461 = vpop.f32.mrf.mxu0
        %v4462 = vpop.f32.mrf.mxu0
        %v4463 = vadd.f32 %v4238, %v4462
        %v4464 = vpop.f32.mrf.mxu0
        %4465 = vmatprep.mubr.bf16.mxu0 %v3363
        %4466 = vmatmul.mubr.bf16.gmra.mxu0 %v3339
        %v4467 = vpop.f32.mrf.mxu0
        %v4468 = vadd.f32 %v4243, %v4467
        %v4469 = vpop.f32.mrf.mxu0
        %v4470 = vpop.f32.mrf.mxu0
        %v4471 = vadd.f32 %v4246, %v4470
        %v4472 = vpop.f32.mrf.mxu0
        %4473 = vmatprep.mubr.bf16.mxu0 %v3364
        %4474 = vmatmul.mubr.bf16.gmra.mxu0 %v3340
        %v4475 = vpop.f32.mrf.mxu0
        %v4476 = vadd.f32 %v4251, %v4475
        %v4477 = vpop.f32.mrf.mxu0
        %v4478 = vpop.f32.mrf.mxu0
        %v4479 = vadd.f32 %v4254, %v4478
        %v4480 = vpop.f32.mrf.mxu0
        %4481 = vmatprep.mubr.bf16.mxu0 %v3365
        %4482 = vmatmul.mubr.bf16.gmra.mxu0 %v3341
        %v4483 = vpop.f32.mrf.mxu0
        %v4484 = vadd.f32 %v4259, %v4483
        %v4485 = vpop.f32.mrf.mxu0
        %v4486 = vpop.f32.mrf.mxu0
        %v4487 = vadd.f32 %v4262, %v4486
        %v4488 = vpop.f32.mrf.mxu0
        %4489 = vmatprep.mubr.bf16.mxu0 %v3366
        %4490 = vmatmul.mubr.bf16.gmra.mxu0 %v3342
        %v4491 = vpop.f32.mrf.mxu0
        %v4492 = vadd.f32 %v4267, %v4491
        %v4493 = vpop.f32.mrf.mxu0
        %v4494 = vpop.f32.mrf.mxu0
        %v4495 = vadd.f32 %v4270, %v4494
        %v4496 = vpop.f32.mrf.mxu0
        %4497 = vmatprep.mubr.bf16.mxu0 %v3367
        %4498 = vmatmul.mubr.bf16.gmra.mxu0 %v3343
        %v4499 = vpop.f32.mrf.mxu0
        %v4500 = vadd.f32 %v4275, %v4499
        %v4501 = vpop.f32.mrf.mxu0
        %v4502 = vpop.f32.mrf.mxu0
        %v4503 = vadd.f32 %v4278, %v4502
        %v4504 = vpop.f32.mrf.mxu0
        %4505 = vmatprep.mubr.bf16.mxu0 %v3368
        %4506 = vmatmul.mubr.bf16.gmra.mxu0 %v3344
        %v4507 = vpop.f32.mrf.mxu0
        %v4508 = vadd.f32 %v4283, %v4507
        %v4509 = vpop.f32.mrf.mxu0
        %v4510 = vpop.f32.mrf.mxu0
        %v4511 = vadd.f32 %v4286, %v4510
        %v4512 = vpop.f32.mrf.mxu0
        %4513 = vmatprep.mubr.bf16.mxu0 %v3369
        %4514 = vmatmul.mubr.bf16.gmra.mxu0 %v3345
        %v4515 = vpop.f32.mrf.mxu0
        %v4516 = vadd.f32 %v4291, %v4515
        %v4517 = vpop.f32.mrf.mxu0
        %v4518 = vpop.f32.mrf.mxu0
        %v4519 = vadd.f32 %v4294, %v4518
        %v4520 = vpop.f32.mrf.mxu0
        %4521 = vmatprep.mubr.bf16.mxu0 %v3370
        %4522 = vmatmul.mubr.bf16.gmra.mxu0 %v3346
        %v4523 = vpop.f32.mrf.mxu0
        %v4524 = vadd.f32 %v4299, %v4523
        %v4525 = vpop.f32.mrf.mxu0
        %v4526 = vpop.f32.mrf.mxu0
        %v4527 = vadd.f32 %v4302, %v4526
        %v4528 = vpop.f32.mrf.mxu0
        %4529 = vmatprep.mubr.bf16.mxu0 %v3371
        %4530 = vmatmul.mubr.bf16.gmra.mxu0 %v3347
        %v4531 = vpop.f32.mrf.mxu0
        %v4532 = vadd.f32 %v4307, %v4531
        %v4533 = vpop.f32.mrf.mxu0
        %v4534 = vpop.f32.mrf.mxu0
        %v4535 = vadd.f32 %v4310, %v4534
        %v4536 = vpop.f32.mrf.mxu0
        %4537 = vmatprep.mubr.bf16.mxu0 %v3372
        %4538 = vmatmul.mubr.bf16.gmra.mxu0 %v3348
        %v4539 = vpop.f32.mrf.mxu0
        %v4540 = vadd.f32 %v4315, %v4539
        %v4541 = vpop.f32.mrf.mxu0
        %v4542 = vpop.f32.mrf.mxu0
        %v4543 = vadd.f32 %v4318, %v4542
        %v4544 = vpop.f32.mrf.mxu0
        %4545 = vmatprep.mubr.bf16.mxu0 %v3373
        %4546 = vmatmul.mubr.bf16.gmra.mxu0 %v3349
        %v4547 = vpop.f32.mrf.mxu0
        %v4548 = vadd.f32 %v4323, %v4547
        %v4549 = vpop.f32.mrf.mxu0
        %v4550 = vpop.f32.mrf.mxu0
        %v4551 = vadd.f32 %v4326, %v4550
        %v4552 = vpop.f32.mrf.mxu0
        %4553 = vmatprep.mubr.bf16.mxu0 %v3374
        %4554 = vmatmul.mubr.bf16.gmra.mxu0 %v3350
        %v4555 = vpop.f32.mrf.mxu0
        %v4556 = vadd.f32 %v4331, %v4555
        %v4557 = vpop.f32.mrf.mxu0
        %v4558 = vpop.f32.mrf.mxu0
        %v4559 = vadd.f32 %v4334, %v4558
        %v4560 = vpop.f32.mrf.mxu0
        %4561 = vmatprep.mubr.bf16.mxu0 %v3375
        %4562 = vmatmul.mubr.bf16.gmra.mxu0 %v3351
        %v4563 = vpop.f32.mrf.mxu0
        %v4564 = vadd.f32 %v4339, %v4563
        %v4565 = vpop.f32.mrf.mxu0
        %v4566 = vpop.f32.mrf.mxu0
        %v4567 = vadd.f32 %v4342, %v4566
        %v4568 = vpop.f32.mrf.mxu0
        %4569 = vmatprep.mubr.bf16.mxu0 %v3376
        %4570 = vmatmul.mubr.bf16.gmra.mxu0 %v3352
        %v4571 = vpop.f32.mrf.mxu0
        %v4572 = vadd.f32 %v4347, %v4571
        %v4573 = vpop.f32.mrf.mxu0
        %v4574 = vpop.f32.mrf.mxu0
        %v4575 = vadd.f32 %v4350, %v4574
        %v4576 = vpop.f32.mrf.mxu0
        %4577 = vmatprep.mubr.bf16.mxu0 %v3377
        %4578 = vmatmul.mubr.bf16.gmra.mxu0 %v3353
        %v4579 = vpop.f32.mrf.mxu0
        %v4580 = vadd.f32 %v4355, %v4579
        %v4581 = vpop.f32.mrf.mxu0
        %v4582 = vpop.f32.mrf.mxu0
        %v4583 = vadd.f32 %v4358, %v4582
        %v4584 = vpop.f32.mrf.mxu0
        %4585 = vmatprep.mubr.bf16.mxu0 %v3378
        %4586 = vmatmul.mubr.bf16.gmra.mxu0 %v3354
        %v4587 = vpop.f32.mrf.mxu0
        %v4588 = vadd.f32 %v4363, %v4587
        %v4589 = vpop.f32.mrf.mxu0
        %v4590 = vpop.f32.mrf.mxu0
        %v4591 = vadd.f32 %v4366, %v4590
        %v4592 = vpop.f32.mrf.mxu0
        %4593 = vmatprep.mubr.bf16.mxu0 %v3379
        %4594 = vmatmul.mubr.bf16.gmra.mxu0 %v3355
        %v4595 = vpop.f32.mrf.mxu0
        %v4596 = vadd.f32 %v4371, %v4595
        %v4597 = vpop.f32.mrf.mxu0
        %v4598 = vpop.f32.mrf.mxu0
        %v4599 = vadd.f32 %v4374, %v4598
        %v4600 = vpop.f32.mrf.mxu0
        %4601 = vmatprep.mubr.bf16.mxu0 %v3380
        %4602 = vmatmul.mubr.bf16.gmra.mxu0 %v3356
        %v4603 = vpop.f32.mrf.mxu0
        %v4604 = vadd.f32 %v4379, %v4603
        %v4605 = vpop.f32.mrf.mxu0
        %v4606 = vpop.f32.mrf.mxu0
        %v4607 = vadd.f32 %v4382, %v4606
        %v4608 = vpop.f32.mrf.mxu0
        %4609 = vmatprep.mubr.bf16.mxu0 %v3381
        %4610 = vmatmul.mubr.bf16.gmra.mxu0 %v3357
        %v4611 = vpop.f32.mrf.mxu0
        %v4612 = vadd.f32 %v4387, %v4611
        %v4613 = vpop.f32.mrf.mxu0
        %v4614 = vpop.f32.mrf.mxu0
        %v4615 = vadd.f32 %v4390, %v4614
        %v4616 = vpop.f32.mrf.mxu0
        %4617 = vmatprep.mubr.bf16.mxu0 %v3382
        %4618 = vmatmul.mubr.bf16.gmra.mxu0 %v3358
        %v4619 = vpop.f32.mrf.mxu0
        %v4620 = vadd.f32 %v4395, %v4619
        %v4621 = vpop.f32.mrf.mxu0
        %v4622 = vpop.f32.mrf.mxu0
        %v4623 = vadd.f32 %v4398, %v4622
        %v4624 = vpop.f32.mrf.mxu0
        %4625 = vmatprep.mubr.bf16.mxu0 %v3383
        %4626 = vmatmul.mubr.bf16.gmra.mxu0 %v3359
        %v4627 = vpop.f32.mrf.mxu0
        %v4628 = vadd.f32 %v4403, %v4627
        %v4629 = vpop.f32.mrf.mxu0
        %v4630 = vpop.f32.mrf.mxu0
        %v4631 = vadd.f32 %v4406, %v4630
        %v4632 = vpop.f32.mrf.mxu0
        %4633 = vmatprep.mubr.bf16.mxu0 %v3384
        %4634 = vmatmul.mubr.bf16.gmra.mxu0 %v3360
        %v4635 = vpop.f32.mrf.mxu0
        %v4636 = vadd.f32 %v4411, %v4635
        %v4637 = vpop.f32.mrf.mxu0
        %v4638 = vpop.f32.mrf.mxu0
        %v4639 = vadd.f32 %v4414, %v4638
        %v4640 = vpop.f32.mrf.mxu0
        %4641 = vmatprep.mubr.bf16.mxu0 %v3385
        %4642 = vmatmul.mubr.bf16.gmra.mxu0 %v3361
        %v4643 = vpop.f32.mrf.mxu0
        %v4644 = vadd.f32 %v4419, %v4643
        %v4645 = vpop.f32.mrf.mxu0
        %v4646 = vpop.f32.mrf.mxu0
        %v4647 = vadd.f32 %v4422, %v4646
        %v4648 = vpop.f32.mrf.mxu0
        %4649 = vdwg.mxu0
        %4650 = vmatprep.subr.bf16.mxu0 0
        %4651 = vmatpush1.bf16.msra.mxu0 %v3886
        %4652 = vmatprep.subr.bf16.mxu0 0
        %4653 = vmatpush1.bf16.msra.mxu0 %v3885
        %4654 = vmatprep.subr.bf16.mxu0 0
        %4655 = vmatpush1.bf16.msra.mxu0 %v3884
        %4656 = vmatprep.subr.bf16.mxu0 0
        %4657 = vmatpush1.bf16.msra.mxu0 %v3883
        %4658 = vmatprep.subr.bf16.mxu0 0
        %4659 = vmatpush1.bf16.msra.mxu0 %v3882
        %4660 = vmatprep.subr.bf16.mxu0 0
        %4661 = vmatpush1.bf16.msra.mxu0 %v3881
        %4662 = vmatprep.subr.bf16.mxu0 0
        %4663 = vmatpush1.bf16.msra.mxu0 %v3880
        %4664 = vmatprep.subr.bf16.mxu0 0
        %4665 = vmatpush1.bf16.msra.mxu0 %v3879
        %4666 = vmatprep.subr.bf16.mxu0 0
        %4667 = vmatpush2.bf16.msra.mxu0 %v3894
        %4668 = vmatprep.subr.bf16.mxu0 0
        %4669 = vmatpush2.bf16.msra.mxu0 %v3893
        %4670 = vmatprep.subr.bf16.mxu0 0
        %4671 = vmatpush2.bf16.msra.mxu0 %v3892
        %4672 = vmatprep.subr.bf16.mxu0 0
        %4673 = vmatpush2.bf16.msra.mxu0 %v3891
        %4674 = vmatprep.subr.bf16.mxu0 0
        %4675 = vmatpush2.bf16.msra.mxu0 %v3890
        %4676 = vmatprep.subr.bf16.mxu0 0
        %4677 = vmatpush2.bf16.msra.mxu0 %v3889
        %4678 = vmatprep.subr.bf16.mxu0 0
        %4679 = vmatpush2.bf16.msra.mxu0 %v3888
        %4680 = vmatprep.subr.bf16.mxu0 0
        %4681 = vmatpush2.bf16.msra.mxu0 %v3887
        %4682 = vmatprep.mubr.bf16.mxu0 %v3269
        %4683 = vmatmul.mubr.bf16.gmra.mxu0 %v3245
        %v4684 = vpop.f32.mrf.mxu0
        %v4685 = vadd.f32 %v4460, %v4684
        %v4686 = vpop.f32.mrf.mxu0
        %v4687 = vpop.f32.mrf.mxu0
        %v4688 = vadd.f32 %v4463, %v4687
        %v4689 = vpop.f32.mrf.mxu0
        %4690 = vmatprep.mubr.bf16.mxu0 %v3270
        %4691 = vmatmul.mubr.bf16.gmra.mxu0 %v3246
        %v4692 = vpop.f32.mrf.mxu0
        %v4693 = vadd.f32 %v4468, %v4692
        %v4694 = vpop.f32.mrf.mxu0
        %v4695 = vpop.f32.mrf.mxu0
        %v4696 = vadd.f32 %v4471, %v4695
        %v4697 = vpop.f32.mrf.mxu0
        %4698 = vmatprep.mubr.bf16.mxu0 %v3271
        %4699 = vmatmul.mubr.bf16.gmra.mxu0 %v3247
        %v4700 = vpop.f32.mrf.mxu0
        %v4701 = vadd.f32 %v4476, %v4700
        %v4702 = vpop.f32.mrf.mxu0
        %v4703 = vpop.f32.mrf.mxu0
        %v4704 = vadd.f32 %v4479, %v4703
        %v4705 = vpop.f32.mrf.mxu0
        %4706 = vmatprep.mubr.bf16.mxu0 %v3272
        %4707 = vmatmul.mubr.bf16.gmra.mxu0 %v3248
        %v4708 = vpop.f32.mrf.mxu0
        %v4709 = vadd.f32 %v4484, %v4708
        %v4710 = vpop.f32.mrf.mxu0
        %v4711 = vpop.f32.mrf.mxu0
        %v4712 = vadd.f32 %v4487, %v4711
        %v4713 = vpop.f32.mrf.mxu0
        %4714 = vmatprep.mubr.bf16.mxu0 %v3273
        %4715 = vmatmul.mubr.bf16.gmra.mxu0 %v3249
        %v4716 = vpop.f32.mrf.mxu0
        %v4717 = vadd.f32 %v4492, %v4716
        %v4718 = vpop.f32.mrf.mxu0
        %v4719 = vpop.f32.mrf.mxu0
        %v4720 = vadd.f32 %v4495, %v4719
        %v4721 = vpop.f32.mrf.mxu0
        %4722 = vmatprep.mubr.bf16.mxu0 %v3274
        %4723 = vmatmul.mubr.bf16.gmra.mxu0 %v3250
        %v4724 = vpop.f32.mrf.mxu0
        %v4725 = vadd.f32 %v4500, %v4724
        %v4726 = vpop.f32.mrf.mxu0
        %v4727 = vpop.f32.mrf.mxu0
        %v4728 = vadd.f32 %v4503, %v4727
        %v4729 = vpop.f32.mrf.mxu0
        %4730 = vmatprep.mubr.bf16.mxu0 %v3275
        %4731 = vmatmul.mubr.bf16.gmra.mxu0 %v3251
        %v4732 = vpop.f32.mrf.mxu0
        %v4733 = vadd.f32 %v4508, %v4732
        %v4734 = vpop.f32.mrf.mxu0
        %v4735 = vpop.f32.mrf.mxu0
        %v4736 = vadd.f32 %v4511, %v4735
        %v4737 = vpop.f32.mrf.mxu0
        %4738 = vmatprep.mubr.bf16.mxu0 %v3276
        %4739 = vmatmul.mubr.bf16.gmra.mxu0 %v3252
        %v4740 = vpop.f32.mrf.mxu0
        %v4741 = vadd.f32 %v4516, %v4740
        %v4742 = vpop.f32.mrf.mxu0
        %v4743 = vpop.f32.mrf.mxu0
        %v4744 = vadd.f32 %v4519, %v4743
        %v4745 = vpop.f32.mrf.mxu0
        %4746 = vmatprep.mubr.bf16.mxu0 %v3277
        %4747 = vmatmul.mubr.bf16.gmra.mxu0 %v3253
        %v4748 = vpop.f32.mrf.mxu0
        %v4749 = vadd.f32 %v4524, %v4748
        %v4750 = vpop.f32.mrf.mxu0
        %v4751 = vpop.f32.mrf.mxu0
        %v4752 = vadd.f32 %v4527, %v4751
        %v4753 = vpop.f32.mrf.mxu0
        %4754 = vmatprep.mubr.bf16.mxu0 %v3278
        %4755 = vmatmul.mubr.bf16.gmra.mxu0 %v3254
        %v4756 = vpop.f32.mrf.mxu0
        %v4757 = vadd.f32 %v4532, %v4756
        %v4758 = vpop.f32.mrf.mxu0
        %v4759 = vpop.f32.mrf.mxu0
        %v4760 = vadd.f32 %v4535, %v4759
        %v4761 = vpop.f32.mrf.mxu0
        %4762 = vmatprep.mubr.bf16.mxu0 %v3279
        %4763 = vmatmul.mubr.bf16.gmra.mxu0 %v3255
        %v4764 = vpop.f32.mrf.mxu0
        %v4765 = vadd.f32 %v4540, %v4764
        %v4766 = vpop.f32.mrf.mxu0
        %v4767 = vpop.f32.mrf.mxu0
        %v4768 = vadd.f32 %v4543, %v4767
        %v4769 = vpop.f32.mrf.mxu0
        %4770 = vmatprep.mubr.bf16.mxu0 %v3280
        %4771 = vmatmul.mubr.bf16.gmra.mxu0 %v3256
        %v4772 = vpop.f32.mrf.mxu0
        %v4773 = vadd.f32 %v4548, %v4772
        %v4774 = vpop.f32.mrf.mxu0
        %v4775 = vpop.f32.mrf.mxu0
        %v4776 = vadd.f32 %v4551, %v4775
        %v4777 = vpop.f32.mrf.mxu0
        %4778 = vmatprep.mubr.bf16.mxu0 %v3281
        %4779 = vmatmul.mubr.bf16.gmra.mxu0 %v3257
        %v4780 = vpop.f32.mrf.mxu0
        %v4781 = vadd.f32 %v4556, %v4780
        %v4782 = vpop.f32.mrf.mxu0
        %v4783 = vpop.f32.mrf.mxu0
        %v4784 = vadd.f32 %v4559, %v4783
        %v4785 = vpop.f32.mrf.mxu0
        %4786 = vmatprep.mubr.bf16.mxu0 %v3282
        %4787 = vmatmul.mubr.bf16.gmra.mxu0 %v3258
        %v4788 = vpop.f32.mrf.mxu0
        %v4789 = vadd.f32 %v4564, %v4788
        %v4790 = vpop.f32.mrf.mxu0
        %v4791 = vpop.f32.mrf.mxu0
        %v4792 = vadd.f32 %v4567, %v4791
        %v4793 = vpop.f32.mrf.mxu0
        %4794 = vmatprep.mubr.bf16.mxu0 %v3283
        %4795 = vmatmul.mubr.bf16.gmra.mxu0 %v3259
        %v4796 = vpop.f32.mrf.mxu0
        %v4797 = vadd.f32 %v4572, %v4796
        %v4798 = vpop.f32.mrf.mxu0
        %v4799 = vpop.f32.mrf.mxu0
        %v4800 = vadd.f32 %v4575, %v4799
        %v4801 = vpop.f32.mrf.mxu0
        %4802 = vmatprep.mubr.bf16.mxu0 %v3284
        %4803 = vmatmul.mubr.bf16.gmra.mxu0 %v3260
        %v4804 = vpop.f32.mrf.mxu0
        %v4805 = vadd.f32 %v4580, %v4804
        %v4806 = vpop.f32.mrf.mxu0
        %v4807 = vpop.f32.mrf.mxu0
        %v4808 = vadd.f32 %v4583, %v4807
        %v4809 = vpop.f32.mrf.mxu0
        %4810 = vmatprep.mubr.bf16.mxu0 %v3285
        %4811 = vmatmul.mubr.bf16.gmra.mxu0 %v3261
        %v4812 = vpop.f32.mrf.mxu0
        %v4813 = vadd.f32 %v4588, %v4812
        %v4814 = vpop.f32.mrf.mxu0
        %v4815 = vpop.f32.mrf.mxu0
        %v4816 = vadd.f32 %v4591, %v4815
        %v4817 = vpop.f32.mrf.mxu0
        %4818 = vmatprep.mubr.bf16.mxu0 %v3286
        %4819 = vmatmul.mubr.bf16.gmra.mxu0 %v3262
        %v4820 = vpop.f32.mrf.mxu0
        %v4821 = vadd.f32 %v4596, %v4820
        %v4822 = vpop.f32.mrf.mxu0
        %v4823 = vpop.f32.mrf.mxu0
        %v4824 = vadd.f32 %v4599, %v4823
        %v4825 = vpop.f32.mrf.mxu0
        %4826 = vmatprep.mubr.bf16.mxu0 %v3287
        %4827 = vmatmul.mubr.bf16.gmra.mxu0 %v3263
        %v4828 = vpop.f32.mrf.mxu0
        %v4829 = vadd.f32 %v4604, %v4828
        %v4830 = vpop.f32.mrf.mxu0
        %v4831 = vpop.f32.mrf.mxu0
        %v4832 = vadd.f32 %v4607, %v4831
        %v4833 = vpop.f32.mrf.mxu0
        %4834 = vmatprep.mubr.bf16.mxu0 %v3288
        %4835 = vmatmul.mubr.bf16.gmra.mxu0 %v3264
        %v4836 = vpop.f32.mrf.mxu0
        %v4837 = vadd.f32 %v4612, %v4836
        %v4838 = vpop.f32.mrf.mxu0
        %v4839 = vpop.f32.mrf.mxu0
        %v4840 = vadd.f32 %v4615, %v4839
        %v4841 = vpop.f32.mrf.mxu0
        %4842 = vmatprep.mubr.bf16.mxu0 %v3289
        %4843 = vmatmul.mubr.bf16.gmra.mxu0 %v3265
        %v4844 = vpop.f32.mrf.mxu0
        %v4845 = vadd.f32 %v4620, %v4844
        %v4846 = vpop.f32.mrf.mxu0
        %v4847 = vpop.f32.mrf.mxu0
        %v4848 = vadd.f32 %v4623, %v4847
        %v4849 = vpop.f32.mrf.mxu0
        %4850 = vmatprep.mubr.bf16.mxu0 %v3388
        %4851 = vmatmul.mubr.bf16.gmra.mxu0 %v3386
        %v4852 = vpop.f32.mrf.mxu0
        %v4853 = vadd.f32 %v4628, %v4852
        %v4854 = vpop.f32.mrf.mxu0
        %v4855 = vpop.f32.mrf.mxu0
        %v4856 = vadd.f32 %v4631, %v4855
        %v4857 = vpop.f32.mrf.mxu0
        %4858 = vmatprep.mubr.bf16.mxu0 %v3389
        %4859 = vmatmul.mubr.bf16.gmra.mxu0 %v3387
        %v4860 = vpop.f32.mrf.mxu0
        %v4861 = vadd.f32 %v4636, %v4860
        %v4862 = vpop.f32.mrf.mxu0
        %v4863 = vpop.f32.mrf.mxu0
        %v4864 = vadd.f32 %v4639, %v4863
        %v4865 = vpop.f32.mrf.mxu0
        %4866 = vmatprep.mubr.bf16.mxu0 %v3266
        %4867 = vmatmul.mubr.bf16.gmra.mxu0 %v3242
        %v4868 = vpop.f32.mrf.mxu0
        %v4869 = vadd.f32 %v4644, %v4868
        %v4870 = vpop.f32.mrf.mxu0
        %v4871 = vpop.f32.mrf.mxu0
        %v4872 = vadd.f32 %v4647, %v4871
        %v4873 = vpop.f32.mrf.mxu0
        %4874 = vdwg.mxu0
        %4875 = vmatprep.subr.bf16.mxu0 0
        %4876 = vmatpush1.bf16.msra.mxu0 %v3902
        %4877 = vmatprep.subr.bf16.mxu0 0
        %4878 = vmatpush1.bf16.msra.mxu0 %v3901
        %4879 = vmatprep.subr.bf16.mxu0 0
        %4880 = vmatpush1.bf16.msra.mxu0 %v3900
        %4881 = vmatprep.subr.bf16.mxu0 0
        %4882 = vmatpush1.bf16.msra.mxu0 %v3899
        %4883 = vmatprep.subr.bf16.mxu0 0
        %4884 = vmatpush1.bf16.msra.mxu0 %v3898
        %4885 = vmatprep.subr.bf16.mxu0 0
        %4886 = vmatpush1.bf16.msra.mxu0 %v3897
        %4887 = vmatprep.subr.bf16.mxu0 0
        %4888 = vmatpush1.bf16.msra.mxu0 %v3896
        %4889 = vmatprep.subr.bf16.mxu0 0
        %4890 = vmatpush1.bf16.msra.mxu0 %v3895
        %4891 = vmatprep.subr.bf16.mxu0 0
        %4892 = vmatpush2.bf16.msra.mxu0 0
        %4893 = vmatprep.subr.bf16.mxu0 0
        %4894 = vmatpush2.bf16.msra.mxu0 0
        %4895 = vmatprep.subr.bf16.mxu0 0
        %4896 = vmatpush2.bf16.msra.mxu0 0
        %4897 = vmatprep.subr.bf16.mxu0 0
        %4898 = vmatpush2.bf16.msra.mxu0 0
        %4899 = vmatprep.subr.bf16.mxu0 0
        %4900 = vmatpush2.bf16.msra.mxu0 0
        %4901 = vmatprep.subr.bf16.mxu0 0
        %4902 = vmatpush2.bf16.msra.mxu0 0
        %4903 = vmatprep.subr.bf16.mxu0 0
        %4904 = vmatpush2.bf16.msra.mxu0 0
        %4905 = vmatprep.subr.bf16.mxu0 0
        %4906 = vmatpush2.bf16.msra.mxu0 0
        %4907 = vmatprep.mubr.bf16.mxu0 0
        %4908 = vmatmul.mubr.bf16.gmra.mxu0 %v3293
        %v4909 = vpop.f32.mrf.mxu0
        %v4910 = vadd.f32 %v4685, %v4909
        %v4911 = vpop.f32.mrf.mxu0
        %v4912 = vpop.f32.mrf.mxu0
        %v4913 = vadd.f32 %v4688, %v4912
        %v4914 = vpop.f32.mrf.mxu0
        %4915 = vmatprep.mubr.bf16.mxu0 0
        %4916 = vmatmul.mubr.bf16.gmra.mxu0 %v3294
        %v4917 = vpop.f32.mrf.mxu0
        %v4918 = vadd.f32 %v4693, %v4917
        %v4919 = vpop.f32.mrf.mxu0
        %v4920 = vpop.f32.mrf.mxu0
        %v4921 = vadd.f32 %v4696, %v4920
        %v4922 = vpop.f32.mrf.mxu0
        %4923 = vmatprep.mubr.bf16.mxu0 0
        %4924 = vmatmul.mubr.bf16.gmra.mxu0 %v3295
        %v4925 = vpop.f32.mrf.mxu0
        %v4926 = vadd.f32 %v4701, %v4925
        %v4927 = vpop.f32.mrf.mxu0
        %v4928 = vpop.f32.mrf.mxu0
        %v4929 = vadd.f32 %v4704, %v4928
        %v4930 = vpop.f32.mrf.mxu0
        %4931 = vmatprep.mubr.bf16.mxu0 0
        %4932 = vmatmul.mubr.bf16.gmra.mxu0 %v3296
        %v4933 = vpop.f32.mrf.mxu0
        %v4934 = vadd.f32 %v4709, %v4933
        %v4935 = vpop.f32.mrf.mxu0
        %v4936 = vpop.f32.mrf.mxu0
        %v4937 = vadd.f32 %v4712, %v4936
        %v4938 = vpop.f32.mrf.mxu0
        %4939 = vmatprep.mubr.bf16.mxu0 0
        %4940 = vmatmul.mubr.bf16.gmra.mxu0 %v3297
        %v4941 = vpop.f32.mrf.mxu0
        %v4942 = vadd.f32 %v4717, %v4941
        %v4943 = vpop.f32.mrf.mxu0
        %v4944 = vpop.f32.mrf.mxu0
        %v4945 = vadd.f32 %v4720, %v4944
        %v4946 = vpop.f32.mrf.mxu0
        %4947 = vmatprep.mubr.bf16.mxu0 0
        %4948 = vmatmul.mubr.bf16.gmra.mxu0 %v3298
        %v4949 = vpop.f32.mrf.mxu0
        %v4950 = vadd.f32 %v4725, %v4949
        %v4951 = vpop.f32.mrf.mxu0
        %v4952 = vpop.f32.mrf.mxu0
        %v4953 = vadd.f32 %v4728, %v4952
        %v4954 = vpop.f32.mrf.mxu0
        %4955 = vmatprep.mubr.bf16.mxu0 0
        %4956 = vmatmul.mubr.bf16.gmra.mxu0 %v3299
        %v4957 = vpop.f32.mrf.mxu0
        %v4958 = vadd.f32 %v4733, %v4957
        %v4959 = vpop.f32.mrf.mxu0
        %v4960 = vpop.f32.mrf.mxu0
        %v4961 = vadd.f32 %v4736, %v4960
        %v4962 = vpop.f32.mrf.mxu0
        %4963 = vmatprep.mubr.bf16.mxu0 0
        %4964 = vmatmul.mubr.bf16.gmra.mxu0 %v3300
        %v4965 = vpop.f32.mrf.mxu0
        %v4966 = vadd.f32 %v4741, %v4965
        %v4967 = vpop.f32.mrf.mxu0
        %v4968 = vpop.f32.mrf.mxu0
        %v4969 = vadd.f32 %v4744, %v4968
        %v4970 = vpop.f32.mrf.mxu0
        %4971 = vmatprep.mubr.bf16.mxu0 0
        %4972 = vmatmul.mubr.bf16.gmra.mxu0 %v3301
        %v4973 = vpop.f32.mrf.mxu0
        %v4974 = vadd.f32 %v4749, %v4973
        %v4975 = vpop.f32.mrf.mxu0
        %v4976 = vpop.f32.mrf.mxu0
        %v4977 = vadd.f32 %v4752, %v4976
        %v4978 = vpop.f32.mrf.mxu0
        %4979 = vmatprep.mubr.bf16.mxu0 0
        %4980 = vmatmul.mubr.bf16.gmra.mxu0 %v3302
        %v4981 = vpop.f32.mrf.mxu0
        %v4982 = vadd.f32 %v4757, %v4981
        %v4983 = vpop.f32.mrf.mxu0
        %v4984 = vpop.f32.mrf.mxu0
        %v4985 = vadd.f32 %v4760, %v4984
        %v4986 = vpop.f32.mrf.mxu0
        %4987 = vmatprep.mubr.bf16.mxu0 0
        %4988 = vmatmul.mubr.bf16.gmra.mxu0 %v3303
        %v4989 = vpop.f32.mrf.mxu0
        %v4990 = vadd.f32 %v4765, %v4989
        %v4991 = vpop.f32.mrf.mxu0
        %v4992 = vpop.f32.mrf.mxu0
        %v4993 = vadd.f32 %v4768, %v4992
        %v4994 = vpop.f32.mrf.mxu0
        %4995 = vmatprep.mubr.bf16.mxu0 0
        %4996 = vmatmul.mubr.bf16.gmra.mxu0 %v3304
        %v4997 = vpop.f32.mrf.mxu0
        %v4998 = vadd.f32 %v4773, %v4997
        %v4999 = vpop.f32.mrf.mxu0
        %v5000 = vpop.f32.mrf.mxu0
        %v5001 = vadd.f32 %v4776, %v5000
        %v5002 = vpop.f32.mrf.mxu0
        %5003 = vmatprep.mubr.bf16.mxu0 0
        %5004 = vmatmul.mubr.bf16.gmra.mxu0 %v3305
        %v5005 = vpop.f32.mrf.mxu0
        %v5006 = vadd.f32 %v4781, %v5005
        %v5007 = vpop.f32.mrf.mxu0
        %v5008 = vpop.f32.mrf.mxu0
        %v5009 = vadd.f32 %v4784, %v5008
        %v5010 = vpop.f32.mrf.mxu0
        %5011 = vmatprep.mubr.bf16.mxu0 0
        %5012 = vmatmul.mubr.bf16.gmra.mxu0 %v3306
        %v5013 = vpop.f32.mrf.mxu0
        %v5014 = vadd.f32 %v4789, %v5013
        %v5015 = vpop.f32.mrf.mxu0
        %v5016 = vpop.f32.mrf.mxu0
        %v5017 = vadd.f32 %v4792, %v5016
        %v5018 = vpop.f32.mrf.mxu0
        %5019 = vmatprep.mubr.bf16.mxu0 0
        %5020 = vmatmul.mubr.bf16.gmra.mxu0 %v3307
        %v5021 = vpop.f32.mrf.mxu0
        %v5022 = vadd.f32 %v4797, %v5021
        %v5023 = vpop.f32.mrf.mxu0
        %v5024 = vpop.f32.mrf.mxu0
        %v5025 = vadd.f32 %v4800, %v5024
        %v5026 = vpop.f32.mrf.mxu0
        %5027 = vmatprep.mubr.bf16.mxu0 0
        %5028 = vmatmul.mubr.bf16.gmra.mxu0 %v3308
        %v5029 = vpop.f32.mrf.mxu0
        %v5030 = vadd.f32 %v4805, %v5029
        %v5031 = vpop.f32.mrf.mxu0
        %v5032 = vpop.f32.mrf.mxu0
        %v5033 = vadd.f32 %v4808, %v5032
        %v5034 = vpop.f32.mrf.mxu0
        %5035 = vmatprep.mubr.bf16.mxu0 0
        %5036 = vmatmul.mubr.bf16.gmra.mxu0 %v3309
        %v5037 = vpop.f32.mrf.mxu0
        %v5038 = vadd.f32 %v4813, %v5037
        %v5039 = vpop.f32.mrf.mxu0
        %v5040 = vpop.f32.mrf.mxu0
        %v5041 = vadd.f32 %v4816, %v5040
        %v5042 = vpop.f32.mrf.mxu0
        %5043 = vmatprep.mubr.bf16.mxu0 0
        %5044 = vmatmul.mubr.bf16.gmra.mxu0 %v3310
        %v5045 = vpop.f32.mrf.mxu0
        %v5046 = vadd.f32 %v4821, %v5045
        %v5047 = vpop.f32.mrf.mxu0
        %v5048 = vpop.f32.mrf.mxu0
        %v5049 = vadd.f32 %v4824, %v5048
        %v5050 = vpop.f32.mrf.mxu0
        %5051 = vmatprep.mubr.bf16.mxu0 0
        %5052 = vmatmul.mubr.bf16.gmra.mxu0 %v3311
        %v5053 = vpop.f32.mrf.mxu0
        %v5054 = vadd.f32 %v4829, %v5053
        %v5055 = vpop.f32.mrf.mxu0
        %v5056 = vpop.f32.mrf.mxu0
        %v5057 = vadd.f32 %v4832, %v5056
        %v5058 = vpop.f32.mrf.mxu0
        %5059 = vmatprep.mubr.bf16.mxu0 0
        %5060 = vmatmul.mubr.bf16.gmra.mxu0 %v3312
        %v5061 = vpop.f32.mrf.mxu0
        %v5062 = vadd.f32 %v4837, %v5061
        %v5063 = vpop.f32.mrf.mxu0
        %v5064 = vpop.f32.mrf.mxu0
        %v5065 = vadd.f32 %v4840, %v5064
        %v5066 = vpop.f32.mrf.mxu0
        %5067 = vmatprep.mubr.bf16.mxu0 0
        %5068 = vmatmul.mubr.bf16.gmra.mxu0 %v3313
        %v5069 = vpop.f32.mrf.mxu0
        %v5070 = vadd.f32 %v4845, %v5069
        %v5071 = vpop.f32.mrf.mxu0
        %v5072 = vpop.f32.mrf.mxu0
        %v5073 = vadd.f32 %v4848, %v5072
        %v5074 = vpop.f32.mrf.mxu0
        %5075 = vmatprep.mubr.bf16.mxu0 0
        %5076 = vmatmul.mubr.bf16.gmra.mxu0 %v3390
        %v5077 = vpop.f32.mrf.mxu0
        %v5078 = vadd.f32 %v4853, %v5077
        %v5079 = vpop.f32.mrf.mxu0
        %v5080 = vpop.f32.mrf.mxu0
        %v5081 = vadd.f32 %v4856, %v5080
        %v5082 = vpop.f32.mrf.mxu0
        %5083 = vmatprep.mubr.bf16.mxu0 0
        %5084 = vmatmul.mubr.bf16.gmra.mxu0 %v3391
        %v5085 = vpop.f32.mrf.mxu0
        %v5086 = vadd.f32 %v4861, %v5085
        %v5087 = vpop.f32.mrf.mxu0
        %v5088 = vpop.f32.mrf.mxu0
        %v5089 = vadd.f32 %v4864, %v5088
        %v5090 = vpop.f32.mrf.mxu0
        %5091 = vmatprep.mubr.bf16.mxu0 0
        %5092 = vmatmul.mubr.bf16.gmra.mxu0 %v3290
        %v5093 = vpop.f32.mrf.mxu0
        %v5094 = vadd.f32 %v4869, %v5093
        %v5095 = vpop.f32.mrf.mxu0
        %v5096 = vpop.f32.mrf.mxu0
        %v5097 = vadd.f32 %v4872, %v5096
        %v5098 = vpop.f32.mrf.mxu0
        %5099 = vdwg.mxu0
        %v5100 = vadd.f32 %v4910, %v2705
        %v5101 = vadd.f32 %v4913, %v2709
        %v5102 = vadd.f32 %v4918, %v2715
        %v5103 = vadd.f32 %v4921, %v2719
        %v5104 = vadd.f32 %v4926, %v2725
        %v5105 = vadd.f32 %v4929, %v2729
        %v5106 = vadd.f32 %v4934, %v2735
        %v5107 = vadd.f32 %v4937, %v2739
        %v5108 = vadd.f32 %v4942, %v2745
        %v5109 = vadd.f32 %v4945, %v2749
        %v5110 = vadd.f32 %v4950, %v2755
        %v5111 = vadd.f32 %v4953, %v2759
        %v5112 = vadd.f32 %v4958, %v2765
        %v5113 = vadd.f32 %v4961, %v2769
        %v5114 = vadd.f32 %v4966, %v2775
        %v5115 = vadd.f32 %v4969, %v2779
        %v5116 = vadd.f32 %v4974, %v2785
        %v5117 = vadd.f32 %v4977, %v2789
        %v5118 = vadd.f32 %v4982, %v2795
        %v5119 = vadd.f32 %v4985, %v2799
        %v5120 = vadd.f32 %v4990, %v2805
        %v5121 = vadd.f32 %v4993, %v2809
        %v5122 = vadd.f32 %v4998, %v2815
        %v5123 = vadd.f32 %v5001, %v2819
        %v5124 = vadd.f32 %v5006, %v2825
        %v5125 = vadd.f32 %v5009, %v2829
        %v5126 = vadd.f32 %v5014, %v2835
        %v5127 = vadd.f32 %v5017, %v2839
        %v5128 = vadd.f32 %v5022, %v2845
        %v5129 = vadd.f32 %v5025, %v2849
        %v5130 = vadd.f32 %v5030, %v2855
        %v5131 = vadd.f32 %v5033, %v2859
        %v5132 = vadd.f32 %v5038, %v2865
        %v5133 = vadd.f32 %v5041, %v2869
        %v5134 = vadd.f32 %v5046, %v2875
        %v5135 = vadd.f32 %v5049, %v2879
        %v5136 = vadd.f32 %v5054, %v2885
        %v5137 = vadd.f32 %v5057, %v2889
        %v5138 = vadd.f32 %v5062, %v2895
        %v5139 = vadd.f32 %v5065, %v2899
        %v5140 = vadd.f32 %v5070, %v2905
        %v5141 = vadd.f32 %v5073, %v2909
        %v5142 = vadd.f32 %v5078, %v2915
        %v5143 = vadd.f32 %v5081, %v2919
        %v5144 = vadd.f32 %v5086, %v2925
        %v5145 = vadd.f32 %v5089, %v2929
        %v5146 = vadd.f32 %v5094, %v2935
        %v5147 = vadd.f32 %v5097, %v2939
        %v5148 = vmax.f32 %v5100, 0.0
        %v5149 = vmax.f32 %v5101, 0.0
        %v5150 = vmax.f32 %v5102, 0.0
        %v5151 = vmax.f32 %v5103, 0.0
        %v5152 = vmax.f32 %v5104, 0.0
        %v5153 = vmax.f32 %v5105, 0.0
        %v5154 = vmax.f32 %v5106, 0.0
        %v5155 = vmax.f32 %v5107, 0.0
        %v5156 = vmax.f32 %v5108, 0.0
        %v5157 = vmax.f32 %v5109, 0.0
        %v5158 = vmax.f32 %v5110, 0.0
        %v5159 = vmax.f32 %v5111, 0.0
        %v5160 = vmax.f32 %v5112, 0.0
        %v5161 = vmax.f32 %v5113, 0.0
        %v5162 = vmax.f32 %v5114, 0.0
        %v5163 = vmax.f32 %v5115, 0.0
        %v5164 = vmax.f32 %v5116, 0.0
        %v5165 = vmax.f32 %v5117, 0.0
        %v5166 = vmax.f32 %v5118, 0.0
        %v5167 = vmax.f32 %v5119, 0.0
        %v5168 = vmax.f32 %v5120, 0.0
        %v5169 = vmax.f32 %v5121, 0.0
        %v5170 = vmax.f32 %v5122, 0.0
        %v5171 = vmax.f32 %v5123, 0.0
        %v5172 = vmax.f32 %v5124, 0.0
        %v5173 = vmax.f32 %v5125, 0.0
        %v5174 = vmax.f32 %v5126, 0.0
        %v5175 = vmax.f32 %v5127, 0.0
        %v5176 = vmax.f32 %v5128, 0.0
        %v5177 = vmax.f32 %v5129, 0.0
        %v5178 = vmax.f32 %v5130, 0.0
        %v5179 = vmax.f32 %v5131, 0.0
        %v5180 = vmax.f32 %v5132, 0.0
        %v5181 = vmax.f32 %v5133, 0.0
        %v5182 = vmax.f32 %v5134, 0.0
        %v5183 = vmax.f32 %v5135, 0.0
        %v5184 = vmax.f32 %v5136, 0.0
        %v5185 = vmax.f32 %v5137, 0.0
        %v5186 = vmax.f32 %v5138, 0.0
        %v5187 = vmax.f32 %v5139, 0.0
        %v5188 = vmax.f32 %v5140, 0.0
        %v5189 = vmax.f32 %v5141, 0.0
        %v5190 = vmax.f32 %v5142, 0.0
        %v5191 = vmax.f32 %v5143, 0.0
        %v5192 = vmax.f32 %v5144, 0.0
        %v5193 = vmax.f32 %v5145, 0.0
        %v5194 = vmax.f32 %v5146, 0.0
        %v5195 = vmax.f32 %v5147, 0.0
        %5196 = vst [vmem:[%s271] sm:$0xff] %v5148
        %5197 = vst [vmem:[%s271 + $0x8] sm:$0xff] %v5149
        %5198 = vst [vmem:[%s271 + $0x10] sm:$0xff] %v5150
        %5199 = vst [vmem:[%s271 + $0x18] sm:$0xff] %v5151
        %5200 = vst [vmem:[%s271 + $0x20] sm:$0xff] %v5152
        %5201 = vst [vmem:[%s271 + $0x28] sm:$0xff] %v5153
        %5202 = vst [vmem:[%s271 + $0x30] sm:$0xff] %v5154
        %5203 = vst [vmem:[%s271 + $0x38] sm:$0xff] %v5155
        %5204 = vst [vmem:[%s271 + $0x40] sm:$0xff] %v5156
        %5205 = vst [vmem:[%s271 + $0x48] sm:$0xff] %v5157
        %5206 = vst [vmem:[%s271 + $0x50] sm:$0xff] %v5158
        %5207 = vst [vmem:[%s271 + $0x58] sm:$0xff] %v5159
        %5208 = vst [vmem:[%s271 + $0x60] sm:$0xff] %v5160
        %5209 = vst [vmem:[%s271 + $0x68] sm:$0xff] %v5161
        %5210 = vst [vmem:[%s271 + $0x70] sm:$0xff] %v5162
        %5211 = vst [vmem:[%s271 + $0x78] sm:$0xff] %v5163
        %5212 = vst [vmem:[%s271 + $0x80] sm:$0xff] %v5164
        %5213 = vst [vmem:[%s271 + $0x88] sm:$0xff] %v5165
        %5214 = vst [vmem:[%s271 + $0x90] sm:$0xff] %v5166
        %5215 = vst [vmem:[%s271 + $0x98] sm:$0xff] %v5167
        %5216 = vst [vmem:[%s271 + $0xa0] sm:$0xff] %v5168
        %5217 = vst [vmem:[%s271 + $0xa8] sm:$0xff] %v5169
        %5218 = vst [vmem:[%s271 + $0xb0] sm:$0xff] %v5170
        %5219 = vst [vmem:[%s271 + $0xb8] sm:$0xff] %v5171
        %5220 = vst [vmem:[%s271 + $0xc0] sm:$0xff] %v5172
        %5221 = vst [vmem:[%s271 + $0xc8] sm:$0xff] %v5173
        %5222 = vst [vmem:[%s271 + $0xd0] sm:$0xff] %v5174
        %5223 = vst [vmem:[%s271 + $0xd8] sm:$0xff] %v5175
        %5224 = vst [vmem:[%s271 + $0xe0] sm:$0xff] %v5176
        %5225 = vst [vmem:[%s271 + $0xe8] sm:$0xff] %v5177
        %5226 = vst [vmem:[%s271 + $0xf0] sm:$0xff] %v5178
        %5227 = vst [vmem:[%s271 + $0xf8] sm:$0xff] %v5179
        %5228 = vst [vmem:[%s271 + $0x100] sm:$0xff] %v5180
        %5229 = vst [vmem:[%s271 + $0x108] sm:$0xff] %v5181
        %5230 = vst [vmem:[%s271 + $0x110] sm:$0xff] %v5182
        %5231 = vst [vmem:[%s271 + $0x118] sm:$0xff] %v5183
        %5232 = vst [vmem:[%s271 + $0x120] sm:$0xff] %v5184
        %5233 = vst [vmem:[%s271 + $0x128] sm:$0xff] %v5185
        %5234 = vst [vmem:[%s271 + $0x130] sm:$0xff] %v5186
        %5235 = vst [vmem:[%s271 + $0x138] sm:$0xff] %v5187
        %5236 = vst [vmem:[%s271 + $0x140] sm:$0xff] %v5188
        %5237 = vst [vmem:[%s271 + $0x148] sm:$0xff] %v5189
        %5238 = vst [vmem:[%s271 + $0x150] sm:$0xff] %v5190
        %5239 = vst [vmem:[%s271 + $0x158] sm:$0xff] %v5191
        %5240 = vst [vmem:[%s271 + $0x160] sm:$0xff] %v5192
        %5241 = vst [vmem:[%s271 + $0x168] sm:$0xff] %v5193
        %5242 = vst [vmem:[%s271 + $0x170] sm:$0xff] %v5194
        %5243 = vst [vmem:[%s271 + $0x178] sm:$0xff] %v5195
        %s5244 = sand.u32 %s141, 1
        %s5245 = scalar_lea.sflag [#allocation4], %s5244
        %s5246 = sand.u32 %s141, 1
        %s5247 = smul.addr %s5246, 384
        %s5248 = scalar_lea.vmem [#allocation8], %s5247
        // Predicated region
        $region53: #{tpu_custom_call.1} parent=39 // pred_check
          %p5249 = pneg %p151
        $region54: #{tpu_custom_call.1} parent=39 // pred_check_branch
          %5251 = sbr.rel (%p5249) target = $region56
        $region55: #{tpu_custom_call.1} parent=39 // pred_region
          %s5253 = ssub.s32 6144, 6144
          %5254 = vsyncadd %s5245, %s5253
          %s5255 = smul.addr %s23, 48
          %s5256 = smul.addr %s5255, 128
          %s5257 = scalar_lea.hbm %s5, %s5256
          %s5258 = sshll.u32 %s5248, 4
          %s5259 = int_to_ptr.vmem [resolvable:$true] %s5258
          %5264 = dma.vmem_to_hbm [thread:$0]  %s5259, 6144, %s5257, %s5245, 128, 128, 8
        $region56: #{tpu_custom_call.1} parent=39 // pred_fallthru
          _
      $region40: #{tpu_custom_call.1} parent=5 // pred_fallthru
        _
      %p5265 = scmp.le.s32.totalorder 2, %s18
      // Predicated region
      $region57: #{tpu_custom_call.1} parent=5 // pred_check
        %p5266 = pneg %p5265
      $region58: #{tpu_custom_call.1} parent=5 // pred_check_branch
        %5268 = sbr.rel (%p5266) target = $region60
      $region59: #{tpu_custom_call.1} parent=5 // pred_region
        %s5269 = ssub.s32 %s18, 2
        // Predicated region
        $region61: #{tpu_custom_call.1} parent=59 // pred_check
          %p5270 = pneg %p157
        $region62: #{tpu_custom_call.1} parent=59 // pred_check_branch
          %5272 = sbr.rel (%p5270) target = $region64
        $region63: #{tpu_custom_call.1} parent=59 // pred_region
          %s5273 = sand.u32 %s142, 1
          %s5274 = scalar_lea.sflag [#allocation4], %s5273
          %s5275 = sand.u32 %s142, 1
          %s5276 = smul.addr %s5275, 384
          %s5277 = scalar_lea.vmem [#allocation8], %s5276
          %5278 = dma.done %s5274, 6144
        $region64: #{tpu_custom_call.1} parent=59 // pred_fallthru
          _
      $region60: #{tpu_custom_call.1} parent=5 // pred_fallthru
        _
    $region6: #{tpu_custom_call.1} parent=1 // loop_footer
      %s22 = sadd.s32 1, %s18
    $region7: #{tpu_custom_call.1} parent=1 // loop_footer_branch
      %17 = sbr.rel target = $region3
    $region8: #{tpu_custom_call.1} parent=1 // loop_exit
      _
    %5279 = vsyncpa [#allocation3], 1
    %s5280 = scalar_lea.sflag [#allocation3], 1
    %5281 = vsyncpa %s5280, 1
    %5282 = vsyncpa [#allocation6], 1
    %5283 = vsyncpa [#allocation4], 1
    %s5284 = scalar_lea.sflag [#allocation4], 1
    %5285 = vsyncpa %s5284, 1

</llo_original>
